<compile_context>
chip_gen: v7x
topology: tpu7x:2x2x1
jax: 0.10.0
libtpu: 0.0.40
codegen_flags: <defaults>
</compile_context>

<pallas_src>
import functools
import math

import jax
import jax.numpy as jnp
from jax.experimental import pallas as pl
from jax.experimental.pallas import tpu as pltpu

# ----------------------------- config (small, synthetic) -----------------------
VOCAB = 100
TYPE_VOCAB = 2
MAX_POS = 16
HIDDEN = 32
NUM_LAYERS = 2
NUM_HEADS = 4
HEAD_DIM = HIDDEN // NUM_HEADS
INTERMEDIATE = 64
LN_EPS = 1e-12
BATCH = 2          # number of edge pairs; internal fused batch is 2 * BATCH
SEQ = 8


# ----------------------------- fused forward kernel ----------------------------
def _bert_edge_kernel(h_ref, bias_ref, eg_ref, eb_ref,
                      qkvw_ref, qkvb_ref, aow_ref, aob_ref,
                      l1g_ref, l1b_ref, iw_ref, ib_ref, ow_ref, ob_ref,
                      l2g_ref, l2b_ref, pw_ref, pb_ref, out_ref):
    bf16 = jnp.bfloat16

    def mm(x, w):                      # MXU matmul: bf16 operands, fp32 accumulate
        return jnp.dot(x.astype(bf16), w.astype(bf16),
                       preferred_element_type=jnp.float32)

    def mm_nt(x, y):                   # x @ y.T without materializing the transpose
        return jax.lax.dot_general(
            x.astype(bf16), y.astype(bf16),
            dimension_numbers=(((1,), (1,)), ((), ())),
            preferred_element_type=jnp.float32)

    def ln(x, g, b):                   # fp32 LayerNorm (caller folds in the residual)
        mu = jnp.mean(x, axis=-1, keepdims=True)
        xc = x - mu
        var = jnp.mean(xc * xc, axis=-1, keepdims=True)
        return xc * jax.lax.rsqrt(var + LN_EPS) * g + b

    def gelu(x):
        # tanh-approx GELU (EUP tanh).  TODO(synk): exact erf GELU would bit-match
        # PyTorch; the approximation differs at the ~1e-3 level.
        c = math.sqrt(2.0 / math.pi)
        return 0.5 * x * (1.0 + jnp.tanh(c * (x + 0.044715 * (x * x * x))))

    h = h_ref[...].astype(jnp.float32)                 # (B*S, H) summed embeddings
    h = ln(h, eg_ref[...], eb_ref[...])                # embedding LayerNorm
    bias = bias_ref[...]                               # (B*S, B*S) additive mask
    scale = 1.0 / math.sqrt(HEAD_DIM)

    for l in range(NUM_LAYERS):                        # static unroll
        # ---- self-attention block (fused QKV projection) ----
        qkv = mm(h, qkvw_ref[l]) + qkvb_ref[l]         # (B*S, 3H)
        ctx_heads = []
        for hd in range(NUM_HEADS):
            lo = hd * HEAD_DIM
            q_h = qkv[:, lo:lo + HEAD_DIM]
            k_h = qkv[:, HIDDEN + lo:HIDDEN + lo + HEAD_DIM]
            v_h = qkv[:, 2 * HIDDEN + lo:2 * HIDDEN + lo + HEAD_DIM]
            s = mm_nt(q_h, k_h) * scale + bias         # block-diag masked scores
            s = s - jnp.max(s, axis=-1, keepdims=True)
            p = jnp.exp(s)
            p = p * pl.reciprocal(jnp.sum(p, axis=-1, keepdims=True), approx=True)
            ctx_heads.append(mm(p, v_h))               # (B*S, HEAD_DIM)
        ctx = jnp.concatenate(ctx_heads, axis=-1)      # (B*S, H)
        attn_out = mm(ctx, aow_ref[l]) + aob_ref[l]
        h = ln(attn_out + h, l1g_ref[l], l1b_ref[l])   # residual folded into LN
        # ---- feed-forward block ----
        inter = gelu(mm(h, iw_ref[l]) + ib_ref[l])     # (B*S, INTERMEDIATE)
        ffn_out = mm(inter, ow_ref[l]) + ob_ref[l]
        h = ln(ffn_out + h, l2g_ref[l], l2b_ref[l])

    # ---- pooler (dense + tanh on [CLS]) fused with the edge score ----
    cls = jnp.concatenate([h[b * SEQ:b * SEQ + 1, :] for b in range(2 * BATCH)], axis=0)
    pooled = jnp.tanh(mm(cls, pw_ref[...]) + pb_ref[...])          # (2*BATCH, H)
    pa = pooled[:BATCH, :]                                         # tower A
    pc = pooled[BATCH:2 * BATCH, :]                                # tower B
    logits = jnp.sum(pa * pc, axis=-1, keepdims=True)              # (BATCH, 1)
    probs = jax.nn.sigmoid(logits)
    out_ref[...] = jnp.concatenate([logits, probs], axis=-1).astype(out_ref.dtype)


def _full_spec(shape):
    nd = len(shape)
    return pl.BlockSpec(tuple(shape), lambda i, _nd=nd: (0,) * _nd)


# ----------------------------- parameters ----------------------------------------
def init_params(key):
    keys = iter(jax.random.split(key, 64))

    def nrm(shape):
        return 0.02 * jax.random.normal(next(keys), shape, dtype=jnp.float32)

    zeros = lambda shape: jnp.zeros(shape, jnp.float32)
    ones = lambda shape: jnp.ones(shape, jnp.float32)

    layers = []
    for _ in range(NUM_LAYERS):
        layers.append({
            "q_w": nrm((HIDDEN, HIDDEN)), "q_b": zeros((HIDDEN,)),
            "k_w": nrm((HIDDEN, HIDDEN)), "k_b": zeros((HIDDEN,)),
            "v_w": nrm((HIDDEN, HIDDEN)), "v_b": zeros((HIDDEN,)),
            "ao_w": nrm((HIDDEN, HIDDEN)), "ao_b": zeros((HIDDEN,)),
            "ln1_g": ones((HIDDEN,)), "ln1_b": zeros((HIDDEN,)),
            "i_w": nrm((HIDDEN, INTERMEDIATE)), "i_b": zeros((INTERMEDIATE,)),
            "o_w": nrm((INTERMEDIATE, HIDDEN)), "o_b": zeros((HIDDEN,)),
            "ln2_g": ones((HIDDEN,)), "ln2_b": zeros((HIDDEN,)),
        })
    return {
        "word_emb": nrm((VOCAB, HIDDEN)),
        "pos_emb": nrm((MAX_POS, HIDDEN)),
        "tok_emb": nrm((TYPE_VOCAB, HIDDEN)),
        "emb_ln_g": ones((HIDDEN,)), "emb_ln_b": zeros((HIDDEN,)),
        "pool_w": nrm((HIDDEN, HIDDEN)), "pool_b": zeros((HIDDEN,)),
        "layers": layers,
    }


def pack_params(p):
    """One-time packing: fuse Q/K/V weights, stack per-layer params, 2-D bias rows."""
    L = p["layers"]
    row = lambda v: v.reshape(1, -1)
    return {
        "word_emb": p["word_emb"], "pos_emb": p["pos_emb"], "tok_emb": p["tok_emb"],
        "emb_ln_g": row(p["emb_ln_g"]), "emb_ln_b": row(p["emb_ln_b"]),
        "pool_w": p["pool_w"], "pool_b": row(p["pool_b"]),
        "qkv_w": jnp.stack([jnp.concatenate([l["q_w"], l["k_w"], l["v_w"]], axis=1) for l in L]),
        "qkv_b": jnp.stack([row(jnp.concatenate([l["q_b"], l["k_b"], l["v_b"]])) for l in L]),
        "ao_w": jnp.stack([l["ao_w"] for l in L]),
        "ao_b": jnp.stack([row(l["ao_b"]) for l in L]),
        "ln1_g": jnp.stack([row(l["ln1_g"]) for l in L]),
        "ln1_b": jnp.stack([row(l["ln1_b"]) for l in L]),
        "i_w": jnp.stack([l["i_w"] for l in L]),
        "i_b": jnp.stack([row(l["i_b"]) for l in L]),
        "o_w": jnp.stack([l["o_w"] for l in L]),
        "o_b": jnp.stack([row(l["o_b"]) for l in L]),
        "ln2_g": jnp.stack([row(l["ln2_g"]) for l in L]),
        "ln2_b": jnp.stack([row(l["ln2_b"]) for l in L]),
    }


# ----------------------------- forward (glue + one fused kernel) ------------------
def bert_edge_scorer(packed, input_ids, token_type_ids, attention_mask,
                     input_ids_c, token_type_ids_c, attention_mask_c):
    # Twin towers share the same BERT weights -> run both sides as one batched pass.
    ids = jnp.concatenate([input_ids, input_ids_c], axis=0)            # (2B, S)
    tts = jnp.concatenate([token_type_ids, token_type_ids_c], axis=0)
    msk = jnp.concatenate([attention_mask, attention_mask_c], axis=0)
    B2, S = ids.shape

    # Embedding gathers stay in JAX glue (no clean Pallas gather at these shapes).
    words = jnp.take(packed["word_emb"], ids, axis=0)                  # (2B, S, H)
    pos = packed["pos_emb"][:S][None, :, :]
    toks = jnp.take(packed["tok_emb"], tts, axis=0)
    h0 = (words + pos + toks).reshape(B2 * S, HIDDEN)

    # Additive attention bias, (B*S, B*S): BERT padding mask (-10000 * (1 - mask)) on
    # the key axis plus -1e9 off the block diagonal to isolate sequences (exp -> 0.0).
    key_bias = ((1.0 - msk.astype(jnp.float32)) * -10000.0).reshape(1, B2 * S)
    row_batch = jnp.repeat(jnp.arange(B2), S)
    block = jnp.where(row_batch[:, None] == row_batch[None, :], 0.0, -1.0e9)
    attn_bias = (block + key_bias).astype(jnp.float32)

    args = (
        h0, attn_bias,
        packed["emb_ln_g"], packed["emb_ln_b"],
        packed["qkv_w"], packed["qkv_b"],
        packed["ao_w"], packed["ao_b"],
        packed["ln1_g"], packed["ln1_b"],
        packed["i_w"], packed["i_b"],
        packed["o_w"], packed["o_b"],
        packed["ln2_g"], packed["ln2_b"],
        packed["pool_w"], packed["pool_b"],
    )
    out = pl.pallas_call(
        _bert_edge_kernel,
        out_shape=jax.ShapeDtypeStruct((BATCH, 2), jnp.float32),
        grid=(1,),
        in_specs=[_full_spec(a.shape) for a in args],
        out_specs=_full_spec((BATCH, 2)),
        compiler_params=pltpu.CompilerParams(dimension_semantics=("arbitrary",)),
    )(*args)
    logits = out[:, 0]
    pros = out[:, 1]
    return logits, pros


# ----------------------------- main -----------------------------------------------
if __name__ == "__main__":
    key = jax.random.PRNGKey(0)
    pkey, k1, k2 = jax.random.split(key, 3)
    packed = pack_params(init_params(pkey))

    input_ids = jax.random.randint(k1, (BATCH, SEQ), 0, VOCAB, dtype=jnp.int32)
    token_type_ids = jnp.zeros((BATCH, SEQ), jnp.int32).at[:, SEQ // 2:].set(1)
    attention_mask = jnp.ones((BATCH, SEQ), jnp.int32).at[1, -2:].set(0)

    input_ids_c = jax.random.randint(k2, (BATCH, SEQ), 0, VOCAB, dtype=jnp.int32)
    token_type_ids_c = jnp.zeros((BATCH, SEQ), jnp.int32)
    attention_mask_c = jnp.ones((BATCH, SEQ), jnp.int32)

    fwd = jax.jit(functools.partial(bert_edge_scorer, packed))
    logits, pros = fwd(input_ids, token_type_ids, attention_mask,
                       input_ids_c, token_type_ids_c, attention_mask_c)
    jax.block_until_ready((logits, pros))

    assert logits.shape == (BATCH,) and pros.shape == (BATCH,)
    assert bool(jnp.all(jnp.isfinite(logits))) and bool(jnp.all((pros >= 0) & (pros <= 1)))
    print("KERNEL_OK")
</pallas_src>

<mosaic_0001>
module attributes {stable_mosaic.version = 11 : i64} {
  func.func @_bert_edge_kernel(%arg0: i32, %arg1: memref<32x32xf32, #tpu.memory_space<vmem>>, %arg2: memref<32x32xf32, #tpu.memory_space<vmem>>, %arg3: memref<1x32xf32, #tpu.memory_space<vmem>>, %arg4: memref<1x32xf32, #tpu.memory_space<vmem>>, %arg5: memref<2x32x96xf32, #tpu.memory_space<vmem>>, %arg6: memref<2x1x96xf32, #tpu.memory_space<vmem>>, %arg7: memref<2x32x32xf32, #tpu.memory_space<vmem>>, %arg8: memref<2x1x32xf32, #tpu.memory_space<vmem>>, %arg9: memref<2x1x32xf32, #tpu.memory_space<vmem>>, %arg10: memref<2x1x32xf32, #tpu.memory_space<vmem>>, %arg11: memref<2x32x64xf32, #tpu.memory_space<vmem>>, %arg12: memref<2x1x64xf32, #tpu.memory_space<vmem>>, %arg13: memref<2x64x32xf32, #tpu.memory_space<vmem>>, %arg14: memref<2x1x32xf32, #tpu.memory_space<vmem>>, %arg15: memref<2x1x32xf32, #tpu.memory_space<vmem>>, %arg16: memref<2x1x32xf32, #tpu.memory_space<vmem>>, %arg17: memref<32x32xf32, #tpu.memory_space<vmem>>, %arg18: memref<1x32xf32, #tpu.memory_space<vmem>>, %arg19: memref<2x2xf32, #tpu.memory_space<vmem>>) attributes {dimension_semantics = [#tpu.dimension_semantics<arbitrary>], iteration_bounds = array<i64: 1>, scalar_prefetch = 0 : i64, scratch_operands = 0 : i64, tpu.core_type = #tpu.core_type<tc>, window_params = [{pipeline_mode = #tpu.pipeline_mode<synchronous>, transform_indices = @transform_0, window_bounds = array<i64: 32, 32>}, {pipeline_mode = #tpu.pipeline_mode<synchronous>, transform_indices = @transform_1, window_bounds = array<i64: 32, 32>}, {pipeline_mode = #tpu.pipeline_mode<synchronous>, transform_indices = @transform_2, window_bounds = array<i64: 1, 32>}, {pipeline_mode = #tpu.pipeline_mode<synchronous>, transform_indices = @transform_3, window_bounds = array<i64: 1, 32>}, {pipeline_mode = #tpu.pipeline_mode<synchronous>, transform_indices = @transform_4, window_bounds = array<i64: 2, 32, 96>}, {pipeline_mode = #tpu.pipeline_mode<synchronous>, transform_indices = @transform_5, window_bounds = array<i64: 2, 1, 96>}, {pipeline_mode = #tpu.pipeline_mode<synchronous>, transform_indices = @transform_6, window_bounds = array<i64: 2, 32, 32>}, {pipeline_mode = #tpu.pipeline_mode<synchronous>, transform_indices = @transform_7, window_bounds = array<i64: 2, 1, 32>}, {pipeline_mode = #tpu.pipeline_mode<synchronous>, transform_indices = @transform_8, window_bounds = array<i64: 2, 1, 32>}, {pipeline_mode = #tpu.pipeline_mode<synchronous>, transform_indices = @transform_9, window_bounds = array<i64: 2, 1, 32>}, {pipeline_mode = #tpu.pipeline_mode<synchronous>, transform_indices = @transform_10, window_bounds = array<i64: 2, 32, 64>}, {pipeline_mode = #tpu.pipeline_mode<synchronous>, transform_indices = @transform_11, window_bounds = array<i64: 2, 1, 64>}, {pipeline_mode = #tpu.pipeline_mode<synchronous>, transform_indices = @transform_12, window_bounds = array<i64: 2, 64, 32>}, {pipeline_mode = #tpu.pipeline_mode<synchronous>, transform_indices = @transform_13, window_bounds = array<i64: 2, 1, 32>}, {pipeline_mode = #tpu.pipeline_mode<synchronous>, transform_indices = @transform_14, window_bounds = array<i64: 2, 1, 32>}, {pipeline_mode = #tpu.pipeline_mode<synchronous>, transform_indices = @transform_15, window_bounds = array<i64: 2, 1, 32>}, {pipeline_mode = #tpu.pipeline_mode<synchronous>, transform_indices = @transform_16, window_bounds = array<i64: 32, 32>}, {pipeline_mode = #tpu.pipeline_mode<synchronous>, transform_indices = @transform_17, window_bounds = array<i64: 1, 32>}, {pipeline_mode = #tpu.pipeline_mode<synchronous>, transform_indices = @transform_18, window_bounds = array<i64: 2, 2>}]} {
    %c0 = arith.constant 0 : index
    %c0_0 = arith.constant 0 : index
    %0 = vector.load %arg1[%c0, %c0_0] : memref<32x32xf32, #tpu.memory_space<vmem>>, vector<32x32xf32>
    %c0_1 = arith.constant 0 : index
    %c0_2 = arith.constant 0 : index
    %1 = vector.load %arg3[%c0_1, %c0_2] : memref<1x32xf32, #tpu.memory_space<vmem>>, vector<1x32xf32>
    %c0_3 = arith.constant 0 : index
    %c0_4 = arith.constant 0 : index
    %2 = vector.load %arg4[%c0_3, %c0_4] : memref<1x32xf32, #tpu.memory_space<vmem>>, vector<1x32xf32>
    %cst = arith.constant dense<0.000000e+00> : vector<32xf32>
    %3 = vector.multi_reduction <add>, %0, %cst [1] : vector<32x32xf32> to vector<32xf32>
    %4 = vector.shape_cast %3 : vector<32xf32> to vector<32x1xf32>
    %cst_5 = arith.constant 3.200000e+01 : f32
    %5 = vector.broadcast %cst_5 : f32 to vector<32x1xf32>
    %6 = arith.divf %4, %5 : vector<32x1xf32>
    %7 = vector.broadcast %6 : vector<32x1xf32> to vector<32x32xf32>
    %8 = arith.subf %0, %7 : vector<32x32xf32>
    %9 = arith.mulf %8, %8 : vector<32x32xf32>
    %cst_6 = arith.constant dense<0.000000e+00> : vector<32xf32>
    %10 = vector.multi_reduction <add>, %9, %cst_6 [1] : vector<32x32xf32> to vector<32xf32>
    %11 = vector.shape_cast %10 : vector<32xf32> to vector<32x1xf32>
    %cst_7 = arith.constant 3.200000e+01 : f32
    %12 = vector.broadcast %cst_7 : f32 to vector<32x1xf32>
    %13 = arith.divf %11, %12 : vector<32x1xf32>
    %cst_8 = arith.constant 9.99999996E-13 : f32
    %14 = vector.broadcast %cst_8 : f32 to vector<32x1xf32>
    %15 = arith.addf %13, %14 : vector<32x1xf32>
    %16 = math.rsqrt %15 : vector<32x1xf32>
    %17 = vector.broadcast %16 : vector<32x1xf32> to vector<32x32xf32>
    %18 = arith.mulf %8, %17 : vector<32x32xf32>
    %19 = vector.broadcast %1 : vector<1x32xf32> to vector<32x32xf32>
    %20 = arith.mulf %18, %19 : vector<32x32xf32>
    %21 = vector.broadcast %2 : vector<1x32xf32> to vector<32x32xf32>
    %22 = arith.addf %20, %21 : vector<32x32xf32>
    %c0_9 = arith.constant 0 : index
    %c0_10 = arith.constant 0 : index
    %23 = vector.load %arg2[%c0_9, %c0_10] : memref<32x32xf32, #tpu.memory_space<vmem>>, vector<32x32xf32>
    %c0_11 = arith.constant 0 : index
    %c0_12 = arith.constant 0 : index
    %c0_13 = arith.constant 0 : index
    %24 = vector.load %arg5[%c0_11, %c0_12, %c0_13] : memref<2x32x96xf32, #tpu.memory_space<vmem>>, vector<1x32x96xf32>
    %25 = vector.shape_cast %24 : vector<1x32x96xf32> to vector<32x96xf32>
    %26 = arith.truncf %22 : vector<32x32xf32> to vector<32x32xbf16>
    %27 = arith.truncf %25 : vector<32x96xf32> to vector<32x96xbf16>
    %cst_14 = arith.constant dense<0.000000e+00> : vector<32x96xf32>
    %28 = tpu.matmul %26, %27, %cst_14 {dimension_numbers = #tpu.dot_dimension_numbers<[1], [0], [0], [1], [0, 0, 1, 1], [], []>} : vector<32x32xbf16>, vector<32x96xbf16>, vector<32x96xf32> -> vector<32x96xf32>
    %c0_15 = arith.constant 0 : index
    %c0_16 = arith.constant 0 : index
    %c0_17 = arith.constant 0 : index
    %29 = vector.load %arg6[%c0_15, %c0_16, %c0_17] : memref<2x1x96xf32, #tpu.memory_space<vmem>>, vector<1x1x96xf32>
    %30 = vector.shape_cast %29 : vector<1x1x96xf32> to vector<1x96xf32>
    %31 = vector.broadcast %30 : vector<1x96xf32> to vector<32x96xf32>
    %32 = arith.addf %28, %31 : vector<32x96xf32>
    %33 = vector.extract_strided_slice %32 {offsets = [0, 0], sizes = [32, 8], strides = [1, 1]} : vector<32x96xf32> to vector<32x8xf32>
    %34 = vector.extract_strided_slice %32 {offsets = [0, 32], sizes = [32, 8], strides = [1, 1]} : vector<32x96xf32> to vector<32x8xf32>
    %35 = vector.extract_strided_slice %32 {offsets = [0, 64], sizes = [32, 8], strides = [1, 1]} : vector<32x96xf32> to vector<32x8xf32>
    %36 = arith.truncf %33 : vector<32x8xf32> to vector<32x8xbf16>
    %37 = arith.truncf %34 : vector<32x8xf32> to vector<32x8xbf16>
    %cst_18 = arith.constant dense<0.000000e+00> : vector<32x32xf32>
    %38 = tpu.matmul %36, %37, %cst_18 {dimension_numbers = #tpu.dot_dimension_numbers<[1], [1], [0], [0], [0, 0, 1, 0], [], []>} : vector<32x8xbf16>, vector<32x8xbf16>, vector<32x32xf32> -> vector<32x32xf32>
    %cst_19 = arith.constant 0.353553385 : f32
    %39 = vector.broadcast %cst_19 : f32 to vector<32x32xf32>
    %40 = arith.mulf %38, %39 : vector<32x32xf32>
    %41 = arith.addf %40, %23 : vector<32x32xf32>
    %cst_20 = arith.constant dense<0xFF800000> : vector<32xf32>
    %42 = vector.multi_reduction <maximumf>, %41, %cst_20 [1] : vector<32x32xf32> to vector<32xf32>
    %43 = vector.shape_cast %42 : vector<32xf32> to vector<32x1xf32>
    %44 = vector.broadcast %43 : vector<32x1xf32> to vector<32x32xf32>
    %45 = arith.subf %41, %44 : vector<32x32xf32>
    %46 = math.exp %45 : vector<32x32xf32>
    %cst_21 = arith.constant dense<0.000000e+00> : vector<32xf32>
    %47 = vector.multi_reduction <add>, %46, %cst_21 [1] : vector<32x32xf32> to vector<32xf32>
    %48 = vector.shape_cast %47 : vector<32xf32> to vector<32x1xf32>
    %49 = tpu.reciprocal %48 {approx = true} : vector<32x1xf32> -> vector<32x1xf32>
    %50 = vector.broadcast %49 : vector<32x1xf32> to vector<32x32xf32>
    %51 = arith.mulf %46, %50 : vector<32x32xf32>
    %52 = arith.truncf %51 : vector<32x32xf32> to vector<32x32xbf16>
    %53 = arith.truncf %35 : vector<32x8xf32> to vector<32x8xbf16>
    %cst_22 = arith.constant dense<0.000000e+00> : vector<32x8xf32>
    %54 = tpu.matmul %52, %53, %cst_22 {dimension_numbers = #tpu.dot_dimension_numbers<[1], [0], [0], [1], [0, 0, 1, 1], [], []>} : vector<32x32xbf16>, vector<32x8xbf16>, vector<32x8xf32> -> vector<32x8xf32>
    %55 = vector.extract_strided_slice %32 {offsets = [0, 8], sizes = [32, 8], strides = [1, 1]} : vector<32x96xf32> to vector<32x8xf32>
    %56 = vector.extract_strided_slice %32 {offsets = [0, 40], sizes = [32, 8], strides = [1, 1]} : vector<32x96xf32> to vector<32x8xf32>
    %57 = vector.extract_strided_slice %32 {offsets = [0, 72], sizes = [32, 8], strides = [1, 1]} : vector<32x96xf32> to vector<32x8xf32>
    %58 = arith.truncf %55 : vector<32x8xf32> to vector<32x8xbf16>
    %59 = arith.truncf %56 : vector<32x8xf32> to vector<32x8xbf16>
    %cst_23 = arith.constant dense<0.000000e+00> : vector<32x32xf32>
    %60 = tpu.matmul %58, %59, %cst_23 {dimension_numbers = #tpu.dot_dimension_numbers<[1], [1], [0], [0], [0, 0, 1, 0], [], []>} : vector<32x8xbf16>, vector<32x8xbf16>, vector<32x32xf32> -> vector<32x32xf32>
    %cst_24 = arith.constant 0.353553385 : f32
    %61 = vector.broadcast %cst_24 : f32 to vector<32x32xf32>
    %62 = arith.mulf %60, %61 : vector<32x32xf32>
    %63 = arith.addf %62, %23 : vector<32x32xf32>
    %cst_25 = arith.constant dense<0xFF800000> : vector<32xf32>
    %64 = vector.multi_reduction <maximumf>, %63, %cst_25 [1] : vector<32x32xf32> to vector<32xf32>
    %65 = vector.shape_cast %64 : vector<32xf32> to vector<32x1xf32>
    %66 = vector.broadcast %65 : vector<32x1xf32> to vector<32x32xf32>
    %67 = arith.subf %63, %66 : vector<32x32xf32>
    %68 = math.exp %67 : vector<32x32xf32>
    %cst_26 = arith.constant dense<0.000000e+00> : vector<32xf32>
    %69 = vector.multi_reduction <add>, %68, %cst_26 [1] : vector<32x32xf32> to vector<32xf32>
    %70 = vector.shape_cast %69 : vector<32xf32> to vector<32x1xf32>
    %71 = tpu.reciprocal %70 {approx = true} : vector<32x1xf32> -> vector<32x1xf32>
    %72 = vector.broadcast %71 : vector<32x1xf32> to vector<32x32xf32>
    %73 = arith.mulf %68, %72 : vector<32x32xf32>
    %74 = arith.truncf %73 : vector<32x32xf32> to vector<32x32xbf16>
    %75 = arith.truncf %57 : vector<32x8xf32> to vector<32x8xbf16>
    %cst_27 = arith.constant dense<0.000000e+00> : vector<32x8xf32>
    %76 = tpu.matmul %74, %75, %cst_27 {dimension_numbers = #tpu.dot_dimension_numbers<[1], [0], [0], [1], [0, 0, 1, 1], [], []>} : vector<32x32xbf16>, vector<32x8xbf16>, vector<32x8xf32> -> vector<32x8xf32>
    %77 = vector.extract_strided_slice %32 {offsets = [0, 16], sizes = [32, 8], strides = [1, 1]} : vector<32x96xf32> to vector<32x8xf32>
    %78 = vector.extract_strided_slice %32 {offsets = [0, 48], sizes = [32, 8], strides = [1, 1]} : vector<32x96xf32> to vector<32x8xf32>
    %79 = vector.extract_strided_slice %32 {offsets = [0, 80], sizes = [32, 8], strides = [1, 1]} : vector<32x96xf32> to vector<32x8xf32>
    %80 = arith.truncf %77 : vector<32x8xf32> to vector<32x8xbf16>
    %81 = arith.truncf %78 : vector<32x8xf32> to vector<32x8xbf16>
    %cst_28 = arith.constant dense<0.000000e+00> : vector<32x32xf32>
    %82 = tpu.matmul %80, %81, %cst_28 {dimension_numbers = #tpu.dot_dimension_numbers<[1], [1], [0], [0], [0, 0, 1, 0], [], []>} : vector<32x8xbf16>, vector<32x8xbf16>, vector<32x32xf32> -> vector<32x32xf32>
    %cst_29 = arith.constant 0.353553385 : f32
    %83 = vector.broadcast %cst_29 : f32 to vector<32x32xf32>
    %84 = arith.mulf %82, %83 : vector<32x32xf32>
    %85 = arith.addf %84, %23 : vector<32x32xf32>
    %cst_30 = arith.constant dense<0xFF800000> : vector<32xf32>
    %86 = vector.multi_reduction <maximumf>, %85, %cst_30 [1] : vector<32x32xf32> to vector<32xf32>
    %87 = vector.shape_cast %86 : vector<32xf32> to vector<32x1xf32>
    %88 = vector.broadcast %87 : vector<32x1xf32> to vector<32x32xf32>
    %89 = arith.subf %85, %88 : vector<32x32xf32>
    %90 = math.exp %89 : vector<32x32xf32>
    %cst_31 = arith.constant dense<0.000000e+00> : vector<32xf32>
    %91 = vector.multi_reduction <add>, %90, %cst_31 [1] : vector<32x32xf32> to vector<32xf32>
    %92 = vector.shape_cast %91 : vector<32xf32> to vector<32x1xf32>
    %93 = tpu.reciprocal %92 {approx = true} : vector<32x1xf32> -> vector<32x1xf32>
    %94 = vector.broadcast %93 : vector<32x1xf32> to vector<32x32xf32>
    %95 = arith.mulf %90, %94 : vector<32x32xf32>
    %96 = arith.truncf %95 : vector<32x32xf32> to vector<32x32xbf16>
    %97 = arith.truncf %79 : vector<32x8xf32> to vector<32x8xbf16>
    %cst_32 = arith.constant dense<0.000000e+00> : vector<32x8xf32>
    %98 = tpu.matmul %96, %97, %cst_32 {dimension_numbers = #tpu.dot_dimension_numbers<[1], [0], [0], [1], [0, 0, 1, 1], [], []>} : vector<32x32xbf16>, vector<32x8xbf16>, vector<32x8xf32> -> vector<32x8xf32>
    %99 = vector.extract_strided_slice %32 {offsets = [0, 24], sizes = [32, 8], strides = [1, 1]} : vector<32x96xf32> to vector<32x8xf32>
    %100 = vector.extract_strided_slice %32 {offsets = [0, 56], sizes = [32, 8], strides = [1, 1]} : vector<32x96xf32> to vector<32x8xf32>
    %101 = vector.extract_strided_slice %32 {offsets = [0, 88], sizes = [32, 8], strides = [1, 1]} : vector<32x96xf32> to vector<32x8xf32>
    %102 = arith.truncf %99 : vector<32x8xf32> to vector<32x8xbf16>
    %103 = arith.truncf %100 : vector<32x8xf32> to vector<32x8xbf16>
    %cst_33 = arith.constant dense<0.000000e+00> : vector<32x32xf32>
    %104 = tpu.matmul %102, %103, %cst_33 {dimension_numbers = #tpu.dot_dimension_numbers<[1], [1], [0], [0], [0, 0, 1, 0], [], []>} : vector<32x8xbf16>, vector<32x8xbf16>, vector<32x32xf32> -> vector<32x32xf32>
    %cst_34 = arith.constant 0.353553385 : f32
    %105 = vector.broadcast %cst_34 : f32 to vector<32x32xf32>
    %106 = arith.mulf %104, %105 : vector<32x32xf32>
    %107 = arith.addf %106, %23 : vector<32x32xf32>
    %cst_35 = arith.constant dense<0xFF800000> : vector<32xf32>
    %108 = vector.multi_reduction <maximumf>, %107, %cst_35 [1] : vector<32x32xf32> to vector<32xf32>
    %109 = vector.shape_cast %108 : vector<32xf32> to vector<32x1xf32>
    %110 = vector.broadcast %109 : vector<32x1xf32> to vector<32x32xf32>
    %111 = arith.subf %107, %110 : vector<32x32xf32>
    %112 = math.exp %111 : vector<32x32xf32>
    %cst_36 = arith.constant dense<0.000000e+00> : vector<32xf32>
    %113 = vector.multi_reduction <add>, %112, %cst_36 [1] : vector<32x32xf32> to vector<32xf32>
    %114 = vector.shape_cast %113 : vector<32xf32> to vector<32x1xf32>
    %115 = tpu.reciprocal %114 {approx = true} : vector<32x1xf32> -> vector<32x1xf32>
    %116 = vector.broadcast %115 : vector<32x1xf32> to vector<32x32xf32>
    %117 = arith.mulf %112, %116 : vector<32x32xf32>
    %118 = arith.truncf %117 : vector<32x32xf32> to vector<32x32xbf16>
    %119 = arith.truncf %101 : vector<32x8xf32> to vector<32x8xbf16>
    %cst_37 = arith.constant dense<0.000000e+00> : vector<32x8xf32>
    %120 = tpu.matmul %118, %119, %cst_37 {dimension_numbers = #tpu.dot_dimension_numbers<[1], [0], [0], [1], [0, 0, 1, 1], [], []>} : vector<32x32xbf16>, vector<32x8xbf16>, vector<32x8xf32> -> vector<32x8xf32>
    %121 = tpu.concatenate %54, %76, %98, %120 in 1 : vector<32x8xf32>, vector<32x8xf32>, vector<32x8xf32>, vector<32x8xf32> -> vector<32x32xf32>
    %c0_38 = arith.constant 0 : index
    %c0_39 = arith.constant 0 : index
    %c0_40 = arith.constant 0 : index
    %122 = vector.load %arg7[%c0_38, %c0_39, %c0_40] : memref<2x32x32xf32, #tpu.memory_space<vmem>>, vector<1x32x32xf32>
    %123 = vector.shape_cast %122 : vector<1x32x32xf32> to vector<32x32xf32>
    %124 = arith.truncf %121 : vector<32x32xf32> to vector<32x32xbf16>
    %125 = arith.truncf %123 : vector<32x32xf32> to vector<32x32xbf16>
    %cst_41 = arith.constant dense<0.000000e+00> : vector<32x32xf32>
    %126 = tpu.matmul %124, %125, %cst_41 {dimension_numbers = #tpu.dot_dimension_numbers<[1], [0], [0], [1], [0, 0, 1, 1], [], []>} : vector<32x32xbf16>, vector<32x32xbf16>, vector<32x32xf32> -> vector<32x32xf32>
    %c0_42 = arith.constant 0 : index
    %c0_43 = arith.constant 0 : index
    %c0_44 = arith.constant 0 : index
    %127 = vector.load %arg8[%c0_42, %c0_43, %c0_44] : memref<2x1x32xf32, #tpu.memory_space<vmem>>, vector<1x1x32xf32>
    %128 = vector.shape_cast %127 : vector<1x1x32xf32> to vector<1x32xf32>
    %129 = vector.broadcast %128 : vector<1x32xf32> to vector<32x32xf32>
    %130 = arith.addf %126, %129 : vector<32x32xf32>
    %131 = arith.addf %130, %22 : vector<32x32xf32>
    %c0_45 = arith.constant 0 : index
    %c0_46 = arith.constant 0 : index
    %c0_47 = arith.constant 0 : index
    %132 = vector.load %arg9[%c0_45, %c0_46, %c0_47] : memref<2x1x32xf32, #tpu.memory_space<vmem>>, vector<1x1x32xf32>
    %133 = vector.shape_cast %132 : vector<1x1x32xf32> to vector<1x32xf32>
    %c0_48 = arith.constant 0 : index
    %c0_49 = arith.constant 0 : index
    %c0_50 = arith.constant 0 : index
    %134 = vector.load %arg10[%c0_48, %c0_49, %c0_50] : memref<2x1x32xf32, #tpu.memory_space<vmem>>, vector<1x1x32xf32>
    %135 = vector.shape_cast %134 : vector<1x1x32xf32> to vector<1x32xf32>
    %cst_51 = arith.constant dense<0.000000e+00> : vector<32xf32>
    %136 = vector.multi_reduction <add>, %131, %cst_51 [1] : vector<32x32xf32> to vector<32xf32>
    %137 = vector.shape_cast %136 : vector<32xf32> to vector<32x1xf32>
    %cst_52 = arith.constant 3.200000e+01 : f32
    %138 = vector.broadcast %cst_52 : f32 to vector<32x1xf32>
    %139 = arith.divf %137, %138 : vector<32x1xf32>
    %140 = vector.broadcast %139 : vector<32x1xf32> to vector<32x32xf32>
    %141 = arith.subf %131, %140 : vector<32x32xf32>
    %142 = arith.mulf %141, %141 : vector<32x32xf32>
    %cst_53 = arith.constant dense<0.000000e+00> : vector<32xf32>
    %143 = vector.multi_reduction <add>, %142, %cst_53 [1] : vector<32x32xf32> to vector<32xf32>
    %144 = vector.shape_cast %143 : vector<32xf32> to vector<32x1xf32>
    %cst_54 = arith.constant 3.200000e+01 : f32
    %145 = vector.broadcast %cst_54 : f32 to vector<32x1xf32>
    %146 = arith.divf %144, %145 : vector<32x1xf32>
    %cst_55 = arith.constant 9.99999996E-13 : f32
    %147 = vector.broadcast %cst_55 : f32 to vector<32x1xf32>
    %148 = arith.addf %146, %147 : vector<32x1xf32>
    %149 = math.rsqrt %148 : vector<32x1xf32>
    %150 = vector.broadcast %149 : vector<32x1xf32> to vector<32x32xf32>
    %151 = arith.mulf %141, %150 : vector<32x32xf32>
    %152 = vector.broadcast %133 : vector<1x32xf32> to vector<32x32xf32>
    %153 = arith.mulf %151, %152 : vector<32x32xf32>
    %154 = vector.broadcast %135 : vector<1x32xf32> to vector<32x32xf32>
    %155 = arith.addf %153, %154 : vector<32x32xf32>
    %c0_56 = arith.constant 0 : index
    %c0_57 = arith.constant 0 : index
    %c0_58 = arith.constant 0 : index
    %156 = vector.load %arg11[%c0_56, %c0_57, %c0_58] : memref<2x32x64xf32, #tpu.memory_space<vmem>>, vector<1x32x64xf32>
    %157 = vector.shape_cast %156 : vector<1x32x64xf32> to vector<32x64xf32>
    %158 = arith.truncf %155 : vector<32x32xf32> to vector<32x32xbf16>
    %159 = arith.truncf %157 : vector<32x64xf32> to vector<32x64xbf16>
    %cst_59 = arith.constant dense<0.000000e+00> : vector<32x64xf32>
    %160 = tpu.matmul %158, %159, %cst_59 {dimension_numbers = #tpu.dot_dimension_numbers<[1], [0], [0], [1], [0, 0, 1, 1], [], []>} : vector<32x32xbf16>, vector<32x64xbf16>, vector<32x64xf32> -> vector<32x64xf32>
    %c0_60 = arith.constant 0 : index
    %c0_61 = arith.constant 0 : index
    %c0_62 = arith.constant 0 : index
    %161 = vector.load %arg12[%c0_60, %c0_61, %c0_62] : memref<2x1x64xf32, #tpu.memory_space<vmem>>, vector<1x1x64xf32>
    %162 = vector.shape_cast %161 : vector<1x1x64xf32> to vector<1x64xf32>
    %163 = vector.broadcast %162 : vector<1x64xf32> to vector<32x64xf32>
    %164 = arith.addf %160, %163 : vector<32x64xf32>
    %cst_63 = arith.constant 5.000000e-01 : f32
    %165 = vector.broadcast %cst_63 : f32 to vector<32x64xf32>
    %166 = arith.mulf %165, %164 : vector<32x64xf32>
    %167 = arith.mulf %164, %164 : vector<32x64xf32>
    %168 = arith.mulf %167, %164 : vector<32x64xf32>
    %cst_64 = arith.constant 4.471500e-02 : f32
    %169 = vector.broadcast %cst_64 : f32 to vector<32x64xf32>
    %170 = arith.mulf %169, %168 : vector<32x64xf32>
    %171 = arith.addf %164, %170 : vector<32x64xf32>
    %cst_65 = arith.constant 0.797884583 : f32
    %172 = vector.broadcast %cst_65 : f32 to vector<32x64xf32>
    %173 = arith.mulf %172, %171 : vector<32x64xf32>
    %174 = math.tanh %173 : vector<32x64xf32>
    %cst_66 = arith.constant 1.000000e+00 : f32
    %175 = vector.broadcast %cst_66 : f32 to vector<32x64xf32>
    %176 = arith.addf %175, %174 : vector<32x64xf32>
    %177 = arith.mulf %166, %176 : vector<32x64xf32>
    %c0_67 = arith.constant 0 : index
    %c0_68 = arith.constant 0 : index
    %c0_69 = arith.constant 0 : index
    %178 = vector.load %arg13[%c0_67, %c0_68, %c0_69] : memref<2x64x32xf32, #tpu.memory_space<vmem>>, vector<1x64x32xf32>
    %179 = vector.shape_cast %178 : vector<1x64x32xf32> to vector<64x32xf32>
    %180 = arith.truncf %177 : vector<32x64xf32> to vector<32x64xbf16>
    %181 = arith.truncf %179 : vector<64x32xf32> to vector<64x32xbf16>
    %cst_70 = arith.constant dense<0.000000e+00> : vector<32x32xf32>
    %182 = tpu.matmul %180, %181, %cst_70 {dimension_numbers = #tpu.dot_dimension_numbers<[1], [0], [0], [1], [0, 0, 1, 1], [], []>} : vector<32x64xbf16>, vector<64x32xbf16>, vector<32x32xf32> -> vector<32x32xf32>
    %c0_71 = arith.constant 0 : index
    %c0_72 = arith.constant 0 : index
    %c0_73 = arith.constant 0 : index
    %183 = vector.load %arg14[%c0_71, %c0_72, %c0_73] : memref<2x1x32xf32, #tpu.memory_space<vmem>>, vector<1x1x32xf32>
    %184 = vector.shape_cast %183 : vector<1x1x32xf32> to vector<1x32xf32>
    %185 = vector.broadcast %184 : vector<1x32xf32> to vector<32x32xf32>
    %186 = arith.addf %182, %185 : vector<32x32xf32>
    %187 = arith.addf %186, %155 : vector<32x32xf32>
    %c0_74 = arith.constant 0 : index
    %c0_75 = arith.constant 0 : index
    %c0_76 = arith.constant 0 : index
    %188 = vector.load %arg15[%c0_74, %c0_75, %c0_76] : memref<2x1x32xf32, #tpu.memory_space<vmem>>, vector<1x1x32xf32>
    %189 = vector.shape_cast %188 : vector<1x1x32xf32> to vector<1x32xf32>
    %c0_77 = arith.constant 0 : index
    %c0_78 = arith.constant 0 : index
    %c0_79 = arith.constant 0 : index
    %190 = vector.load %arg16[%c0_77, %c0_78, %c0_79] : memref<2x1x32xf32, #tpu.memory_space<vmem>>, vector<1x1x32xf32>
    %191 = vector.shape_cast %190 : vector<1x1x32xf32> to vector<1x32xf32>
    %cst_80 = arith.constant dense<0.000000e+00> : vector<32xf32>
    %192 = vector.multi_reduction <add>, %187, %cst_80 [1] : vector<32x32xf32> to vector<32xf32>
    %193 = vector.shape_cast %192 : vector<32xf32> to vector<32x1xf32>
    %cst_81 = arith.constant 3.200000e+01 : f32
    %194 = vector.broadcast %cst_81 : f32 to vector<32x1xf32>
    %195 = arith.divf %193, %194 : vector<32x1xf32>
    %196 = vector.broadcast %195 : vector<32x1xf32> to vector<32x32xf32>
    %197 = arith.subf %187, %196 : vector<32x32xf32>
    %198 = arith.mulf %197, %197 : vector<32x32xf32>
    %cst_82 = arith.constant dense<0.000000e+00> : vector<32xf32>
    %199 = vector.multi_reduction <add>, %198, %cst_82 [1] : vector<32x32xf32> to vector<32xf32>
    %200 = vector.shape_cast %199 : vector<32xf32> to vector<32x1xf32>
    %cst_83 = arith.constant 3.200000e+01 : f32
    %201 = vector.broadcast %cst_83 : f32 to vector<32x1xf32>
    %202 = arith.divf %200, %201 : vector<32x1xf32>
    %cst_84 = arith.constant 9.99999996E-13 : f32
    %203 = vector.broadcast %cst_84 : f32 to vector<32x1xf32>
    %204 = arith.addf %202, %203 : vector<32x1xf32>
    %205 = math.rsqrt %204 : vector<32x1xf32>
    %206 = vector.broadcast %205 : vector<32x1xf32> to vector<32x32xf32>
    %207 = arith.mulf %197, %206 : vector<32x32xf32>
    %208 = vector.broadcast %189 : vector<1x32xf32> to vector<32x32xf32>
    %209 = arith.mulf %207, %208 : vector<32x32xf32>
    %210 = vector.broadcast %191 : vector<1x32xf32> to vector<32x32xf32>
    %211 = arith.addf %209, %210 : vector<32x32xf32>
    %c1 = arith.constant 1 : index
    %c0_85 = arith.constant 0 : index
    %c0_86 = arith.constant 0 : index
    %212 = vector.load %arg5[%c1, %c0_85, %c0_86] : memref<2x32x96xf32, #tpu.memory_space<vmem>>, vector<1x32x96xf32>
    %213 = vector.shape_cast %212 : vector<1x32x96xf32> to vector<32x96xf32>
    %214 = arith.truncf %211 : vector<32x32xf32> to vector<32x32xbf16>
    %215 = arith.truncf %213 : vector<32x96xf32> to vector<32x96xbf16>
    %cst_87 = arith.constant dense<0.000000e+00> : vector<32x96xf32>
    %216 = tpu.matmul %214, %215, %cst_87 {dimension_numbers = #tpu.dot_dimension_numbers<[1], [0], [0], [1], [0, 0, 1, 1], [], []>} : vector<32x32xbf16>, vector<32x96xbf16>, vector<32x96xf32> -> vector<32x96xf32>
    %c1_88 = arith.constant 1 : index
    %c0_89 = arith.constant 0 : index
    %c0_90 = arith.constant 0 : index
    %217 = vector.load %arg6[%c1_88, %c0_89, %c0_90] : memref<2x1x96xf32, #tpu.memory_space<vmem>>, vector<1x1x96xf32>
    %218 = vector.shape_cast %217 : vector<1x1x96xf32> to vector<1x96xf32>
    %219 = vector.broadcast %218 : vector<1x96xf32> to vector<32x96xf32>
    %220 = arith.addf %216, %219 : vector<32x96xf32>
    %221 = vector.extract_strided_slice %220 {offsets = [0, 0], sizes = [32, 8], strides = [1, 1]} : vector<32x96xf32> to vector<32x8xf32>
    %222 = vector.extract_strided_slice %220 {offsets = [0, 32], sizes = [32, 8], strides = [1, 1]} : vector<32x96xf32> to vector<32x8xf32>
    %223 = vector.extract_strided_slice %220 {offsets = [0, 64], sizes = [32, 8], strides = [1, 1]} : vector<32x96xf32> to vector<32x8xf32>
    %224 = arith.truncf %221 : vector<32x8xf32> to vector<32x8xbf16>
    %225 = arith.truncf %222 : vector<32x8xf32> to vector<32x8xbf16>
    %cst_91 = arith.constant dense<0.000000e+00> : vector<32x32xf32>
    %226 = tpu.matmul %224, %225, %cst_91 {dimension_numbers = #tpu.dot_dimension_numbers<[1], [1], [0], [0], [0, 0, 1, 0], [], []>} : vector<32x8xbf16>, vector<32x8xbf16>, vector<32x32xf32> -> vector<32x32xf32>
    %cst_92 = arith.constant 0.353553385 : f32
    %227 = vector.broadcast %cst_92 : f32 to vector<32x32xf32>
    %228 = arith.mulf %226, %227 : vector<32x32xf32>
    %229 = arith.addf %228, %23 : vector<32x32xf32>
    %cst_93 = arith.constant dense<0xFF800000> : vector<32xf32>
    %230 = vector.multi_reduction <maximumf>, %229, %cst_93 [1] : vector<32x32xf32> to vector<32xf32>
    %231 = vector.shape_cast %230 : vector<32xf32> to vector<32x1xf32>
    %232 = vector.broadcast %231 : vector<32x1xf32> to vector<32x32xf32>
    %233 = arith.subf %229, %232 : vector<32x32xf32>
    %234 = math.exp %233 : vector<32x32xf32>
    %cst_94 = arith.constant dense<0.000000e+00> : vector<32xf32>
    %235 = vector.multi_reduction <add>, %234, %cst_94 [1] : vector<32x32xf32> to vector<32xf32>
    %236 = vector.shape_cast %235 : vector<32xf32> to vector<32x1xf32>
    %237 = tpu.reciprocal %236 {approx = true} : vector<32x1xf32> -> vector<32x1xf32>
    %238 = vector.broadcast %237 : vector<32x1xf32> to vector<32x32xf32>
    %239 = arith.mulf %234, %238 : vector<32x32xf32>
    %240 = arith.truncf %239 : vector<32x32xf32> to vector<32x32xbf16>
    %241 = arith.truncf %223 : vector<32x8xf32> to vector<32x8xbf16>
    %cst_95 = arith.constant dense<0.000000e+00> : vector<32x8xf32>
    %242 = tpu.matmul %240, %241, %cst_95 {dimension_numbers = #tpu.dot_dimension_numbers<[1], [0], [0], [1], [0, 0, 1, 1], [], []>} : vector<32x32xbf16>, vector<32x8xbf16>, vector<32x8xf32> -> vector<32x8xf32>
    %243 = vector.extract_strided_slice %220 {offsets = [0, 8], sizes = [32, 8], strides = [1, 1]} : vector<32x96xf32> to vector<32x8xf32>
    %244 = vector.extract_strided_slice %220 {offsets = [0, 40], sizes = [32, 8], strides = [1, 1]} : vector<32x96xf32> to vector<32x8xf32>
    %245 = vector.extract_strided_slice %220 {offsets = [0, 72], sizes = [32, 8], strides = [1, 1]} : vector<32x96xf32> to vector<32x8xf32>
    %246 = arith.truncf %243 : vector<32x8xf32> to vector<32x8xbf16>
    %247 = arith.truncf %244 : vector<32x8xf32> to vector<32x8xbf16>
    %cst_96 = arith.constant dense<0.000000e+00> : vector<32x32xf32>
    %248 = tpu.matmul %246, %247, %cst_96 {dimension_numbers = #tpu.dot_dimension_numbers<[1], [1], [0], [0], [0, 0, 1, 0], [], []>} : vector<32x8xbf16>, vector<32x8xbf16>, vector<32x32xf32> -> vector<32x32xf32>
    %cst_97 = arith.constant 0.353553385 : f32
    %249 = vector.broadcast %cst_97 : f32 to vector<32x32xf32>
    %250 = arith.mulf %248, %249 : vector<32x32xf32>
    %251 = arith.addf %250, %23 : vector<32x32xf32>
    %cst_98 = arith.constant dense<0xFF800000> : vector<32xf32>
    %252 = vector.multi_reduction <maximumf>, %251, %cst_98 [1] : vector<32x32xf32> to vector<32xf32>
    %253 = vector.shape_cast %252 : vector<32xf32> to vector<32x1xf32>
    %254 = vector.broadcast %253 : vector<32x1xf32> to vector<32x32xf32>
    %255 = arith.subf %251, %254 : vector<32x32xf32>
    %256 = math.exp %255 : vector<32x32xf32>
    %cst_99 = arith.constant dense<0.000000e+00> : vector<32xf32>
    %257 = vector.multi_reduction <add>, %256, %cst_99 [1] : vector<32x32xf32> to vector<32xf32>
    %258 = vector.shape_cast %257 : vector<32xf32> to vector<32x1xf32>
    %259 = tpu.reciprocal %258 {approx = true} : vector<32x1xf32> -> vector<32x1xf32>
    %260 = vector.broadcast %259 : vector<32x1xf32> to vector<32x32xf32>
    %261 = arith.mulf %256, %260 : vector<32x32xf32>
    %262 = arith.truncf %261 : vector<32x32xf32> to vector<32x32xbf16>
    %263 = arith.truncf %245 : vector<32x8xf32> to vector<32x8xbf16>
    %cst_100 = arith.constant dense<0.000000e+00> : vector<32x8xf32>
    %264 = tpu.matmul %262, %263, %cst_100 {dimension_numbers = #tpu.dot_dimension_numbers<[1], [0], [0], [1], [0, 0, 1, 1], [], []>} : vector<32x32xbf16>, vector<32x8xbf16>, vector<32x8xf32> -> vector<32x8xf32>
    %265 = vector.extract_strided_slice %220 {offsets = [0, 16], sizes = [32, 8], strides = [1, 1]} : vector<32x96xf32> to vector<32x8xf32>
    %266 = vector.extract_strided_slice %220 {offsets = [0, 48], sizes = [32, 8], strides = [1, 1]} : vector<32x96xf32> to vector<32x8xf32>
    %267 = vector.extract_strided_slice %220 {offsets = [0, 80], sizes = [32, 8], strides = [1, 1]} : vector<32x96xf32> to vector<32x8xf32>
    %268 = arith.truncf %265 : vector<32x8xf32> to vector<32x8xbf16>
    %269 = arith.truncf %266 : vector<32x8xf32> to vector<32x8xbf16>
    %cst_101 = arith.constant dense<0.000000e+00> : vector<32x32xf32>
    %270 = tpu.matmul %268, %269, %cst_101 {dimension_numbers = #tpu.dot_dimension_numbers<[1], [1], [0], [0], [0, 0, 1, 0], [], []>} : vector<32x8xbf16>, vector<32x8xbf16>, vector<32x32xf32> -> vector<32x32xf32>
    %cst_102 = arith.constant 0.353553385 : f32
    %271 = vector.broadcast %cst_102 : f32 to vector<32x32xf32>
    %272 = arith.mulf %270, %271 : vector<32x32xf32>
    %273 = arith.addf %272, %23 : vector<32x32xf32>
    %cst_103 = arith.constant dense<0xFF800000> : vector<32xf32>
    %274 = vector.multi_reduction <maximumf>, %273, %cst_103 [1] : vector<32x32xf32> to vector<32xf32>
    %275 = vector.shape_cast %274 : vector<32xf32> to vector<32x1xf32>
    %276 = vector.broadcast %275 : vector<32x1xf32> to vector<32x32xf32>
    %277 = arith.subf %273, %276 : vector<32x32xf32>
    %278 = math.exp %277 : vector<32x32xf32>
    %cst_104 = arith.constant dense<0.000000e+00> : vector<32xf32>
    %279 = vector.multi_reduction <add>, %278, %cst_104 [1] : vector<32x32xf32> to vector<32xf32>
    %280 = vector.shape_cast %279 : vector<32xf32> to vector<32x1xf32>
    %281 = tpu.reciprocal %280 {approx = true} : vector<32x1xf32> -> vector<32x1xf32>
    %282 = vector.broadcast %281 : vector<32x1xf32> to vector<32x32xf32>
    %283 = arith.mulf %278, %282 : vector<32x32xf32>
    %284 = arith.truncf %283 : vector<32x32xf32> to vector<32x32xbf16>
    %285 = arith.truncf %267 : vector<32x8xf32> to vector<32x8xbf16>
    %cst_105 = arith.constant dense<0.000000e+00> : vector<32x8xf32>
    %286 = tpu.matmul %284, %285, %cst_105 {dimension_numbers = #tpu.dot_dimension_numbers<[1], [0], [0], [1], [0, 0, 1, 1], [], []>} : vector<32x32xbf16>, vector<32x8xbf16>, vector<32x8xf32> -> vector<32x8xf32>
    %287 = vector.extract_strided_slice %220 {offsets = [0, 24], sizes = [32, 8], strides = [1, 1]} : vector<32x96xf32> to vector<32x8xf32>
    %288 = vector.extract_strided_slice %220 {offsets = [0, 56], sizes = [32, 8], strides = [1, 1]} : vector<32x96xf32> to vector<32x8xf32>
    %289 = vector.extract_strided_slice %220 {offsets = [0, 88], sizes = [32, 8], strides = [1, 1]} : vector<32x96xf32> to vector<32x8xf32>
    %290 = arith.truncf %287 : vector<32x8xf32> to vector<32x8xbf16>
    %291 = arith.truncf %288 : vector<32x8xf32> to vector<32x8xbf16>
    %cst_106 = arith.constant dense<0.000000e+00> : vector<32x32xf32>
    %292 = tpu.matmul %290, %291, %cst_106 {dimension_numbers = #tpu.dot_dimension_numbers<[1], [1], [0], [0], [0, 0, 1, 0], [], []>} : vector<32x8xbf16>, vector<32x8xbf16>, vector<32x32xf32> -> vector<32x32xf32>
    %cst_107 = arith.constant 0.353553385 : f32
    %293 = vector.broadcast %cst_107 : f32 to vector<32x32xf32>
    %294 = arith.mulf %292, %293 : vector<32x32xf32>
    %295 = arith.addf %294, %23 : vector<32x32xf32>
    %cst_108 = arith.constant dense<0xFF800000> : vector<32xf32>
    %296 = vector.multi_reduction <maximumf>, %295, %cst_108 [1] : vector<32x32xf32> to vector<32xf32>
    %297 = vector.shape_cast %296 : vector<32xf32> to vector<32x1xf32>
    %298 = vector.broadcast %297 : vector<32x1xf32> to vector<32x32xf32>
    %299 = arith.subf %295, %298 : vector<32x32xf32>
    %300 = math.exp %299 : vector<32x32xf32>
    %cst_109 = arith.constant dense<0.000000e+00> : vector<32xf32>
    %301 = vector.multi_reduction <add>, %300, %cst_109 [1] : vector<32x32xf32> to vector<32xf32>
    %302 = vector.shape_cast %301 : vector<32xf32> to vector<32x1xf32>
    %303 = tpu.reciprocal %302 {approx = true} : vector<32x1xf32> -> vector<32x1xf32>
    %304 = vector.broadcast %303 : vector<32x1xf32> to vector<32x32xf32>
    %305 = arith.mulf %300, %304 : vector<32x32xf32>
    %306 = arith.truncf %305 : vector<32x32xf32> to vector<32x32xbf16>
    %307 = arith.truncf %289 : vector<32x8xf32> to vector<32x8xbf16>
    %cst_110 = arith.constant dense<0.000000e+00> : vector<32x8xf32>
    %308 = tpu.matmul %306, %307, %cst_110 {dimension_numbers = #tpu.dot_dimension_numbers<[1], [0], [0], [1], [0, 0, 1, 1], [], []>} : vector<32x32xbf16>, vector<32x8xbf16>, vector<32x8xf32> -> vector<32x8xf32>
    %309 = tpu.concatenate %242, %264, %286, %308 in 1 : vector<32x8xf32>, vector<32x8xf32>, vector<32x8xf32>, vector<32x8xf32> -> vector<32x32xf32>
    %c1_111 = arith.constant 1 : index
    %c0_112 = arith.constant 0 : index
    %c0_113 = arith.constant 0 : index
    %310 = vector.load %arg7[%c1_111, %c0_112, %c0_113] : memref<2x32x32xf32, #tpu.memory_space<vmem>>, vector<1x32x32xf32>
    %311 = vector.shape_cast %310 : vector<1x32x32xf32> to vector<32x32xf32>
    %312 = arith.truncf %309 : vector<32x32xf32> to vector<32x32xbf16>
    %313 = arith.truncf %311 : vector<32x32xf32> to vector<32x32xbf16>
    %cst_114 = arith.constant dense<0.000000e+00> : vector<32x32xf32>
    %314 = tpu.matmul %312, %313, %cst_114 {dimension_numbers = #tpu.dot_dimension_numbers<[1], [0], [0], [1], [0, 0, 1, 1], [], []>} : vector<32x32xbf16>, vector<32x32xbf16>, vector<32x32xf32> -> vector<32x32xf32>
    %c1_115 = arith.constant 1 : index
    %c0_116 = arith.constant 0 : index
    %c0_117 = arith.constant 0 : index
    %315 = vector.load %arg8[%c1_115, %c0_116, %c0_117] : memref<2x1x32xf32, #tpu.memory_space<vmem>>, vector<1x1x32xf32>
    %316 = vector.shape_cast %315 : vector<1x1x32xf32> to vector<1x32xf32>
    %317 = vector.broadcast %316 : vector<1x32xf32> to vector<32x32xf32>
    %318 = arith.addf %314, %317 : vector<32x32xf32>
    %319 = arith.addf %318, %211 : vector<32x32xf32>
    %c1_118 = arith.constant 1 : index
    %c0_119 = arith.constant 0 : index
    %c0_120 = arith.constant 0 : index
    %320 = vector.load %arg9[%c1_118, %c0_119, %c0_120] : memref<2x1x32xf32, #tpu.memory_space<vmem>>, vector<1x1x32xf32>
    %321 = vector.shape_cast %320 : vector<1x1x32xf32> to vector<1x32xf32>
    %c1_121 = arith.constant 1 : index
    %c0_122 = arith.constant 0 : index
    %c0_123 = arith.constant 0 : index
    %322 = vector.load %arg10[%c1_121, %c0_122, %c0_123] : memref<2x1x32xf32, #tpu.memory_space<vmem>>, vector<1x1x32xf32>
    %323 = vector.shape_cast %322 : vector<1x1x32xf32> to vector<1x32xf32>
    %cst_124 = arith.constant dense<0.000000e+00> : vector<32xf32>
    %324 = vector.multi_reduction <add>, %319, %cst_124 [1] : vector<32x32xf32> to vector<32xf32>
    %325 = vector.shape_cast %324 : vector<32xf32> to vector<32x1xf32>
    %cst_125 = arith.constant 3.200000e+01 : f32
    %326 = vector.broadcast %cst_125 : f32 to vector<32x1xf32>
    %327 = arith.divf %325, %326 : vector<32x1xf32>
    %328 = vector.broadcast %327 : vector<32x1xf32> to vector<32x32xf32>
    %329 = arith.subf %319, %328 : vector<32x32xf32>
    %330 = arith.mulf %329, %329 : vector<32x32xf32>
    %cst_126 = arith.constant dense<0.000000e+00> : vector<32xf32>
    %331 = vector.multi_reduction <add>, %330, %cst_126 [1] : vector<32x32xf32> to vector<32xf32>
    %332 = vector.shape_cast %331 : vector<32xf32> to vector<32x1xf32>
    %cst_127 = arith.constant 3.200000e+01 : f32
    %333 = vector.broadcast %cst_127 : f32 to vector<32x1xf32>
    %334 = arith.divf %332, %333 : vector<32x1xf32>
    %cst_128 = arith.constant 9.99999996E-13 : f32
    %335 = vector.broadcast %cst_128 : f32 to vector<32x1xf32>
    %336 = arith.addf %334, %335 : vector<32x1xf32>
    %337 = math.rsqrt %336 : vector<32x1xf32>
    %338 = vector.broadcast %337 : vector<32x1xf32> to vector<32x32xf32>
    %339 = arith.mulf %329, %338 : vector<32x32xf32>
    %340 = vector.broadcast %321 : vector<1x32xf32> to vector<32x32xf32>
    %341 = arith.mulf %339, %340 : vector<32x32xf32>
    %342 = vector.broadcast %323 : vector<1x32xf32> to vector<32x32xf32>
    %343 = arith.addf %341, %342 : vector<32x32xf32>
    %c1_129 = arith.constant 1 : index
    %c0_130 = arith.constant 0 : index
    %c0_131 = arith.constant 0 : index
    %344 = vector.load %arg11[%c1_129, %c0_130, %c0_131] : memref<2x32x64xf32, #tpu.memory_space<vmem>>, vector<1x32x64xf32>
    %345 = vector.shape_cast %344 : vector<1x32x64xf32> to vector<32x64xf32>
    %346 = arith.truncf %343 : vector<32x32xf32> to vector<32x32xbf16>
    %347 = arith.truncf %345 : vector<32x64xf32> to vector<32x64xbf16>
    %cst_132 = arith.constant dense<0.000000e+00> : vector<32x64xf32>
    %348 = tpu.matmul %346, %347, %cst_132 {dimension_numbers = #tpu.dot_dimension_numbers<[1], [0], [0], [1], [0, 0, 1, 1], [], []>} : vector<32x32xbf16>, vector<32x64xbf16>, vector<32x64xf32> -> vector<32x64xf32>
    %c1_133 = arith.constant 1 : index
    %c0_134 = arith.constant 0 : index
    %c0_135 = arith.constant 0 : index
    %349 = vector.load %arg12[%c1_133, %c0_134, %c0_135] : memref<2x1x64xf32, #tpu.memory_space<vmem>>, vector<1x1x64xf32>
    %350 = vector.shape_cast %349 : vector<1x1x64xf32> to vector<1x64xf32>
    %351 = vector.broadcast %350 : vector<1x64xf32> to vector<32x64xf32>
    %352 = arith.addf %348, %351 : vector<32x64xf32>
    %cst_136 = arith.constant 5.000000e-01 : f32
    %353 = vector.broadcast %cst_136 : f32 to vector<32x64xf32>
    %354 = arith.mulf %353, %352 : vector<32x64xf32>
    %355 = arith.mulf %352, %352 : vector<32x64xf32>
    %356 = arith.mulf %355, %352 : vector<32x64xf32>
    %cst_137 = arith.constant 4.471500e-02 : f32
    %357 = vector.broadcast %cst_137 : f32 to vector<32x64xf32>
    %358 = arith.mulf %357, %356 : vector<32x64xf32>
    %359 = arith.addf %352, %358 : vector<32x64xf32>
    %cst_138 = arith.constant 0.797884583 : f32
    %360 = vector.broadcast %cst_138 : f32 to vector<32x64xf32>
    %361 = arith.mulf %360, %359 : vector<32x64xf32>
    %362 = math.tanh %361 : vector<32x64xf32>
    %cst_139 = arith.constant 1.000000e+00 : f32
    %363 = vector.broadcast %cst_139 : f32 to vector<32x64xf32>
    %364 = arith.addf %363, %362 : vector<32x64xf32>
    %365 = arith.mulf %354, %364 : vector<32x64xf32>
    %c1_140 = arith.constant 1 : index
    %c0_141 = arith.constant 0 : index
    %c0_142 = arith.constant 0 : index
    %366 = vector.load %arg13[%c1_140, %c0_141, %c0_142] : memref<2x64x32xf32, #tpu.memory_space<vmem>>, vector<1x64x32xf32>
    %367 = vector.shape_cast %366 : vector<1x64x32xf32> to vector<64x32xf32>
    %368 = arith.truncf %365 : vector<32x64xf32> to vector<32x64xbf16>
    %369 = arith.truncf %367 : vector<64x32xf32> to vector<64x32xbf16>
    %cst_143 = arith.constant dense<0.000000e+00> : vector<32x32xf32>
    %370 = tpu.matmul %368, %369, %cst_143 {dimension_numbers = #tpu.dot_dimension_numbers<[1], [0], [0], [1], [0, 0, 1, 1], [], []>} : vector<32x64xbf16>, vector<64x32xbf16>, vector<32x32xf32> -> vector<32x32xf32>
    %c1_144 = arith.constant 1 : index
    %c0_145 = arith.constant 0 : index
    %c0_146 = arith.constant 0 : index
    %371 = vector.load %arg14[%c1_144, %c0_145, %c0_146] : memref<2x1x32xf32, #tpu.memory_space<vmem>>, vector<1x1x32xf32>
    %372 = vector.shape_cast %371 : vector<1x1x32xf32> to vector<1x32xf32>
    %373 = vector.broadcast %372 : vector<1x32xf32> to vector<32x32xf32>
    %374 = arith.addf %370, %373 : vector<32x32xf32>
    %375 = arith.addf %374, %343 : vector<32x32xf32>
    %c1_147 = arith.constant 1 : index
    %c0_148 = arith.constant 0 : index
    %c0_149 = arith.constant 0 : index
    %376 = vector.load %arg15[%c1_147, %c0_148, %c0_149] : memref<2x1x32xf32, #tpu.memory_space<vmem>>, vector<1x1x32xf32>
    %377 = vector.shape_cast %376 : vector<1x1x32xf32> to vector<1x32xf32>
    %c1_150 = arith.constant 1 : index
    %c0_151 = arith.constant 0 : index
    %c0_152 = arith.constant 0 : index
    %378 = vector.load %arg16[%c1_150, %c0_151, %c0_152] : memref<2x1x32xf32, #tpu.memory_space<vmem>>, vector<1x1x32xf32>
    %379 = vector.shape_cast %378 : vector<1x1x32xf32> to vector<1x32xf32>
    %cst_153 = arith.constant dense<0.000000e+00> : vector<32xf32>
    %380 = vector.multi_reduction <add>, %375, %cst_153 [1] : vector<32x32xf32> to vector<32xf32>
    %381 = vector.shape_cast %380 : vector<32xf32> to vector<32x1xf32>
    %cst_154 = arith.constant 3.200000e+01 : f32
    %382 = vector.broadcast %cst_154 : f32 to vector<32x1xf32>
    %383 = arith.divf %381, %382 : vector<32x1xf32>
    %384 = vector.broadcast %383 : vector<32x1xf32> to vector<32x32xf32>
    %385 = arith.subf %375, %384 : vector<32x32xf32>
    %386 = arith.mulf %385, %385 : vector<32x32xf32>
    %cst_155 = arith.constant dense<0.000000e+00> : vector<32xf32>
    %387 = vector.multi_reduction <add>, %386, %cst_155 [1] : vector<32x32xf32> to vector<32xf32>
    %388 = vector.shape_cast %387 : vector<32xf32> to vector<32x1xf32>
    %cst_156 = arith.constant 3.200000e+01 : f32
    %389 = vector.broadcast %cst_156 : f32 to vector<32x1xf32>
    %390 = arith.divf %388, %389 : vector<32x1xf32>
    %cst_157 = arith.constant 9.99999996E-13 : f32
    %391 = vector.broadcast %cst_157 : f32 to vector<32x1xf32>
    %392 = arith.addf %390, %391 : vector<32x1xf32>
    %393 = math.rsqrt %392 : vector<32x1xf32>
    %394 = vector.broadcast %393 : vector<32x1xf32> to vector<32x32xf32>
    %395 = arith.mulf %385, %394 : vector<32x32xf32>
    %396 = vector.broadcast %377 : vector<1x32xf32> to vector<32x32xf32>
    %397 = arith.mulf %395, %396 : vector<32x32xf32>
    %398 = vector.broadcast %379 : vector<1x32xf32> to vector<32x32xf32>
    %399 = arith.addf %397, %398 : vector<32x32xf32>
    %400 = vector.extract_strided_slice %399 {offsets = [0, 0], sizes = [1, 32], strides = [1, 1]} : vector<32x32xf32> to vector<1x32xf32>
    %401 = vector.extract_strided_slice %399 {offsets = [8, 0], sizes = [1, 32], strides = [1, 1]} : vector<32x32xf32> to vector<1x32xf32>
    %402 = vector.extract_strided_slice %399 {offsets = [16, 0], sizes = [1, 32], strides = [1, 1]} : vector<32x32xf32> to vector<1x32xf32>
    %403 = vector.extract_strided_slice %399 {offsets = [24, 0], sizes = [1, 32], strides = [1, 1]} : vector<32x32xf32> to vector<1x32xf32>
    %404 = tpu.concatenate %400, %401, %402, %403 in 0 : vector<1x32xf32>, vector<1x32xf32>, vector<1x32xf32>, vector<1x32xf32> -> vector<4x32xf32>
    %c0_158 = arith.constant 0 : index
    %c0_159 = arith.constant 0 : index
    %405 = vector.load %arg17[%c0_158, %c0_159] : memref<32x32xf32, #tpu.memory_space<vmem>>, vector<32x32xf32>
    %406 = arith.truncf %404 : vector<4x32xf32> to vector<4x32xbf16>
    %407 = arith.truncf %405 : vector<32x32xf32> to vector<32x32xbf16>
    %cst_160 = arith.constant dense<0.000000e+00> : vector<4x32xf32>
    %408 = tpu.matmul %406, %407, %cst_160 {dimension_numbers = #tpu.dot_dimension_numbers<[1], [0], [0], [1], [0, 0, 1, 1], [], []>} : vector<4x32xbf16>, vector<32x32xbf16>, vector<4x32xf32> -> vector<4x32xf32>
    %c0_161 = arith.constant 0 : index
    %c0_162 = arith.constant 0 : index
    %409 = vector.load %arg18[%c0_161, %c0_162] : memref<1x32xf32, #tpu.memory_space<vmem>>, vector<1x32xf32>
    %410 = vector.broadcast %409 : vector<1x32xf32> to vector<4x32xf32>
    %411 = arith.addf %408, %410 : vector<4x32xf32>
    %412 = math.tanh %411 : vector<4x32xf32>
    %413 = vector.extract_strided_slice %412 {offsets = [0, 0], sizes = [2, 32], strides = [1, 1]} : vector<4x32xf32> to vector<2x32xf32>
    %414 = vector.extract_strided_slice %412 {offsets = [2, 0], sizes = [2, 32], strides = [1, 1]} : vector<4x32xf32> to vector<2x32xf32>
    %415 = arith.mulf %413, %414 : vector<2x32xf32>
    %cst_163 = arith.constant dense<0.000000e+00> : vector<2xf32>
    %416 = vector.multi_reduction <add>, %415, %cst_163 [1] : vector<2x32xf32> to vector<2xf32>
    %417 = vector.shape_cast %416 : vector<2xf32> to vector<2x1xf32>
    %418 = arith.negf %417 : vector<2x1xf32>
    %419 = math.exp %418 : vector<2x1xf32>
    %cst_164 = arith.constant 1.000000e+00 : f32
    %420 = vector.broadcast %cst_164 : f32 to vector<2x1xf32>
    %421 = arith.addf %420, %419 : vector<2x1xf32>
    %422 = arith.divf %420, %421 : vector<2x1xf32>
    %423 = tpu.concatenate %417, %422 in 1 : vector<2x1xf32>, vector<2x1xf32> -> vector<2x2xf32>
    %c0_165 = arith.constant 0 : index
    %c0_166 = arith.constant 0 : index
    %424 = vector.load %arg19[%c0_165, %c0_166] : memref<2x2xf32, #tpu.memory_space<vmem>>, vector<2x2xf32>
    tpu.vector_store %arg19[%c0_165, %c0_166], %423 {strides = array<i32>} : memref<2x2xf32, #tpu.memory_space<vmem>>, vector<2x2xf32>,
    return
  }
  func.func @transform_0(%arg0: i32) -> (i32, i32) {
    %c0_i32 = arith.constant 0 : i32
    %c0_i32_0 = arith.constant 0 : i32
    %c0_i32_1 = arith.constant 0 : i32
    return %c0_i32, %c0_i32_0 : i32, i32
  }
  func.func @transform_1(%arg0: i32) -> (i32, i32) {
    %c0_i32 = arith.constant 0 : i32
    %c0_i32_0 = arith.constant 0 : i32
    %c0_i32_1 = arith.constant 0 : i32
    return %c0_i32, %c0_i32_0 : i32, i32
  }
  func.func @transform_2(%arg0: i32) -> (i32, i32) {
    %c0_i32 = arith.constant 0 : i32
    %c0_i32_0 = arith.constant 0 : i32
    %c0_i32_1 = arith.constant 0 : i32
    return %c0_i32, %c0_i32_0 : i32, i32
  }
  func.func @transform_3(%arg0: i32) -> (i32, i32) {
    %c0_i32 = arith.constant 0 : i32
    %c0_i32_0 = arith.constant 0 : i32
    %c0_i32_1 = arith.constant 0 : i32
    return %c0_i32, %c0_i32_0 : i32, i32
  }
  func.func @transform_4(%arg0: i32) -> (i32, i32, i32) {
    %c0_i32 = arith.constant 0 : i32
    %c0_i32_0 = arith.constant 0 : i32
    %c0_i32_1 = arith.constant 0 : i32
    %c0_i32_2 = arith.constant 0 : i32
    return %c0_i32, %c0_i32_0, %c0_i32_1 : i32, i32, i32
  }
  func.func @transform_5(%arg0: i32) -> (i32, i32, i32) {
    %c0_i32 = arith.constant 0 : i32
    %c0_i32_0 = arith.constant 0 : i32
    %c0_i32_1 = arith.constant 0 : i32
    %c0_i32_2 = arith.constant 0 : i32
    return %c0_i32, %c0_i32_0, %c0_i32_1 : i32, i32, i32
  }
  func.func @transform_6(%arg0: i32) -> (i32, i32, i32) {
    %c0_i32 = arith.constant 0 : i32
    %c0_i32_0 = arith.constant 0 : i32
    %c0_i32_1 = arith.constant 0 : i32
    %c0_i32_2 = arith.constant 0 : i32
    return %c0_i32, %c0_i32_0, %c0_i32_1 : i32, i32, i32
  }
  func.func @transform_7(%arg0: i32) -> (i32, i32, i32) {
    %c0_i32 = arith.constant 0 : i32
    %c0_i32_0 = arith.constant 0 : i32
    %c0_i32_1 = arith.constant 0 : i32
    %c0_i32_2 = arith.constant 0 : i32
    return %c0_i32, %c0_i32_0, %c0_i32_1 : i32, i32, i32
  }
  func.func @transform_8(%arg0: i32) -> (i32, i32, i32) {
    %c0_i32 = arith.constant 0 : i32
    %c0_i32_0 = arith.constant 0 : i32
    %c0_i32_1 = arith.constant 0 : i32
    %c0_i32_2 = arith.constant 0 : i32
    return %c0_i32, %c0_i32_0, %c0_i32_1 : i32, i32, i32
  }
  func.func @transform_9(%arg0: i32) -> (i32, i32, i32) {
    %c0_i32 = arith.constant 0 : i32
    %c0_i32_0 = arith.constant 0 : i32
    %c0_i32_1 = arith.constant 0 : i32
    %c0_i32_2 = arith.constant 0 : i32
    return %c0_i32, %c0_i32_0, %c0_i32_1 : i32, i32, i32
  }
  func.func @transform_10(%arg0: i32) -> (i32, i32, i32) {
    %c0_i32 = arith.constant 0 : i32
    %c0_i32_0 = arith.constant 0 : i32
    %c0_i32_1 = arith.constant 0 : i32
    %c0_i32_2 = arith.constant 0 : i32
    return %c0_i32, %c0_i32_0, %c0_i32_1 : i32, i32, i32
  }
  func.func @transform_11(%arg0: i32) -> (i32, i32, i32) {
    %c0_i32 = arith.constant 0 : i32
    %c0_i32_0 = arith.constant 0 : i32
    %c0_i32_1 = arith.constant 0 : i32
    %c0_i32_2 = arith.constant 0 : i32
    return %c0_i32, %c0_i32_0, %c0_i32_1 : i32, i32, i32
  }
  func.func @transform_12(%arg0: i32) -> (i32, i32, i32) {
    %c0_i32 = arith.constant 0 : i32
    %c0_i32_0 = arith.constant 0 : i32
    %c0_i32_1 = arith.constant 0 : i32
    %c0_i32_2 = arith.constant 0 : i32
    return %c0_i32, %c0_i32_0, %c0_i32_1 : i32, i32, i32
  }
  func.func @transform_13(%arg0: i32) -> (i32, i32, i32) {
    %c0_i32 = arith.constant 0 : i32
    %c0_i32_0 = arith.constant 0 : i32
    %c0_i32_1 = arith.constant 0 : i32
    %c0_i32_2 = arith.constant 0 : i32
    return %c0_i32, %c0_i32_0, %c0_i32_1 : i32, i32, i32
  }
  func.func @transform_14(%arg0: i32) -> (i32, i32, i32) {
    %c0_i32 = arith.constant 0 : i32
    %c0_i32_0 = arith.constant 0 : i32
    %c0_i32_1 = arith.constant 0 : i32
    %c0_i32_2 = arith.constant 0 : i32
    return %c0_i32, %c0_i32_0, %c0_i32_1 : i32, i32, i32
  }
  func.func @transform_15(%arg0: i32) -> (i32, i32, i32) {
    %c0_i32 = arith.constant 0 : i32
    %c0_i32_0 = arith.constant 0 : i32
    %c0_i32_1 = arith.constant 0 : i32
    %c0_i32_2 = arith.constant 0 : i32
    return %c0_i32, %c0_i32_0, %c0_i32_1 : i32, i32, i32
  }
  func.func @transform_16(%arg0: i32) -> (i32, i32) {
    %c0_i32 = arith.constant 0 : i32
    %c0_i32_0 = arith.constant 0 : i32
    %c0_i32_1 = arith.constant 0 : i32
    return %c0_i32, %c0_i32_0 : i32, i32
  }
  func.func @transform_17(%arg0: i32) -> (i32, i32) {
    %c0_i32 = arith.constant 0 : i32
    %c0_i32_0 = arith.constant 0 : i32
    %c0_i32_1 = arith.constant 0 : i32
    return %c0_i32, %c0_i32_0 : i32, i32
  }
  func.func @transform_18(%arg0: i32) -> (i32, i32) {
    %c0_i32 = arith.constant 0 : i32
    %c0_i32_0 = arith.constant 0 : i32
    %c0_i32_1 = arith.constant 0 : i32
    return %c0_i32, %c0_i32_0 : i32, i32
  }
}

</mosaic_0001>

<llo_original>
// kernel: bert_edge_scorer.1
$region0: #{bert_edge_scorer.1}
  #allocation0 [shape = 'u32[]', space=smem, size = 0x4, offset = 0x4, fixed_abs, tag = 'smem constant byte address 0x4 - core index']
  #allocation1 [shape = 'u32[144,128]{1,0:T(1,128)}', space=vmem, size = 0x12000, scoped, tag = 'internal scratch']
  %s0 = inlined_call_operand.vmem [shape: f32[32,32], index: 0, kind: input, shape index: {}]
  %s1 = inlined_call_operand.vmem [shape: f32[32,32], index: 1, kind: input, shape index: {}]
  %s2 = inlined_call_operand.vmem [shape: f32[1,32], index: 2, kind: input, shape index: {}]
  %s3 = inlined_call_operand.vmem [shape: f32[1,32], index: 3, kind: input, shape index: {}, may-alias: {3,17}]
  %s4 = inlined_call_operand.vmem [shape: f32[2,32,96], index: 4, kind: input, shape index: {}]
  %s5 = inlined_call_operand.vmem [shape: f32[2,1,96], index: 5, kind: input, shape index: {}]
  %s6 = inlined_call_operand.vmem [shape: f32[2,32,32], index: 6, kind: input, shape index: {}]
  %s7 = inlined_call_operand.vmem [shape: f32[2,1,32], index: 7, kind: input, shape index: {}, may-alias: {7,9,13,15}]
  %s8 = inlined_call_operand.vmem [shape: f32[2,1,32], index: 8, kind: input, shape index: {}, may-alias: {8,14}]
  %s9 = inlined_call_operand.vmem [shape: f32[2,1,32], index: 9, kind: input, shape index: {}, may-alias: {7,9,13,15}]
  %s10 = inlined_call_operand.vmem [shape: f32[2,32,64], index: 10, kind: input, shape index: {}]
  %s11 = inlined_call_operand.vmem [shape: f32[2,1,64], index: 11, kind: input, shape index: {}]
  %s12 = inlined_call_operand.vmem [shape: f32[2,64,32], index: 12, kind: input, shape index: {}]
  %s13 = inlined_call_operand.vmem [shape: f32[2,1,32], index: 13, kind: input, shape index: {}, may-alias: {7,9,13,15}]
  %s14 = inlined_call_operand.vmem [shape: f32[2,1,32], index: 14, kind: input, shape index: {}, may-alias: {8,14}]
  %s15 = inlined_call_operand.vmem [shape: f32[2,1,32], index: 15, kind: input, shape index: {}, may-alias: {7,9,13,15}]
  %s16 = inlined_call_operand.vmem [shape: f32[32,32], index: 16, kind: input, shape index: {}]
  %s17 = inlined_call_operand.vmem [shape: f32[1,32], index: 17, kind: input, shape index: {}, may-alias: {3,17}]
  %s18 = inlined_call_operand.vmem [shape: f32[2,2], index: 18, kind: output, shape index: {}]
  %s19 = sld [smem:[#allocation0]]
  $region82: #{bert_edge_scorer.1} parent=0
    _
  %s21 = ssub.s32 1, %s19
  %s22 = scalar_select 0, %s21, %s19
  // Predicated region
  $region2: #{bert_edge_scorer.1} parent=0 // pred_check
    _
  $region3: #{bert_edge_scorer.1} parent=0 // pred_check_branch
    %24 = sbr.rel (0) target = $region5
  $region4: #{bert_edge_scorer.1} parent=0 // pred_region
    _
  $region5: #{bert_edge_scorer.1} parent=0 // pred_fallthru
    _
  // Predicated region
  $region6: #{bert_edge_scorer.1} parent=0 // pred_check
    _
  $region7: #{bert_edge_scorer.1} parent=0 // pred_check_branch
    %26 = sbr.rel (0) target = $region9
  $region8: #{bert_edge_scorer.1} parent=0 // pred_region
    _
  $region9: #{bert_edge_scorer.1} parent=0 // pred_fallthru
    _
  // Predicated region
  $region10: #{bert_edge_scorer.1} parent=0 // pred_check
    _
  $region11: #{bert_edge_scorer.1} parent=0 // pred_check_branch
    %28 = sbr.rel (0) target = $region13
  $region12: #{bert_edge_scorer.1} parent=0 // pred_region
    _
  $region13: #{bert_edge_scorer.1} parent=0 // pred_fallthru
    _
  // Predicated region
  $region14: #{bert_edge_scorer.1} parent=0 // pred_check
    _
  $region15: #{bert_edge_scorer.1} parent=0 // pred_check_branch
    %30 = sbr.rel (0) target = $region17
  $region16: #{bert_edge_scorer.1} parent=0 // pred_region
    _
  $region17: #{bert_edge_scorer.1} parent=0 // pred_fallthru
    _
  // Predicated region
  $region18: #{bert_edge_scorer.1} parent=0 // pred_check
    _
  $region19: #{bert_edge_scorer.1} parent=0 // pred_check_branch
    %32 = sbr.rel (0) target = $region21
  $region20: #{bert_edge_scorer.1} parent=0 // pred_region
    _
  $region21: #{bert_edge_scorer.1} parent=0 // pred_fallthru
    _
  // Predicated region
  $region22: #{bert_edge_scorer.1} parent=0 // pred_check
    _
  $region23: #{bert_edge_scorer.1} parent=0 // pred_check_branch
    %34 = sbr.rel (0) target = $region25
  $region24: #{bert_edge_scorer.1} parent=0 // pred_region
    _
  $region25: #{bert_edge_scorer.1} parent=0 // pred_fallthru
    _
  // Predicated region
  $region26: #{bert_edge_scorer.1} parent=0 // pred_check
    _
  $region27: #{bert_edge_scorer.1} parent=0 // pred_check_branch
    %36 = sbr.rel (0) target = $region29
  $region28: #{bert_edge_scorer.1} parent=0 // pred_region
    _
  $region29: #{bert_edge_scorer.1} parent=0 // pred_fallthru
    _
  // Predicated region
  $region30: #{bert_edge_scorer.1} parent=0 // pred_check
    _
  $region31: #{bert_edge_scorer.1} parent=0 // pred_check_branch
    %38 = sbr.rel (0) target = $region33
  $region32: #{bert_edge_scorer.1} parent=0 // pred_region
    _
  $region33: #{bert_edge_scorer.1} parent=0 // pred_fallthru
    _
  // Predicated region
  $region34: #{bert_edge_scorer.1} parent=0 // pred_check
    _
  $region35: #{bert_edge_scorer.1} parent=0 // pred_check_branch
    %40 = sbr.rel (0) target = $region37
  $region36: #{bert_edge_scorer.1} parent=0 // pred_region
    _
  $region37: #{bert_edge_scorer.1} parent=0 // pred_fallthru
    _
  // Predicated region
  $region38: #{bert_edge_scorer.1} parent=0 // pred_check
    _
  $region39: #{bert_edge_scorer.1} parent=0 // pred_check_branch
    %42 = sbr.rel (0) target = $region41
  $region40: #{bert_edge_scorer.1} parent=0 // pred_region
    _
  $region41: #{bert_edge_scorer.1} parent=0 // pred_fallthru
    _
  // Predicated region
  $region42: #{bert_edge_scorer.1} parent=0 // pred_check
    _
  $region43: #{bert_edge_scorer.1} parent=0 // pred_check_branch
    %44 = sbr.rel (0) target = $region45
  $region44: #{bert_edge_scorer.1} parent=0 // pred_region
    _
  $region45: #{bert_edge_scorer.1} parent=0 // pred_fallthru
    _
  // Predicated region
  $region46: #{bert_edge_scorer.1} parent=0 // pred_check
    _
  $region47: #{bert_edge_scorer.1} parent=0 // pred_check_branch
    %46 = sbr.rel (0) target = $region49
  $region48: #{bert_edge_scorer.1} parent=0 // pred_region
    _
  $region49: #{bert_edge_scorer.1} parent=0 // pred_fallthru
    _
  // Predicated region
  $region50: #{bert_edge_scorer.1} parent=0 // pred_check
    _
  $region51: #{bert_edge_scorer.1} parent=0 // pred_check_branch
    %48 = sbr.rel (0) target = $region53
  $region52: #{bert_edge_scorer.1} parent=0 // pred_region
    _
  $region53: #{bert_edge_scorer.1} parent=0 // pred_fallthru
    _
  // Predicated region
  $region54: #{bert_edge_scorer.1} parent=0 // pred_check
    _
  $region55: #{bert_edge_scorer.1} parent=0 // pred_check_branch
    %50 = sbr.rel (0) target = $region57
  $region56: #{bert_edge_scorer.1} parent=0 // pred_region
    _
  $region57: #{bert_edge_scorer.1} parent=0 // pred_fallthru
    _
  // Predicated region
  $region58: #{bert_edge_scorer.1} parent=0 // pred_check
    _
  $region59: #{bert_edge_scorer.1} parent=0 // pred_check_branch
    %52 = sbr.rel (0) target = $region61
  $region60: #{bert_edge_scorer.1} parent=0 // pred_region
    _
  $region61: #{bert_edge_scorer.1} parent=0 // pred_fallthru
    _
  // Predicated region
  $region62: #{bert_edge_scorer.1} parent=0 // pred_check
    _
  $region63: #{bert_edge_scorer.1} parent=0 // pred_check_branch
    %54 = sbr.rel (0) target = $region65
  $region64: #{bert_edge_scorer.1} parent=0 // pred_region
    _
  $region65: #{bert_edge_scorer.1} parent=0 // pred_fallthru
    _
  // Predicated region
  $region66: #{bert_edge_scorer.1} parent=0 // pred_check
    _
  $region67: #{bert_edge_scorer.1} parent=0 // pred_check_branch
    %56 = sbr.rel (0) target = $region69
  $region68: #{bert_edge_scorer.1} parent=0 // pred_region
    _
  $region69: #{bert_edge_scorer.1} parent=0 // pred_fallthru
    _
  // Predicated region
  $region70: #{bert_edge_scorer.1} parent=0 // pred_check
    _
  $region71: #{bert_edge_scorer.1} parent=0 // pred_check_branch
    %58 = sbr.rel (0) target = $region73
  $region72: #{bert_edge_scorer.1} parent=0 // pred_region
    _
  $region73: #{bert_edge_scorer.1} parent=0 // pred_fallthru
    _
  %v60 = vld [vmem:[%s0] sm:$0xff]
  %v61 = vld [vmem:[%s0 + $0x8] sm:$0xff]
  %v62 = vld [vmem:[%s0 + $0x10] sm:$0xff]
  %v63 = vld [vmem:[%s0 + $0x18] sm:$0xff]
  %v64 = vld [vmem:[%s2] sm:$0x1]
  %v65 = vld [vmem:[%s3] sm:$0x1]
  %vm66 = vcmask 261120
  %v67 = vsel %vm66, %v60, 0.0
  %68 = vadd.xlane.f32.xlu0 %v67
  %v69 = vpop.xlane.xlu0 %68
  %v70 = vsel %vm66, %v61, 0.0
  %71 = vadd.xlane.f32.xlu0 %v70
  %v72 = vpop.xlane.xlu0 %71
  %v73 = vsel %vm66, %v62, 0.0
  %74 = vadd.xlane.f32.xlu0 %v73
  %v75 = vpop.xlane.xlu0 %74
  %v76 = vsel %vm66, %v63, 0.0
  %77 = vadd.xlane.f32.xlu0 %v76
  %v78 = vpop.xlane.xlu0 %77
  %v79 = vrcp.pop 32.0
  %v80 = vmul.f32 %v69, %v79
  %v81 = vmul.f32 %v72, %v79
  %v82 = vmul.f32 %v75, %v79
  %v83 = vmul.f32 %v78, %v79
  %v84 = vsub.f32 %v60, %v80
  %v85 = vsub.f32 %v61, %v81
  %v86 = vsub.f32 %v62, %v82
  %v87 = vsub.f32 %v63, %v83
  %v88 = vmul.f32 %v84, %v84
  %v89 = vmul.f32 %v85, %v85
  %v90 = vmul.f32 %v86, %v86
  %v91 = vmul.f32 %v87, %v87
  %v92 = vsel %vm66, %v88, 0.0
  %93 = vadd.xlane.f32.xlu0 %v92
  %v94 = vpop.xlane.xlu0 %93
  %v95 = vsel %vm66, %v89, 0.0
  %96 = vadd.xlane.f32.xlu0 %v95
  %v97 = vpop.xlane.xlu0 %96
  %v98 = vsel %vm66, %v90, 0.0
  %99 = vadd.xlane.f32.xlu0 %v98
  %v100 = vpop.xlane.xlu0 %99
  %v101 = vsel %vm66, %v91, 0.0
  %102 = vadd.xlane.f32.xlu0 %v101
  %v103 = vpop.xlane.xlu0 %102
  %v104 = vmul.f32 %v94, %v79
  %v105 = vmul.f32 %v97, %v79
  %v106 = vmul.f32 %v100, %v79
  %v107 = vmul.f32 %v103, %v79
  %v108 = vadd.f32 %v104, 1e-12
  %v109 = vadd.f32 %v105, 1e-12
  %v110 = vadd.f32 %v106, 1e-12
  %v111 = vadd.f32 %v107, 1e-12
  %v112 = vrsqrt.pop %v108
  %v113 = vrsqrt.pop %v109
  %v114 = vrsqrt.pop %v110
  %v115 = vrsqrt.pop %v111
  %v116 = vmul.f32 %v84, %v112
  %v117 = vmul.f32 %v85, %v113
  %v118 = vmul.f32 %v86, %v114
  %v119 = vmul.f32 %v87, %v115
  %v121 = vlaneseq
  %v122 = vshrl.u32 %v121, 7
  %v123 = vsub.s32 0, %v122
  %v124 = vrot.slane %v64, %v123
  %v126 = vmul.f32 %v116, %v124
  %v127 = vmul.f32 %v117, %v124
  %v128 = vmul.f32 %v118, %v124
  %v129 = vmul.f32 %v119, %v124
  %v131 = vlaneseq
  %v132 = vshrl.u32 %v131, 7
  %v133 = vsub.s32 0, %v132
  %v134 = vrot.slane %v65, %v133
  %v136 = vadd.f32 %v126, %v134
  %v137 = vadd.f32 %v127, %v134
  %v138 = vadd.f32 %v128, %v134
  %v139 = vadd.f32 %v129, %v134
  %v140 = vld [vmem:[%s1] sm:$0xff]
  %v141 = vld [vmem:[%s1 + $0x8] sm:$0xff]
  %v142 = vld [vmem:[%s1 + $0x10] sm:$0xff]
  %v143 = vld [vmem:[%s1 + $0x18] sm:$0xff]
  %v144 = vld [vmem:[%s4] sm:$0xff]
  %v145 = vld [vmem:[%s4 + $0x8] sm:$0xff]
  %v146 = vld [vmem:[%s4 + $0x10] sm:$0xff]
  %v147 = vld [vmem:[%s4 + $0x18] sm:$0xff]
  %v148 = vpack.c.bf16 %v137, %v136
  %v149 = vpack.c.bf16 %v139, %v138
  %v150 = vpack.c.bf16 %v145, %v144
  %v151 = vpack.c.bf16 %v147, %v146
  %v152 = vld [vmem:[%s5] sm:$0x1]
  %v154 = vlaneseq
  %v155 = vshrl.u32 %v154, 7
  %v156 = vsub.s32 0, %v155
  %v157 = vrot.slane %v152, %v156
  %v160 = vsel %vm66, %v148, 0
  %v163 = vsel %vm66, %v149, 0
  %165 = vmatprep.subr.bf16.mxu0 0
  %166 = vmatpush1.bf16.msra.mxu0 %v150
  %167 = vmatprep.subr.bf16.mxu0 0
  %168 = vmatpush1.bf16.msra.mxu0 %v151
  %169 = vmatprep.subr.bf16.mxu0 0
  %170 = vmatpush1.bf16.msra.mxu0 0
  %171 = vmatprep.subr.bf16.mxu0 0
  %172 = vmatpush1.bf16.msra.mxu0 0
  %173 = vmatprep.subr.bf16.mxu0 0
  %174 = vmatpush1.bf16.msra.mxu0 0
  %175 = vmatprep.subr.bf16.mxu0 0
  %176 = vmatpush1.bf16.msra.mxu0 0
  %177 = vmatprep.subr.bf16.mxu0 0
  %178 = vmatpush1.bf16.msra.mxu0 0
  %179 = vmatprep.subr.bf16.mxu0 0
  %180 = vmatpush1.bf16.msra.mxu0 0
  %181 = vmatprep.subr.bf16.mxu0 0
  %182 = vmatpush1.bf16.msra.mxu0 0
  %183 = vmatprep.subr.bf16.mxu0 0
  %184 = vmatpush1.bf16.msra.mxu0 0
  %185 = vmatprep.subr.bf16.mxu0 0
  %186 = vmatpush1.bf16.msra.mxu0 0
  %187 = vmatprep.subr.bf16.mxu0 0
  %188 = vmatpush1.bf16.msra.mxu0 0
  %189 = vmatprep.subr.bf16.mxu0 0
  %190 = vmatpush1.bf16.msra.mxu0 0
  %191 = vmatprep.subr.bf16.mxu0 0
  %192 = vmatpush1.bf16.msra.mxu0 0
  %193 = vmatprep.subr.bf16.mxu0 0
  %194 = vmatpush1.bf16.msra.mxu0 0
  %195 = vmatprep.subr.bf16.mxu0 0
  %196 = vmatpush1.bf16.msra.mxu0 0
  %197 = vmatprep.mubr.bf16.mxu0 0
  %198 = vmatmul.mubr.bf16.gmra.mrb[0].mxu0 %v160
  %v199 = vpop.f32.mrb[0].mxu0
  %v200 = vadd.f32 %v157, %v199
  %v201 = vpop.f32.mrb[0].mxu0
  %v202 = vpop.f32.mrb[0].mxu0
  %v203 = vadd.f32 %v157, %v202
  %v204 = vpop.f32.mrb[0].mxu0
  %205 = vmatprep.mubr.bf16.mxu0 0
  %206 = vmatmul.mubr.bf16.gmra.mrb[0].mxu0 %v163
  %v207 = vpop.f32.mrb[0].mxu0
  %v208 = vadd.f32 %v157, %v207
  %v209 = vpop.f32.mrb[0].mxu0
  %v210 = vpop.f32.mrb[0].mxu0
  %v211 = vadd.f32 %v157, %v210
  %v212 = vpop.f32.mrb[0].mxu0
  %213 = vdwg.mxu0
  %v214 = vpack.c.bf16 %v203, %v200
  %v215 = vpack.c.bf16 %v211, %v208
  %218 = vrot.lane.b32.xlu0 %v214, 96
  %v219 = vpop.permute.xlu0 %218
  %220 = vrot.lane.b32.xlu0 %v215, 96
  %v221 = vpop.permute.xlu0 %220
  %vm222 = vcmask 64512
  %v224 = vsel %vm222, %v214, 0
  %v227 = vsel %vm222, %v215, 0
  %v230 = vsel %vm222, %v219, 0
  %v233 = vsel %vm222, %v221, 0
  %235 = vmatprep.subr.bf16.mxu0 0
  %236 = vmatpush1.bf16.xpose.msra.mxu0 %v230
  %237 = vmatprep.subr.bf16.mxu0 0
  %238 = vmatpush1.bf16.xpose.msra.mxu0 %v233
  %239 = vmatprep.subr.bf16.mxu0 0
  %240 = vmatpush1.bf16.xpose.msra.mxu0 0
  %241 = vmatprep.subr.bf16.mxu0 0
  %242 = vmatpush1.bf16.xpose.msra.mxu0 0
  %243 = vmatprep.subr.bf16.mxu0 0
  %244 = vmatpush1.bf16.xpose.msra.mxu0 0
  %245 = vmatprep.subr.bf16.mxu0 0
  %246 = vmatpush1.bf16.xpose.msra.mxu0 0
  %247 = vmatprep.subr.bf16.mxu0 0
  %248 = vmatpush1.bf16.xpose.msra.mxu0 0
  %249 = vmatprep.subr.bf16.mxu0 0
  %250 = vmatpush1.bf16.xpose.msra.mxu0 0
  %251 = vmatprep.subr.bf16.mxu0 0
  %252 = vmatpush1.bf16.xpose.msra.mxu0 0
  %253 = vmatprep.subr.bf16.mxu0 0
  %254 = vmatpush1.bf16.xpose.msra.mxu0 0
  %255 = vmatprep.subr.bf16.mxu0 0
  %256 = vmatpush1.bf16.xpose.msra.mxu0 0
  %257 = vmatprep.subr.bf16.mxu0 0
  %258 = vmatpush1.bf16.xpose.msra.mxu0 0
  %259 = vmatprep.subr.bf16.mxu0 0
  %260 = vmatpush1.bf16.xpose.msra.mxu0 0
  %261 = vmatprep.subr.bf16.mxu0 0
  %262 = vmatpush1.bf16.xpose.msra.mxu0 0
  %263 = vmatprep.subr.bf16.mxu0 0
  %264 = vmatpush1.bf16.xpose.msra.mxu0 0
  %265 = vmatprep.subr.bf16.mxu0 0
  %266 = vmatpush1.bf16.xpose.msra.mxu0 0
  %267 = vmatprep.mubr.bf16.mxu0 0
  %268 = vmatmul.mubr.bf16.gmra.mrb[0].mxu0 %v224
  %v269 = vpop.f32.mrb[0].mxu0
  %v270 = vadd.f32 0.0, %v269
  %v271 = vpop.f32.mrb[0].mxu0
  %v272 = vpop.f32.mrb[0].mxu0
  %v273 = vadd.f32 0.0, %v272
  %v274 = vpop.f32.mrb[0].mxu0
  %275 = vmatprep.mubr.bf16.mxu0 0
  %276 = vmatmul.mubr.bf16.gmra.mrb[0].mxu0 %v227
  %v277 = vpop.f32.mrb[0].mxu0
  %v278 = vadd.f32 0.0, %v277
  %v279 = vpop.f32.mrb[0].mxu0
  %v280 = vpop.f32.mrb[0].mxu0
  %v281 = vadd.f32 0.0, %v280
  %v282 = vpop.f32.mrb[0].mxu0
  %283 = vdwg.mxu0
  %v284 = vmul.f32 %v270, 0.35355338
  %v285 = vmul.f32 %v273, 0.35355338
  %v286 = vmul.f32 %v278, 0.35355338
  %v287 = vmul.f32 %v281, 0.35355338
  %v288 = vadd.f32 %v284, %v140
  %v289 = vadd.f32 %v285, %v141
  %v290 = vadd.f32 %v286, %v142
  %v291 = vadd.f32 %v287, %v143
  %v292 = vsel %vm66, %v288, -inf
  %293 = vmax.xlane.f32.xlu0 %v292
  %v294 = vpop.xlane.xlu0 %293
  %v295 = vsel %vm66, %v289, -inf
  %296 = vmax.xlane.f32.xlu0 %v295
  %v297 = vpop.xlane.xlu0 %296
  %v298 = vsel %vm66, %v290, -inf
  %299 = vmax.xlane.f32.xlu0 %v298
  %v300 = vpop.xlane.xlu0 %299
  %v301 = vsel %vm66, %v291, -inf
  %302 = vmax.xlane.f32.xlu0 %v301
  %v303 = vpop.xlane.xlu0 %302
  %v304 = vsub.f32 %v288, %v294
  %v305 = vsub.f32 %v289, %v297
  %v306 = vsub.f32 %v290, %v300
  %v307 = vsub.f32 %v291, %v303
  %v308 = vmul.f32 %v304, 1.442695
  %v309 = vpow.pop %v308
  %v310 = vmul.f32 %v305, 1.442695
  %v311 = vpow.pop %v310
  %v312 = vmul.f32 %v306, 1.442695
  %v313 = vpow.pop %v312
  %v314 = vmul.f32 %v307, 1.442695
  %v315 = vpow.pop %v314
  %v316 = vsel %vm66, %v309, 0.0
  %317 = vadd.xlane.f32.xlu0 %v316
  %v318 = vpop.xlane.xlu0 %317
  %v319 = vsel %vm66, %v311, 0.0
  %320 = vadd.xlane.f32.xlu0 %v319
  %v321 = vpop.xlane.xlu0 %320
  %v322 = vsel %vm66, %v313, 0.0
  %323 = vadd.xlane.f32.xlu0 %v322
  %v324 = vpop.xlane.xlu0 %323
  %v325 = vsel %vm66, %v315, 0.0
  %326 = vadd.xlane.f32.xlu0 %v325
  %v327 = vpop.xlane.xlu0 %326
  %v328 = vrcp.pop %v318
  %v329 = vrcp.pop %v321
  %v330 = vrcp.pop %v324
  %v331 = vrcp.pop %v327
  %v332 = vmul.f32 %v309, %v328
  %v333 = vmul.f32 %v311, %v329
  %v334 = vmul.f32 %v313, %v330
  %v335 = vmul.f32 %v315, %v331
  %v336 = vpack.c.bf16 %v333, %v332
  %v337 = vpack.c.bf16 %v335, %v334
  %338 = vrot.lane.b32.xlu0 %v214, 64
  %v339 = vpop.permute.xlu0 %338
  %340 = vrot.lane.b32.xlu0 %v215, 64
  %v341 = vpop.permute.xlu0 %340
  %v345 = vsel %vm66, %v336, 0
  %v348 = vsel %vm66, %v337, 0
  %350 = vmatprep.subr.bf16.mxu0 0
  %351 = vmatpush1.bf16.msra.mxu0 %v339
  %352 = vmatprep.subr.bf16.mxu0 0
  %353 = vmatpush1.bf16.msra.mxu0 %v341
  %354 = vmatprep.subr.bf16.mxu0 0
  %355 = vmatpush1.bf16.msra.mxu0 0
  %356 = vmatprep.subr.bf16.mxu0 0
  %357 = vmatpush1.bf16.msra.mxu0 0
  %358 = vmatprep.subr.bf16.mxu0 0
  %359 = vmatpush1.bf16.msra.mxu0 0
  %360 = vmatprep.subr.bf16.mxu0 0
  %361 = vmatpush1.bf16.msra.mxu0 0
  %362 = vmatprep.subr.bf16.mxu0 0
  %363 = vmatpush1.bf16.msra.mxu0 0
  %364 = vmatprep.subr.bf16.mxu0 0
  %365 = vmatpush1.bf16.msra.mxu0 0
  %366 = vmatprep.subr.bf16.mxu0 0
  %367 = vmatpush1.bf16.msra.mxu0 0
  %368 = vmatprep.subr.bf16.mxu0 0
  %369 = vmatpush1.bf16.msra.mxu0 0
  %370 = vmatprep.subr.bf16.mxu0 0
  %371 = vmatpush1.bf16.msra.mxu0 0
  %372 = vmatprep.subr.bf16.mxu0 0
  %373 = vmatpush1.bf16.msra.mxu0 0
  %374 = vmatprep.subr.bf16.mxu0 0
  %375 = vmatpush1.bf16.msra.mxu0 0
  %376 = vmatprep.subr.bf16.mxu0 0
  %377 = vmatpush1.bf16.msra.mxu0 0
  %378 = vmatprep.subr.bf16.mxu0 0
  %379 = vmatpush1.bf16.msra.mxu0 0
  %380 = vmatprep.subr.bf16.mxu0 0
  %381 = vmatpush1.bf16.msra.mxu0 0
  %382 = vmatprep.mubr.bf16.mxu0 0
  %383 = vmatmul.mubr.bf16.gmra.mrb[0].mxu0 %v345
  %v384 = vpop.f32.mrb[0].mxu0
  %v385 = vadd.f32 0.0, %v384
  %v386 = vpop.f32.mrb[0].mxu0
  %v387 = vpop.f32.mrb[0].mxu0
  %v388 = vadd.f32 0.0, %v387
  %v389 = vpop.f32.mrb[0].mxu0
  %390 = vmatprep.mubr.bf16.mxu0 0
  %391 = vmatmul.mubr.bf16.gmra.mrb[0].mxu0 %v348
  %v392 = vpop.f32.mrb[0].mxu0
  %v393 = vadd.f32 0.0, %v392
  %v394 = vpop.f32.mrb[0].mxu0
  %v395 = vpop.f32.mrb[0].mxu0
  %v396 = vadd.f32 0.0, %v395
  %v397 = vpop.f32.mrb[0].mxu0
  %398 = vdwg.mxu0
  %399 = vrot.lane.b32.xlu0 %v214, 120
  %v400 = vpop.permute.xlu0 %399
  %401 = vrot.lane.b32.xlu0 %v215, 120
  %v402 = vpop.permute.xlu0 %401
  %403 = vrot.lane.b32.xlu0 %v214, 88
  %v404 = vpop.permute.xlu0 %403
  %405 = vrot.lane.b32.xlu0 %v215, 88
  %v406 = vpop.permute.xlu0 %405
  %v408 = vsel %vm222, %v400, 0
  %v411 = vsel %vm222, %v402, 0
  %v414 = vsel %vm222, %v404, 0
  %v417 = vsel %vm222, %v406, 0
  %419 = vmatprep.subr.bf16.mxu0 0
  %420 = vmatpush1.bf16.xpose.msra.mxu0 %v414
  %421 = vmatprep.subr.bf16.mxu0 0
  %422 = vmatpush1.bf16.xpose.msra.mxu0 %v417
  %423 = vmatprep.subr.bf16.mxu0 0
  %424 = vmatpush1.bf16.xpose.msra.mxu0 0
  %425 = vmatprep.subr.bf16.mxu0 0
  %426 = vmatpush1.bf16.xpose.msra.mxu0 0
  %427 = vmatprep.subr.bf16.mxu0 0
  %428 = vmatpush1.bf16.xpose.msra.mxu0 0
  %429 = vmatprep.subr.bf16.mxu0 0
  %430 = vmatpush1.bf16.xpose.msra.mxu0 0
  %431 = vmatprep.subr.bf16.mxu0 0
  %432 = vmatpush1.bf16.xpose.msra.mxu0 0
  %433 = vmatprep.subr.bf16.mxu0 0
  %434 = vmatpush1.bf16.xpose.msra.mxu0 0
  %435 = vmatprep.subr.bf16.mxu0 0
  %436 = vmatpush1.bf16.xpose.msra.mxu0 0
  %437 = vmatprep.subr.bf16.mxu0 0
  %438 = vmatpush1.bf16.xpose.msra.mxu0 0
  %439 = vmatprep.subr.bf16.mxu0 0
  %440 = vmatpush1.bf16.xpose.msra.mxu0 0
  %441 = vmatprep.subr.bf16.mxu0 0
  %442 = vmatpush1.bf16.xpose.msra.mxu0 0
  %443 = vmatprep.subr.bf16.mxu0 0
  %444 = vmatpush1.bf16.xpose.msra.mxu0 0
  %445 = vmatprep.subr.bf16.mxu0 0
  %446 = vmatpush1.bf16.xpose.msra.mxu0 0
  %447 = vmatprep.subr.bf16.mxu0 0
  %448 = vmatpush1.bf16.xpose.msra.mxu0 0
  %449 = vmatprep.subr.bf16.mxu0 0
  %450 = vmatpush1.bf16.xpose.msra.mxu0 0
  %451 = vmatprep.mubr.bf16.mxu0 0
  %452 = vmatmul.mubr.bf16.gmra.mrb[0].mxu0 %v408
  %v453 = vpop.f32.mrb[0].mxu0
  %v454 = vadd.f32 0.0, %v453
  %v455 = vpop.f32.mrb[0].mxu0
  %v456 = vpop.f32.mrb[0].mxu0
  %v457 = vadd.f32 0.0, %v456
  %v458 = vpop.f32.mrb[0].mxu0
  %459 = vmatprep.mubr.bf16.mxu0 0
  %460 = vmatmul.mubr.bf16.gmra.mrb[0].mxu0 %v411
  %v461 = vpop.f32.mrb[0].mxu0
  %v462 = vadd.f32 0.0, %v461
  %v463 = vpop.f32.mrb[0].mxu0
  %v464 = vpop.f32.mrb[0].mxu0
  %v465 = vadd.f32 0.0, %v464
  %v466 = vpop.f32.mrb[0].mxu0
  %467 = vdwg.mxu0
  %v468 = vmul.f32 %v454, 0.35355338
  %v469 = vmul.f32 %v457, 0.35355338
  %v470 = vmul.f32 %v462, 0.35355338
  %v471 = vmul.f32 %v465, 0.35355338
  %v472 = vadd.f32 %v468, %v140
  %v473 = vadd.f32 %v469, %v141
  %v474 = vadd.f32 %v470, %v142
  %v475 = vadd.f32 %v471, %v143
  %v476 = vsel %vm66, %v472, -inf
  %477 = vmax.xlane.f32.xlu0 %v476
  %v478 = vpop.xlane.xlu0 %477
  %v479 = vsel %vm66, %v473, -inf
  %480 = vmax.xlane.f32.xlu0 %v479
  %v481 = vpop.xlane.xlu0 %480
  %v482 = vsel %vm66, %v474, -inf
  %483 = vmax.xlane.f32.xlu0 %v482
  %v484 = vpop.xlane.xlu0 %483
  %v485 = vsel %vm66, %v475, -inf
  %486 = vmax.xlane.f32.xlu0 %v485
  %v487 = vpop.xlane.xlu0 %486
  %v488 = vsub.f32 %v472, %v478
  %v489 = vsub.f32 %v473, %v481
  %v490 = vsub.f32 %v474, %v484
  %v491 = vsub.f32 %v475, %v487
  %v492 = vmul.f32 %v488, 1.442695
  %v493 = vpow.pop %v492
  %v494 = vmul.f32 %v489, 1.442695
  %v495 = vpow.pop %v494
  %v496 = vmul.f32 %v490, 1.442695
  %v497 = vpow.pop %v496
  %v498 = vmul.f32 %v491, 1.442695
  %v499 = vpow.pop %v498
  %v500 = vsel %vm66, %v493, 0.0
  %501 = vadd.xlane.f32.xlu0 %v500
  %v502 = vpop.xlane.xlu0 %501
  %v503 = vsel %vm66, %v495, 0.0
  %504 = vadd.xlane.f32.xlu0 %v503
  %v505 = vpop.xlane.xlu0 %504
  %v506 = vsel %vm66, %v497, 0.0
  %507 = vadd.xlane.f32.xlu0 %v506
  %v508 = vpop.xlane.xlu0 %507
  %v509 = vsel %vm66, %v499, 0.0
  %510 = vadd.xlane.f32.xlu0 %v509
  %v511 = vpop.xlane.xlu0 %510
  %v512 = vrcp.pop %v502
  %v513 = vrcp.pop %v505
  %v514 = vrcp.pop %v508
  %v515 = vrcp.pop %v511
  %v516 = vmul.f32 %v493, %v512
  %v517 = vmul.f32 %v495, %v513
  %v518 = vmul.f32 %v497, %v514
  %v519 = vmul.f32 %v499, %v515
  %v520 = vpack.c.bf16 %v517, %v516
  %v521 = vpack.c.bf16 %v519, %v518
  %522 = vrot.lane.b32.xlu0 %v214, 56
  %v523 = vpop.permute.xlu0 %522
  %524 = vrot.lane.b32.xlu0 %v215, 56
  %v525 = vpop.permute.xlu0 %524
  %v529 = vsel %vm66, %v520, 0
  %v532 = vsel %vm66, %v521, 0
  %534 = vmatprep.subr.bf16.mxu0 0
  %535 = vmatpush1.bf16.msra.mxu0 %v523
  %536 = vmatprep.subr.bf16.mxu0 0
  %537 = vmatpush1.bf16.msra.mxu0 %v525
  %538 = vmatprep.subr.bf16.mxu0 0
  %539 = vmatpush1.bf16.msra.mxu0 0
  %540 = vmatprep.subr.bf16.mxu0 0
  %541 = vmatpush1.bf16.msra.mxu0 0
  %542 = vmatprep.subr.bf16.mxu0 0
  %543 = vmatpush1.bf16.msra.mxu0 0
  %544 = vmatprep.subr.bf16.mxu0 0
  %545 = vmatpush1.bf16.msra.mxu0 0
  %546 = vmatprep.subr.bf16.mxu0 0
  %547 = vmatpush1.bf16.msra.mxu0 0
  %548 = vmatprep.subr.bf16.mxu0 0
  %549 = vmatpush1.bf16.msra.mxu0 0
  %550 = vmatprep.subr.bf16.mxu0 0
  %551 = vmatpush1.bf16.msra.mxu0 0
  %552 = vmatprep.subr.bf16.mxu0 0
  %553 = vmatpush1.bf16.msra.mxu0 0
  %554 = vmatprep.subr.bf16.mxu0 0
  %555 = vmatpush1.bf16.msra.mxu0 0
  %556 = vmatprep.subr.bf16.mxu0 0
  %557 = vmatpush1.bf16.msra.mxu0 0
  %558 = vmatprep.subr.bf16.mxu0 0
  %559 = vmatpush1.bf16.msra.mxu0 0
  %560 = vmatprep.subr.bf16.mxu0 0
  %561 = vmatpush1.bf16.msra.mxu0 0
  %562 = vmatprep.subr.bf16.mxu0 0
  %563 = vmatpush1.bf16.msra.mxu0 0
  %564 = vmatprep.subr.bf16.mxu0 0
  %565 = vmatpush1.bf16.msra.mxu0 0
  %566 = vmatprep.mubr.bf16.mxu0 0
  %567 = vmatmul.mubr.bf16.gmra.mrb[0].mxu0 %v529
  %v568 = vpop.f32.mrb[0].mxu0
  %v569 = vadd.f32 0.0, %v568
  %v570 = vpop.f32.mrb[0].mxu0
  %v571 = vpop.f32.mrb[0].mxu0
  %v572 = vadd.f32 0.0, %v571
  %v573 = vpop.f32.mrb[0].mxu0
  %574 = vmatprep.mubr.bf16.mxu0 0
  %575 = vmatmul.mubr.bf16.gmra.mrb[0].mxu0 %v532
  %v576 = vpop.f32.mrb[0].mxu0
  %v577 = vadd.f32 0.0, %v576
  %v578 = vpop.f32.mrb[0].mxu0
  %v579 = vpop.f32.mrb[0].mxu0
  %v580 = vadd.f32 0.0, %v579
  %v581 = vpop.f32.mrb[0].mxu0
  %582 = vdwg.mxu0
  %583 = vrot.lane.b32.xlu0 %v214, 112
  %v584 = vpop.permute.xlu0 %583
  %585 = vrot.lane.b32.xlu0 %v215, 112
  %v586 = vpop.permute.xlu0 %585
  %587 = vrot.lane.b32.xlu0 %v214, 80
  %v588 = vpop.permute.xlu0 %587
  %589 = vrot.lane.b32.xlu0 %v215, 80
  %v590 = vpop.permute.xlu0 %589
  %v592 = vsel %vm222, %v584, 0
  %v595 = vsel %vm222, %v586, 0
  %v598 = vsel %vm222, %v588, 0
  %v601 = vsel %vm222, %v590, 0
  %603 = vmatprep.subr.bf16.mxu0 0
  %604 = vmatpush1.bf16.xpose.msra.mxu0 %v598
  %605 = vmatprep.subr.bf16.mxu0 0
  %606 = vmatpush1.bf16.xpose.msra.mxu0 %v601
  %607 = vmatprep.subr.bf16.mxu0 0
  %608 = vmatpush1.bf16.xpose.msra.mxu0 0
  %609 = vmatprep.subr.bf16.mxu0 0
  %610 = vmatpush1.bf16.xpose.msra.mxu0 0
  %611 = vmatprep.subr.bf16.mxu0 0
  %612 = vmatpush1.bf16.xpose.msra.mxu0 0
  %613 = vmatprep.subr.bf16.mxu0 0
  %614 = vmatpush1.bf16.xpose.msra.mxu0 0
  %615 = vmatprep.subr.bf16.mxu0 0
  %616 = vmatpush1.bf16.xpose.msra.mxu0 0
  %617 = vmatprep.subr.bf16.mxu0 0
  %618 = vmatpush1.bf16.xpose.msra.mxu0 0
  %619 = vmatprep.subr.bf16.mxu0 0
  %620 = vmatpush1.bf16.xpose.msra.mxu0 0
  %621 = vmatprep.subr.bf16.mxu0 0
  %622 = vmatpush1.bf16.xpose.msra.mxu0 0
  %623 = vmatprep.subr.bf16.mxu0 0
  %624 = vmatpush1.bf16.xpose.msra.mxu0 0
  %625 = vmatprep.subr.bf16.mxu0 0
  %626 = vmatpush1.bf16.xpose.msra.mxu0 0
  %627 = vmatprep.subr.bf16.mxu0 0
  %628 = vmatpush1.bf16.xpose.msra.mxu0 0
  %629 = vmatprep.subr.bf16.mxu0 0
  %630 = vmatpush1.bf16.xpose.msra.mxu0 0
  %631 = vmatprep.subr.bf16.mxu0 0
  %632 = vmatpush1.bf16.xpose.msra.mxu0 0
  %633 = vmatprep.subr.bf16.mxu0 0
  %634 = vmatpush1.bf16.xpose.msra.mxu0 0
  %635 = vmatprep.mubr.bf16.mxu0 0
  %636 = vmatmul.mubr.bf16.gmra.mrb[0].mxu0 %v592
  %v637 = vpop.f32.mrb[0].mxu0
  %v638 = vadd.f32 0.0, %v637
  %v639 = vpop.f32.mrb[0].mxu0
  %v640 = vpop.f32.mrb[0].mxu0
  %v641 = vadd.f32 0.0, %v640
  %v642 = vpop.f32.mrb[0].mxu0
  %643 = vmatprep.mubr.bf16.mxu0 0
  %644 = vmatmul.mubr.bf16.gmra.mrb[0].mxu0 %v595
  %v645 = vpop.f32.mrb[0].mxu0
  %v646 = vadd.f32 0.0, %v645
  %v647 = vpop.f32.mrb[0].mxu0
  %v648 = vpop.f32.mrb[0].mxu0
  %v649 = vadd.f32 0.0, %v648
  %v650 = vpop.f32.mrb[0].mxu0
  %651 = vdwg.mxu0
  %v652 = vmul.f32 %v638, 0.35355338
  %v653 = vmul.f32 %v641, 0.35355338
  %v654 = vmul.f32 %v646, 0.35355338
  %v655 = vmul.f32 %v649, 0.35355338
  %v656 = vadd.f32 %v652, %v140
  %v657 = vadd.f32 %v653, %v141
  %v658 = vadd.f32 %v654, %v142
  %v659 = vadd.f32 %v655, %v143
  %v660 = vsel %vm66, %v656, -inf
  %661 = vmax.xlane.f32.xlu0 %v660
  %v662 = vpop.xlane.xlu0 %661
  %v663 = vsel %vm66, %v657, -inf
  %664 = vmax.xlane.f32.xlu0 %v663
  %v665 = vpop.xlane.xlu0 %664
  %v666 = vsel %vm66, %v658, -inf
  %667 = vmax.xlane.f32.xlu0 %v666
  %v668 = vpop.xlane.xlu0 %667
  %v669 = vsel %vm66, %v659, -inf
  %670 = vmax.xlane.f32.xlu0 %v669
  %v671 = vpop.xlane.xlu0 %670
  %v672 = vsub.f32 %v656, %v662
  %v673 = vsub.f32 %v657, %v665
  %v674 = vsub.f32 %v658, %v668
  %v675 = vsub.f32 %v659, %v671
  %v676 = vmul.f32 %v672, 1.442695
  %v677 = vpow.pop %v676
  %v678 = vmul.f32 %v673, 1.442695
  %v679 = vpow.pop %v678
  %v680 = vmul.f32 %v674, 1.442695
  %v681 = vpow.pop %v680
  %v682 = vmul.f32 %v675, 1.442695
  %v683 = vpow.pop %v682
  %v684 = vsel %vm66, %v677, 0.0
  %685 = vadd.xlane.f32.xlu0 %v684
  %v686 = vpop.xlane.xlu0 %685
  %v687 = vsel %vm66, %v679, 0.0
  %688 = vadd.xlane.f32.xlu0 %v687
  %v689 = vpop.xlane.xlu0 %688
  %v690 = vsel %vm66, %v681, 0.0
  %691 = vadd.xlane.f32.xlu0 %v690
  %v692 = vpop.xlane.xlu0 %691
  %v693 = vsel %vm66, %v683, 0.0
  %694 = vadd.xlane.f32.xlu0 %v693
  %v695 = vpop.xlane.xlu0 %694
  %v696 = vrcp.pop %v686
  %v697 = vrcp.pop %v689
  %v698 = vrcp.pop %v692
  %v699 = vrcp.pop %v695
  %v700 = vmul.f32 %v677, %v696
  %v701 = vmul.f32 %v679, %v697
  %v702 = vmul.f32 %v681, %v698
  %v703 = vmul.f32 %v683, %v699
  %v704 = vpack.c.bf16 %v701, %v700
  %v705 = vpack.c.bf16 %v703, %v702
  %706 = vrot.lane.b32.xlu0 %v214, 48
  %v707 = vpop.permute.xlu0 %706
  %708 = vrot.lane.b32.xlu0 %v215, 48
  %v709 = vpop.permute.xlu0 %708
  %v713 = vsel %vm66, %v704, 0
  %v716 = vsel %vm66, %v705, 0
  %718 = vmatprep.subr.bf16.mxu0 0
  %719 = vmatpush1.bf16.msra.mxu0 %v707
  %720 = vmatprep.subr.bf16.mxu0 0
  %721 = vmatpush1.bf16.msra.mxu0 %v709
  %722 = vmatprep.subr.bf16.mxu0 0
  %723 = vmatpush1.bf16.msra.mxu0 0
  %724 = vmatprep.subr.bf16.mxu0 0
  %725 = vmatpush1.bf16.msra.mxu0 0
  %726 = vmatprep.subr.bf16.mxu0 0
  %727 = vmatpush1.bf16.msra.mxu0 0
  %728 = vmatprep.subr.bf16.mxu0 0
  %729 = vmatpush1.bf16.msra.mxu0 0
  %730 = vmatprep.subr.bf16.mxu0 0
  %731 = vmatpush1.bf16.msra.mxu0 0
  %732 = vmatprep.subr.bf16.mxu0 0
  %733 = vmatpush1.bf16.msra.mxu0 0
  %734 = vmatprep.subr.bf16.mxu0 0
  %735 = vmatpush1.bf16.msra.mxu0 0
  %736 = vmatprep.subr.bf16.mxu0 0
  %737 = vmatpush1.bf16.msra.mxu0 0
  %738 = vmatprep.subr.bf16.mxu0 0
  %739 = vmatpush1.bf16.msra.mxu0 0
  %740 = vmatprep.subr.bf16.mxu0 0
  %741 = vmatpush1.bf16.msra.mxu0 0
  %742 = vmatprep.subr.bf16.mxu0 0
  %743 = vmatpush1.bf16.msra.mxu0 0
  %744 = vmatprep.subr.bf16.mxu0 0
  %745 = vmatpush1.bf16.msra.mxu0 0
  %746 = vmatprep.subr.bf16.mxu0 0
  %747 = vmatpush1.bf16.msra.mxu0 0
  %748 = vmatprep.subr.bf16.mxu0 0
  %749 = vmatpush1.bf16.msra.mxu0 0
  %750 = vmatprep.mubr.bf16.mxu0 0
  %751 = vmatmul.mubr.bf16.gmra.mrb[0].mxu0 %v713
  %v752 = vpop.f32.mrb[0].mxu0
  %v753 = vadd.f32 0.0, %v752
  %v754 = vpop.f32.mrb[0].mxu0
  %v755 = vpop.f32.mrb[0].mxu0
  %v756 = vadd.f32 0.0, %v755
  %v757 = vpop.f32.mrb[0].mxu0
  %758 = vmatprep.mubr.bf16.mxu0 0
  %759 = vmatmul.mubr.bf16.gmra.mrb[0].mxu0 %v716
  %v760 = vpop.f32.mrb[0].mxu0
  %v761 = vadd.f32 0.0, %v760
  %v762 = vpop.f32.mrb[0].mxu0
  %v763 = vpop.f32.mrb[0].mxu0
  %v764 = vadd.f32 0.0, %v763
  %v765 = vpop.f32.mrb[0].mxu0
  %766 = vdwg.mxu0
  %767 = vrot.lane.b32.xlu0 %v214, 104
  %v768 = vpop.permute.xlu0 %767
  %769 = vrot.lane.b32.xlu0 %v215, 104
  %v770 = vpop.permute.xlu0 %769
  %771 = vrot.lane.b32.xlu0 %v214, 72
  %v772 = vpop.permute.xlu0 %771
  %773 = vrot.lane.b32.xlu0 %v215, 72
  %v774 = vpop.permute.xlu0 %773
  %v776 = vsel %vm222, %v768, 0
  %v779 = vsel %vm222, %v770, 0
  %v782 = vsel %vm222, %v772, 0
  %v785 = vsel %vm222, %v774, 0
  %787 = vmatprep.subr.bf16.mxu0 0
  %788 = vmatpush1.bf16.xpose.msra.mxu0 %v782
  %789 = vmatprep.subr.bf16.mxu0 0
  %790 = vmatpush1.bf16.xpose.msra.mxu0 %v785
  %791 = vmatprep.subr.bf16.mxu0 0
  %792 = vmatpush1.bf16.xpose.msra.mxu0 0
  %793 = vmatprep.subr.bf16.mxu0 0
  %794 = vmatpush1.bf16.xpose.msra.mxu0 0
  %795 = vmatprep.subr.bf16.mxu0 0
  %796 = vmatpush1.bf16.xpose.msra.mxu0 0
  %797 = vmatprep.subr.bf16.mxu0 0
  %798 = vmatpush1.bf16.xpose.msra.mxu0 0
  %799 = vmatprep.subr.bf16.mxu0 0
  %800 = vmatpush1.bf16.xpose.msra.mxu0 0
  %801 = vmatprep.subr.bf16.mxu0 0
  %802 = vmatpush1.bf16.xpose.msra.mxu0 0
  %803 = vmatprep.subr.bf16.mxu0 0
  %804 = vmatpush1.bf16.xpose.msra.mxu0 0
  %805 = vmatprep.subr.bf16.mxu0 0
  %806 = vmatpush1.bf16.xpose.msra.mxu0 0
  %807 = vmatprep.subr.bf16.mxu0 0
  %808 = vmatpush1.bf16.xpose.msra.mxu0 0
  %809 = vmatprep.subr.bf16.mxu0 0
  %810 = vmatpush1.bf16.xpose.msra.mxu0 0
  %811 = vmatprep.subr.bf16.mxu0 0
  %812 = vmatpush1.bf16.xpose.msra.mxu0 0
  %813 = vmatprep.subr.bf16.mxu0 0
  %814 = vmatpush1.bf16.xpose.msra.mxu0 0
  %815 = vmatprep.subr.bf16.mxu0 0
  %816 = vmatpush1.bf16.xpose.msra.mxu0 0
  %817 = vmatprep.subr.bf16.mxu0 0
  %818 = vmatpush1.bf16.xpose.msra.mxu0 0
  %819 = vmatprep.mubr.bf16.mxu0 0
  %820 = vmatmul.mubr.bf16.gmra.mrb[0].mxu0 %v776
  %v821 = vpop.f32.mrb[0].mxu0
  %v822 = vadd.f32 0.0, %v821
  %v823 = vpop.f32.mrb[0].mxu0
  %v824 = vpop.f32.mrb[0].mxu0
  %v825 = vadd.f32 0.0, %v824
  %v826 = vpop.f32.mrb[0].mxu0
  %827 = vmatprep.mubr.bf16.mxu0 0
  %828 = vmatmul.mubr.bf16.gmra.mrb[0].mxu0 %v779
  %v829 = vpop.f32.mrb[0].mxu0
  %v830 = vadd.f32 0.0, %v829
  %v831 = vpop.f32.mrb[0].mxu0
  %v832 = vpop.f32.mrb[0].mxu0
  %v833 = vadd.f32 0.0, %v832
  %v834 = vpop.f32.mrb[0].mxu0
  %835 = vdwg.mxu0
  %v836 = vmul.f32 %v822, 0.35355338
  %v837 = vmul.f32 %v825, 0.35355338
  %v838 = vmul.f32 %v830, 0.35355338
  %v839 = vmul.f32 %v833, 0.35355338
  %v840 = vadd.f32 %v836, %v140
  %v841 = vadd.f32 %v837, %v141
  %v842 = vadd.f32 %v838, %v142
  %v843 = vadd.f32 %v839, %v143
  %v844 = vsel %vm66, %v840, -inf
  %845 = vmax.xlane.f32.xlu0 %v844
  %v846 = vpop.xlane.xlu0 %845
  %v847 = vsel %vm66, %v841, -inf
  %848 = vmax.xlane.f32.xlu0 %v847
  %v849 = vpop.xlane.xlu0 %848
  %v850 = vsel %vm66, %v842, -inf
  %851 = vmax.xlane.f32.xlu0 %v850
  %v852 = vpop.xlane.xlu0 %851
  %v853 = vsel %vm66, %v843, -inf
  %854 = vmax.xlane.f32.xlu0 %v853
  %v855 = vpop.xlane.xlu0 %854
  %v856 = vsub.f32 %v840, %v846
  %v857 = vsub.f32 %v841, %v849
  %v858 = vsub.f32 %v842, %v852
  %v859 = vsub.f32 %v843, %v855
  %v860 = vmul.f32 %v856, 1.442695
  %v861 = vpow.pop %v860
  %v862 = vmul.f32 %v857, 1.442695
  %v863 = vpow.pop %v862
  %v864 = vmul.f32 %v858, 1.442695
  %v865 = vpow.pop %v864
  %v866 = vmul.f32 %v859, 1.442695
  %v867 = vpow.pop %v866
  %v868 = vsel %vm66, %v861, 0.0
  %869 = vadd.xlane.f32.xlu0 %v868
  %v870 = vpop.xlane.xlu0 %869
  %v871 = vsel %vm66, %v863, 0.0
  %872 = vadd.xlane.f32.xlu0 %v871
  %v873 = vpop.xlane.xlu0 %872
  %v874 = vsel %vm66, %v865, 0.0
  %875 = vadd.xlane.f32.xlu0 %v874
  %v876 = vpop.xlane.xlu0 %875
  %v877 = vsel %vm66, %v867, 0.0
  %878 = vadd.xlane.f32.xlu0 %v877
  %v879 = vpop.xlane.xlu0 %878
  %v880 = vrcp.pop %v870
  %v881 = vrcp.pop %v873
  %v882 = vrcp.pop %v876
  %v883 = vrcp.pop %v879
  %v884 = vmul.f32 %v861, %v880
  %v885 = vmul.f32 %v863, %v881
  %v886 = vmul.f32 %v865, %v882
  %v887 = vmul.f32 %v867, %v883
  %v888 = vpack.c.bf16 %v885, %v884
  %v889 = vpack.c.bf16 %v887, %v886
  %890 = vrot.lane.b32.xlu0 %v214, 40
  %v891 = vpop.permute.xlu0 %890
  %892 = vrot.lane.b32.xlu0 %v215, 40
  %v893 = vpop.permute.xlu0 %892
  %v897 = vsel %vm66, %v888, 0
  %v900 = vsel %vm66, %v889, 0
  %902 = vmatprep.subr.bf16.mxu0 0
  %903 = vmatpush1.bf16.msra.mxu0 %v891
  %904 = vmatprep.subr.bf16.mxu0 0
  %905 = vmatpush1.bf16.msra.mxu0 %v893
  %906 = vmatprep.subr.bf16.mxu0 0
  %907 = vmatpush1.bf16.msra.mxu0 0
  %908 = vmatprep.subr.bf16.mxu0 0
  %909 = vmatpush1.bf16.msra.mxu0 0
  %910 = vmatprep.subr.bf16.mxu0 0
  %911 = vmatpush1.bf16.msra.mxu0 0
  %912 = vmatprep.subr.bf16.mxu0 0
  %913 = vmatpush1.bf16.msra.mxu0 0
  %914 = vmatprep.subr.bf16.mxu0 0
  %915 = vmatpush1.bf16.msra.mxu0 0
  %916 = vmatprep.subr.bf16.mxu0 0
  %917 = vmatpush1.bf16.msra.mxu0 0
  %918 = vmatprep.subr.bf16.mxu0 0
  %919 = vmatpush1.bf16.msra.mxu0 0
  %920 = vmatprep.subr.bf16.mxu0 0
  %921 = vmatpush1.bf16.msra.mxu0 0
  %922 = vmatprep.subr.bf16.mxu0 0
  %923 = vmatpush1.bf16.msra.mxu0 0
  %924 = vmatprep.subr.bf16.mxu0 0
  %925 = vmatpush1.bf16.msra.mxu0 0
  %926 = vmatprep.subr.bf16.mxu0 0
  %927 = vmatpush1.bf16.msra.mxu0 0
  %928 = vmatprep.subr.bf16.mxu0 0
  %929 = vmatpush1.bf16.msra.mxu0 0
  %930 = vmatprep.subr.bf16.mxu0 0
  %931 = vmatpush1.bf16.msra.mxu0 0
  %932 = vmatprep.subr.bf16.mxu0 0
  %933 = vmatpush1.bf16.msra.mxu0 0
  %934 = vmatprep.mubr.bf16.mxu0 0
  %935 = vmatmul.mubr.bf16.gmra.mrb[0].mxu0 %v897
  %v936 = vpop.f32.mrb[0].mxu0
  %v937 = vadd.f32 0.0, %v936
  %v938 = vpop.f32.mrb[0].mxu0
  %v939 = vpop.f32.mrb[0].mxu0
  %v940 = vadd.f32 0.0, %v939
  %v941 = vpop.f32.mrb[0].mxu0
  %942 = vmatprep.mubr.bf16.mxu0 0
  %943 = vmatmul.mubr.bf16.gmra.mrb[0].mxu0 %v900
  %v944 = vpop.f32.mrb[0].mxu0
  %v945 = vadd.f32 0.0, %v944
  %v946 = vpop.f32.mrb[0].mxu0
  %v947 = vpop.f32.mrb[0].mxu0
  %v948 = vadd.f32 0.0, %v947
  %v949 = vpop.f32.mrb[0].mxu0
  %950 = vdwg.mxu0
  %955 = vrot.lane.b32.xlu0 %v569, 8
  %v956 = vpop.permute.xlu0 %955
  %957 = vrot.lane.b32.xlu0 %v572, 8
  %v958 = vpop.permute.xlu0 %957
  %959 = vrot.lane.b32.xlu0 %v577, 8
  %v960 = vpop.permute.xlu0 %959
  %961 = vrot.lane.b32.xlu0 %v580, 8
  %v962 = vpop.permute.xlu0 %961
  %971 = vrot.lane.b32.xlu0 %v753, 16
  %v972 = vpop.permute.xlu0 %971
  %973 = vrot.lane.b32.xlu0 %v756, 16
  %v974 = vpop.permute.xlu0 %973
  %975 = vrot.lane.b32.xlu0 %v761, 16
  %v976 = vpop.permute.xlu0 %975
  %977 = vrot.lane.b32.xlu0 %v764, 16
  %v978 = vpop.permute.xlu0 %977
  %987 = vrot.lane.b32.xlu0 %v937, 24
  %v988 = vpop.permute.xlu0 %987
  %989 = vrot.lane.b32.xlu0 %v940, 24
  %v990 = vpop.permute.xlu0 %989
  %991 = vrot.lane.b32.xlu0 %v945, 24
  %v992 = vpop.permute.xlu0 %991
  %993 = vrot.lane.b32.xlu0 %v948, 24
  %v994 = vpop.permute.xlu0 %993
  %v999 = vsel %vm222, %v385, %v956
  %v1000 = vsel %vm222, %v388, %v958
  %v1001 = vsel %vm222, %v393, %v960
  %v1002 = vsel %vm222, %v396, %v962
  %vm1003 = vcmask 130048
  %v1004 = vsel %vm1003, %v999, %v972
  %v1005 = vsel %vm1003, %v1000, %v974
  %v1006 = vsel %vm1003, %v1001, %v976
  %v1007 = vsel %vm1003, %v1002, %v978
  %vm1008 = vcmask 195584
  %v1009 = vsel %vm1008, %v1004, %v988
  %v1010 = vsel %vm1008, %v1005, %v990
  %v1011 = vsel %vm1008, %v1006, %v992
  %v1012 = vsel %vm1008, %v1007, %v994
  %v1013 = vld [vmem:[%s6] sm:$0xff]
  %v1014 = vld [vmem:[%s6 + $0x8] sm:$0xff]
  %v1015 = vld [vmem:[%s6 + $0x10] sm:$0xff]
  %v1016 = vld [vmem:[%s6 + $0x18] sm:$0xff]
  %v1017 = vpack.c.bf16 %v1010, %v1009
  %v1018 = vpack.c.bf16 %v1012, %v1011
  %v1019 = vpack.c.bf16 %v1014, %v1013
  %v1020 = vpack.c.bf16 %v1016, %v1015
  %v1021 = vld [vmem:[%s7] sm:$0x1]
  %v1023 = vlaneseq
  %v1024 = vshrl.u32 %v1023, 7
  %v1025 = vsub.s32 0, %v1024
  %v1026 = vrot.slane %v1021, %v1025
  %v1029 = vsel %vm66, %v1017, 0
  %v1032 = vsel %vm66, %v1018, 0
  %1034 = vmatprep.subr.bf16.mxu0 0
  %1035 = vmatpush1.bf16.msra.mxu0 %v1019
  %1036 = vmatprep.subr.bf16.mxu0 0
  %1037 = vmatpush1.bf16.msra.mxu0 %v1020
  %1038 = vmatprep.subr.bf16.mxu0 0
  %1039 = vmatpush1.bf16.msra.mxu0 0
  %1040 = vmatprep.subr.bf16.mxu0 0
  %1041 = vmatpush1.bf16.msra.mxu0 0
  %1042 = vmatprep.subr.bf16.mxu0 0
  %1043 = vmatpush1.bf16.msra.mxu0 0
  %1044 = vmatprep.subr.bf16.mxu0 0
  %1045 = vmatpush1.bf16.msra.mxu0 0
  %1046 = vmatprep.subr.bf16.mxu0 0
  %1047 = vmatpush1.bf16.msra.mxu0 0
  %1048 = vmatprep.subr.bf16.mxu0 0
  %1049 = vmatpush1.bf16.msra.mxu0 0
  %1050 = vmatprep.subr.bf16.mxu0 0
  %1051 = vmatpush1.bf16.msra.mxu0 0
  %1052 = vmatprep.subr.bf16.mxu0 0
  %1053 = vmatpush1.bf16.msra.mxu0 0
  %1054 = vmatprep.subr.bf16.mxu0 0
  %1055 = vmatpush1.bf16.msra.mxu0 0
  %1056 = vmatprep.subr.bf16.mxu0 0
  %1057 = vmatpush1.bf16.msra.mxu0 0
  %1058 = vmatprep.subr.bf16.mxu0 0
  %1059 = vmatpush1.bf16.msra.mxu0 0
  %1060 = vmatprep.subr.bf16.mxu0 0
  %1061 = vmatpush1.bf16.msra.mxu0 0
  %1062 = vmatprep.subr.bf16.mxu0 0
  %1063 = vmatpush1.bf16.msra.mxu0 0
  %1064 = vmatprep.subr.bf16.mxu0 0
  %1065 = vmatpush1.bf16.msra.mxu0 0
  %1066 = vmatprep.mubr.bf16.mxu0 0
  %1067 = vmatmul.mubr.bf16.gmra.mrb[0].mxu0 %v1029
  %v1068 = vpop.f32.mrb[0].mxu0
  %v1069 = vadd.f32 %v1026, %v1068
  %v1070 = vpop.f32.mrb[0].mxu0
  %v1071 = vpop.f32.mrb[0].mxu0
  %v1072 = vadd.f32 %v1026, %v1071
  %v1073 = vpop.f32.mrb[0].mxu0
  %1074 = vmatprep.mubr.bf16.mxu0 0
  %1075 = vmatmul.mubr.bf16.gmra.mrb[0].mxu0 %v1032
  %v1076 = vpop.f32.mrb[0].mxu0
  %v1077 = vadd.f32 %v1026, %v1076
  %v1078 = vpop.f32.mrb[0].mxu0
  %v1079 = vpop.f32.mrb[0].mxu0
  %v1080 = vadd.f32 %v1026, %v1079
  %v1081 = vpop.f32.mrb[0].mxu0
  %1082 = vdwg.mxu0
  %v1083 = vadd.f32 %v1069, %v136
  %v1084 = vadd.f32 %v1072, %v137
  %v1085 = vadd.f32 %v1077, %v138
  %v1086 = vadd.f32 %v1080, %v139
  %v1087 = vld [vmem:[%s8] sm:$0x1]
  %v1088 = vld [vmem:[%s9] sm:$0x1]
  %v1089 = vsel %vm66, %v1083, 0.0
  %1090 = vadd.xlane.f32.xlu0 %v1089
  %v1091 = vpop.xlane.xlu0 %1090
  %v1092 = vsel %vm66, %v1084, 0.0
  %1093 = vadd.xlane.f32.xlu0 %v1092
  %v1094 = vpop.xlane.xlu0 %1093
  %v1095 = vsel %vm66, %v1085, 0.0
  %1096 = vadd.xlane.f32.xlu0 %v1095
  %v1097 = vpop.xlane.xlu0 %1096
  %v1098 = vsel %vm66, %v1086, 0.0
  %1099 = vadd.xlane.f32.xlu0 %v1098
  %v1100 = vpop.xlane.xlu0 %1099
  %v1101 = vmul.f32 %v1091, %v79
  %v1102 = vmul.f32 %v1094, %v79
  %v1103 = vmul.f32 %v1097, %v79
  %v1104 = vmul.f32 %v1100, %v79
  %v1105 = vsub.f32 %v1083, %v1101
  %v1106 = vsub.f32 %v1084, %v1102
  %v1107 = vsub.f32 %v1085, %v1103
  %v1108 = vsub.f32 %v1086, %v1104
  %v1109 = vmul.f32 %v1105, %v1105
  %v1110 = vmul.f32 %v1106, %v1106
  %v1111 = vmul.f32 %v1107, %v1107
  %v1112 = vmul.f32 %v1108, %v1108
  %v1113 = vsel %vm66, %v1109, 0.0
  %1114 = vadd.xlane.f32.xlu0 %v1113
  %v1115 = vpop.xlane.xlu0 %1114
  %v1116 = vsel %vm66, %v1110, 0.0
  %1117 = vadd.xlane.f32.xlu0 %v1116
  %v1118 = vpop.xlane.xlu0 %1117
  %v1119 = vsel %vm66, %v1111, 0.0
  %1120 = vadd.xlane.f32.xlu0 %v1119
  %v1121 = vpop.xlane.xlu0 %1120
  %v1122 = vsel %vm66, %v1112, 0.0
  %1123 = vadd.xlane.f32.xlu0 %v1122
  %v1124 = vpop.xlane.xlu0 %1123
  %v1125 = vmul.f32 %v1115, %v79
  %v1126 = vmul.f32 %v1118, %v79
  %v1127 = vmul.f32 %v1121, %v79
  %v1128 = vmul.f32 %v1124, %v79
  %v1129 = vadd.f32 %v1125, 1e-12
  %v1130 = vadd.f32 %v1126, 1e-12
  %v1131 = vadd.f32 %v1127, 1e-12
  %v1132 = vadd.f32 %v1128, 1e-12
  %v1133 = vrsqrt.pop %v1129
  %v1134 = vrsqrt.pop %v1130
  %v1135 = vrsqrt.pop %v1131
  %v1136 = vrsqrt.pop %v1132
  %v1137 = vmul.f32 %v1105, %v1133
  %v1138 = vmul.f32 %v1106, %v1134
  %v1139 = vmul.f32 %v1107, %v1135
  %v1140 = vmul.f32 %v1108, %v1136
  %v1142 = vlaneseq
  %v1143 = vshrl.u32 %v1142, 7
  %v1144 = vsub.s32 0, %v1143
  %v1145 = vrot.slane %v1087, %v1144
  %v1147 = vmul.f32 %v1137, %v1145
  %v1148 = vmul.f32 %v1138, %v1145
  %v1149 = vmul.f32 %v1139, %v1145
  %v1150 = vmul.f32 %v1140, %v1145
  %v1152 = vlaneseq
  %v1153 = vshrl.u32 %v1152, 7
  %v1154 = vsub.s32 0, %v1153
  %v1155 = vrot.slane %v1088, %v1154
  %v1157 = vadd.f32 %v1147, %v1155
  %v1158 = vadd.f32 %v1148, %v1155
  %v1159 = vadd.f32 %v1149, %v1155
  %v1160 = vadd.f32 %v1150, %v1155
  %v1161 = vld [vmem:[%s10] sm:$0xff]
  %v1162 = vld [vmem:[%s10 + $0x8] sm:$0xff]
  %v1163 = vld [vmem:[%s10 + $0x10] sm:$0xff]
  %v1164 = vld [vmem:[%s10 + $0x18] sm:$0xff]
  %v1165 = vpack.c.bf16 %v1158, %v1157
  %v1166 = vpack.c.bf16 %v1160, %v1159
  %v1167 = vpack.c.bf16 %v1162, %v1161
  %v1168 = vpack.c.bf16 %v1164, %v1163
  %v1169 = vld [vmem:[%s11] sm:$0x1]
  %v1171 = vlaneseq
  %v1172 = vshrl.u32 %v1171, 7
  %v1173 = vsub.s32 0, %v1172
  %v1174 = vrot.slane %v1169, %v1173
  %v1177 = vsel %vm66, %v1165, 0
  %v1180 = vsel %vm66, %v1166, 0
  %1182 = vmatprep.subr.bf16.mxu0 0
  %1183 = vmatpush1.bf16.msra.mxu0 %v1167
  %1184 = vmatprep.subr.bf16.mxu0 0
  %1185 = vmatpush1.bf16.msra.mxu0 %v1168
  %1186 = vmatprep.subr.bf16.mxu0 0
  %1187 = vmatpush1.bf16.msra.mxu0 0
  %1188 = vmatprep.subr.bf16.mxu0 0
  %1189 = vmatpush1.bf16.msra.mxu0 0
  %1190 = vmatprep.subr.bf16.mxu0 0
  %1191 = vmatpush1.bf16.msra.mxu0 0
  %1192 = vmatprep.subr.bf16.mxu0 0
  %1193 = vmatpush1.bf16.msra.mxu0 0
  %1194 = vmatprep.subr.bf16.mxu0 0
  %1195 = vmatpush1.bf16.msra.mxu0 0
  %1196 = vmatprep.subr.bf16.mxu0 0
  %1197 = vmatpush1.bf16.msra.mxu0 0
  %1198 = vmatprep.subr.bf16.mxu0 0
  %1199 = vmatpush1.bf16.msra.mxu0 0
  %1200 = vmatprep.subr.bf16.mxu0 0
  %1201 = vmatpush1.bf16.msra.mxu0 0
  %1202 = vmatprep.subr.bf16.mxu0 0
  %1203 = vmatpush1.bf16.msra.mxu0 0
  %1204 = vmatprep.subr.bf16.mxu0 0
  %1205 = vmatpush1.bf16.msra.mxu0 0
  %1206 = vmatprep.subr.bf16.mxu0 0
  %1207 = vmatpush1.bf16.msra.mxu0 0
  %1208 = vmatprep.subr.bf16.mxu0 0
  %1209 = vmatpush1.bf16.msra.mxu0 0
  %1210 = vmatprep.subr.bf16.mxu0 0
  %1211 = vmatpush1.bf16.msra.mxu0 0
  %1212 = vmatprep.subr.bf16.mxu0 0
  %1213 = vmatpush1.bf16.msra.mxu0 0
  %1214 = vmatprep.mubr.bf16.mxu0 0
  %1215 = vmatmul.mubr.bf16.gmra.mrb[0].mxu0 %v1177
  %v1216 = vpop.f32.mrb[0].mxu0
  %v1217 = vadd.f32 %v1174, %v1216
  %v1218 = vpop.f32.mrb[0].mxu0
  %v1219 = vpop.f32.mrb[0].mxu0
  %v1220 = vadd.f32 %v1174, %v1219
  %v1221 = vpop.f32.mrb[0].mxu0
  %1222 = vmatprep.mubr.bf16.mxu0 0
  %1223 = vmatmul.mubr.bf16.gmra.mrb[0].mxu0 %v1180
  %v1224 = vpop.f32.mrb[0].mxu0
  %v1225 = vadd.f32 %v1174, %v1224
  %v1226 = vpop.f32.mrb[0].mxu0
  %v1227 = vpop.f32.mrb[0].mxu0
  %v1228 = vadd.f32 %v1174, %v1227
  %v1229 = vpop.f32.mrb[0].mxu0
  %1230 = vdwg.mxu0
  %v1231 = vmul.f32 %v1217, 0.5
  %v1232 = vmul.f32 %v1220, 0.5
  %v1233 = vmul.f32 %v1225, 0.5
  %v1234 = vmul.f32 %v1228, 0.5
  %v1235 = vmul.f32 %v1217, %v1217
  %v1236 = vmul.f32 %v1220, %v1220
  %v1237 = vmul.f32 %v1225, %v1225
  %v1238 = vmul.f32 %v1228, %v1228
  %v1239 = vmul.f32 %v1235, %v1217
  %v1240 = vmul.f32 %v1236, %v1220
  %v1241 = vmul.f32 %v1237, %v1225
  %v1242 = vmul.f32 %v1238, %v1228
  %v1243 = vmul.f32 %v1239, 0.044715
  %v1244 = vmul.f32 %v1240, 0.044715
  %v1245 = vmul.f32 %v1241, 0.044715
  %v1246 = vmul.f32 %v1242, 0.044715
  %v1247 = vadd.f32 %v1217, %v1243
  %v1248 = vadd.f32 %v1220, %v1244
  %v1249 = vadd.f32 %v1225, %v1245
  %v1250 = vadd.f32 %v1228, %v1246
  %v1251 = vmul.f32 %v1247, 0.7978846
  %v1252 = vmul.f32 %v1248, 0.7978846
  %v1253 = vmul.f32 %v1249, 0.7978846
  %v1254 = vmul.f32 %v1250, 0.7978846
  %v1255 = vtanh.pop %v1251
  %v1256 = vtanh.pop %v1252
  %v1257 = vtanh.pop %v1253
  %v1258 = vtanh.pop %v1254
  %v1259 = vadd.f32 %v1255, 1.0
  %v1260 = vadd.f32 %v1256, 1.0
  %v1261 = vadd.f32 %v1257, 1.0
  %v1262 = vadd.f32 %v1258, 1.0
  %v1263 = vmul.f32 %v1231, %v1259
  %v1264 = vmul.f32 %v1232, %v1260
  %v1265 = vmul.f32 %v1233, %v1261
  %v1266 = vmul.f32 %v1234, %v1262
  %v1267 = vld [vmem:[%s12] sm:$0xff]
  %v1268 = vld [vmem:[%s12 + $0x8] sm:$0xff]
  %v1269 = vld [vmem:[%s12 + $0x10] sm:$0xff]
  %v1270 = vld [vmem:[%s12 + $0x18] sm:$0xff]
  %v1271 = vld [vmem:[%s12 + $0x20] sm:$0xff]
  %v1272 = vld [vmem:[%s12 + $0x28] sm:$0xff]
  %v1273 = vld [vmem:[%s12 + $0x30] sm:$0xff]
  %v1274 = vld [vmem:[%s12 + $0x38] sm:$0xff]
  %v1275 = vpack.c.bf16 %v1264, %v1263
  %v1276 = vpack.c.bf16 %v1266, %v1265
  %v1277 = vpack.c.bf16 %v1268, %v1267
  %v1278 = vpack.c.bf16 %v1270, %v1269
  %v1279 = vpack.c.bf16 %v1272, %v1271
  %v1280 = vpack.c.bf16 %v1274, %v1273
  %v1281 = vld [vmem:[%s13] sm:$0x1]
  %v1283 = vlaneseq
  %v1284 = vshrl.u32 %v1283, 7
  %v1285 = vsub.s32 0, %v1284
  %v1286 = vrot.slane %v1281, %v1285
  %vm1288 = vcmask 523264
  %v1290 = vsel %vm1288, %v1275, 0
  %v1293 = vsel %vm1288, %v1276, 0
  %1295 = vmatprep.subr.bf16.mxu0 0
  %1296 = vmatpush1.bf16.msra.mxu0 %v1277
  %1297 = vmatprep.subr.bf16.mxu0 0
  %1298 = vmatpush1.bf16.msra.mxu0 %v1278
  %1299 = vmatprep.subr.bf16.mxu0 0
  %1300 = vmatpush1.bf16.msra.mxu0 %v1279
  %1301 = vmatprep.subr.bf16.mxu0 0
  %1302 = vmatpush1.bf16.msra.mxu0 %v1280
  %1303 = vmatprep.subr.bf16.mxu0 0
  %1304 = vmatpush1.bf16.msra.mxu0 0
  %1305 = vmatprep.subr.bf16.mxu0 0
  %1306 = vmatpush1.bf16.msra.mxu0 0
  %1307 = vmatprep.subr.bf16.mxu0 0
  %1308 = vmatpush1.bf16.msra.mxu0 0
  %1309 = vmatprep.subr.bf16.mxu0 0
  %1310 = vmatpush1.bf16.msra.mxu0 0
  %1311 = vmatprep.subr.bf16.mxu0 0
  %1312 = vmatpush1.bf16.msra.mxu0 0
  %1313 = vmatprep.subr.bf16.mxu0 0
  %1314 = vmatpush1.bf16.msra.mxu0 0
  %1315 = vmatprep.subr.bf16.mxu0 0
  %1316 = vmatpush1.bf16.msra.mxu0 0
  %1317 = vmatprep.subr.bf16.mxu0 0
  %1318 = vmatpush1.bf16.msra.mxu0 0
  %1319 = vmatprep.subr.bf16.mxu0 0
  %1320 = vmatpush1.bf16.msra.mxu0 0
  %1321 = vmatprep.subr.bf16.mxu0 0
  %1322 = vmatpush1.bf16.msra.mxu0 0
  %1323 = vmatprep.subr.bf16.mxu0 0
  %1324 = vmatpush1.bf16.msra.mxu0 0
  %1325 = vmatprep.subr.bf16.mxu0 0
  %1326 = vmatpush1.bf16.msra.mxu0 0
  %1327 = vmatprep.mubr.bf16.mxu0 0
  %1328 = vmatmul.mubr.bf16.gmra.mrb[0].mxu0 %v1290
  %v1329 = vpop.f32.mrb[0].mxu0
  %v1330 = vadd.f32 %v1286, %v1329
  %v1331 = vpop.f32.mrb[0].mxu0
  %v1332 = vpop.f32.mrb[0].mxu0
  %v1333 = vadd.f32 %v1286, %v1332
  %v1334 = vpop.f32.mrb[0].mxu0
  %1335 = vmatprep.mubr.bf16.mxu0 0
  %1336 = vmatmul.mubr.bf16.gmra.mrb[0].mxu0 %v1293
  %v1337 = vpop.f32.mrb[0].mxu0
  %v1338 = vadd.f32 %v1286, %v1337
  %v1339 = vpop.f32.mrb[0].mxu0
  %v1340 = vpop.f32.mrb[0].mxu0
  %v1341 = vadd.f32 %v1286, %v1340
  %v1342 = vpop.f32.mrb[0].mxu0
  %1343 = vdwg.mxu0
  %v1344 = vadd.f32 %v1330, %v1157
  %v1345 = vadd.f32 %v1333, %v1158
  %v1346 = vadd.f32 %v1338, %v1159
  %v1347 = vadd.f32 %v1341, %v1160
  %v1348 = vld [vmem:[%s14] sm:$0x1]
  %v1349 = vld [vmem:[%s15] sm:$0x1]
  %v1350 = vsel %vm66, %v1344, 0.0
  %1351 = vadd.xlane.f32.xlu0 %v1350
  %v1352 = vpop.xlane.xlu0 %1351
  %v1353 = vsel %vm66, %v1345, 0.0
  %1354 = vadd.xlane.f32.xlu0 %v1353
  %v1355 = vpop.xlane.xlu0 %1354
  %v1356 = vsel %vm66, %v1346, 0.0
  %1357 = vadd.xlane.f32.xlu0 %v1356
  %v1358 = vpop.xlane.xlu0 %1357
  %v1359 = vsel %vm66, %v1347, 0.0
  %1360 = vadd.xlane.f32.xlu0 %v1359
  %v1361 = vpop.xlane.xlu0 %1360
  %v1362 = vmul.f32 %v1352, %v79
  %v1363 = vmul.f32 %v1355, %v79
  %v1364 = vmul.f32 %v1358, %v79
  %v1365 = vmul.f32 %v1361, %v79
  %v1366 = vsub.f32 %v1344, %v1362
  %v1367 = vsub.f32 %v1345, %v1363
  %v1368 = vsub.f32 %v1346, %v1364
  %v1369 = vsub.f32 %v1347, %v1365
  %v1370 = vmul.f32 %v1366, %v1366
  %v1371 = vmul.f32 %v1367, %v1367
  %v1372 = vmul.f32 %v1368, %v1368
  %v1373 = vmul.f32 %v1369, %v1369
  %v1374 = vsel %vm66, %v1370, 0.0
  %1375 = vadd.xlane.f32.xlu0 %v1374
  %v1376 = vpop.xlane.xlu0 %1375
  %v1377 = vsel %vm66, %v1371, 0.0
  %1378 = vadd.xlane.f32.xlu0 %v1377
  %v1379 = vpop.xlane.xlu0 %1378
  %v1380 = vsel %vm66, %v1372, 0.0
  %1381 = vadd.xlane.f32.xlu0 %v1380
  %v1382 = vpop.xlane.xlu0 %1381
  %v1383 = vsel %vm66, %v1373, 0.0
  %1384 = vadd.xlane.f32.xlu0 %v1383
  %v1385 = vpop.xlane.xlu0 %1384
  %v1386 = vmul.f32 %v1376, %v79
  %v1387 = vmul.f32 %v1379, %v79
  %v1388 = vmul.f32 %v1382, %v79
  %v1389 = vmul.f32 %v1385, %v79
  %v1390 = vadd.f32 %v1386, 1e-12
  %v1391 = vadd.f32 %v1387, 1e-12
  %v1392 = vadd.f32 %v1388, 1e-12
  %v1393 = vadd.f32 %v1389, 1e-12
  %v1394 = vrsqrt.pop %v1390
  %v1395 = vrsqrt.pop %v1391
  %v1396 = vrsqrt.pop %v1392
  %v1397 = vrsqrt.pop %v1393
  %v1398 = vmul.f32 %v1366, %v1394
  %v1399 = vmul.f32 %v1367, %v1395
  %v1400 = vmul.f32 %v1368, %v1396
  %v1401 = vmul.f32 %v1369, %v1397
  %v1403 = vlaneseq
  %v1404 = vshrl.u32 %v1403, 7
  %v1405 = vsub.s32 0, %v1404
  %v1406 = vrot.slane %v1348, %v1405
  %v1408 = vmul.f32 %v1398, %v1406
  %v1409 = vmul.f32 %v1399, %v1406
  %v1410 = vmul.f32 %v1400, %v1406
  %v1411 = vmul.f32 %v1401, %v1406
  %v1413 = vlaneseq
  %v1414 = vshrl.u32 %v1413, 7
  %v1415 = vsub.s32 0, %v1414
  %v1416 = vrot.slane %v1349, %v1415
  %v1418 = vadd.f32 %v1408, %v1416
  %v1419 = vadd.f32 %v1409, %v1416
  %v1420 = vadd.f32 %v1410, %v1416
  %v1421 = vadd.f32 %v1411, %v1416
  %s1422 = scalar_lea.vmem %s4, 32
  %v1423 = vld [vmem:[%s1422] sm:$0xff]
  %v1424 = vld [vmem:[%s1422 + $0x8] sm:$0xff]
  %v1425 = vld [vmem:[%s1422 + $0x10] sm:$0xff]
  %v1426 = vld [vmem:[%s1422 + $0x18] sm:$0xff]
  %v1427 = vpack.c.bf16 %v1419, %v1418
  %v1428 = vpack.c.bf16 %v1421, %v1420
  %v1429 = vpack.c.bf16 %v1424, %v1423
  %v1430 = vpack.c.bf16 %v1426, %v1425
  %s1431 = scalar_lea.vmem %s5, 1
  %v1432 = vld [vmem:[%s1431] sm:$0x1]
  %v1434 = vlaneseq
  %v1435 = vshrl.u32 %v1434, 7
  %v1436 = vsub.s32 0, %v1435
  %v1437 = vrot.slane %v1432, %v1436
  %v1440 = vsel %vm66, %v1427, 0
  %v1443 = vsel %vm66, %v1428, 0
  %1445 = vmatprep.subr.bf16.mxu0 0
  %1446 = vmatpush1.bf16.msra.mxu0 %v1429
  %1447 = vmatprep.subr.bf16.mxu0 0
  %1448 = vmatpush1.bf16.msra.mxu0 %v1430
  %1449 = vmatprep.subr.bf16.mxu0 0
  %1450 = vmatpush1.bf16.msra.mxu0 0
  %1451 = vmatprep.subr.bf16.mxu0 0
  %1452 = vmatpush1.bf16.msra.mxu0 0
  %1453 = vmatprep.subr.bf16.mxu0 0
  %1454 = vmatpush1.bf16.msra.mxu0 0
  %1455 = vmatprep.subr.bf16.mxu0 0
  %1456 = vmatpush1.bf16.msra.mxu0 0
  %1457 = vmatprep.subr.bf16.mxu0 0
  %1458 = vmatpush1.bf16.msra.mxu0 0
  %1459 = vmatprep.subr.bf16.mxu0 0
  %1460 = vmatpush1.bf16.msra.mxu0 0
  %1461 = vmatprep.subr.bf16.mxu0 0
  %1462 = vmatpush1.bf16.msra.mxu0 0
  %1463 = vmatprep.subr.bf16.mxu0 0
  %1464 = vmatpush1.bf16.msra.mxu0 0
  %1465 = vmatprep.subr.bf16.mxu0 0
  %1466 = vmatpush1.bf16.msra.mxu0 0
  %1467 = vmatprep.subr.bf16.mxu0 0
  %1468 = vmatpush1.bf16.msra.mxu0 0
  %1469 = vmatprep.subr.bf16.mxu0 0
  %1470 = vmatpush1.bf16.msra.mxu0 0
  %1471 = vmatprep.subr.bf16.mxu0 0
  %1472 = vmatpush1.bf16.msra.mxu0 0
  %1473 = vmatprep.subr.bf16.mxu0 0
  %1474 = vmatpush1.bf16.msra.mxu0 0
  %1475 = vmatprep.subr.bf16.mxu0 0
  %1476 = vmatpush1.bf16.msra.mxu0 0
  %1477 = vmatprep.mubr.bf16.mxu0 0
  %1478 = vmatmul.mubr.bf16.gmra.mrb[0].mxu0 %v1440
  %v1479 = vpop.f32.mrb[0].mxu0
  %v1480 = vadd.f32 %v1437, %v1479
  %v1481 = vpop.f32.mrb[0].mxu0
  %v1482 = vpop.f32.mrb[0].mxu0
  %v1483 = vadd.f32 %v1437, %v1482
  %v1484 = vpop.f32.mrb[0].mxu0
  %1485 = vmatprep.mubr.bf16.mxu0 0
  %1486 = vmatmul.mubr.bf16.gmra.mrb[0].mxu0 %v1443
  %v1487 = vpop.f32.mrb[0].mxu0
  %v1488 = vadd.f32 %v1437, %v1487
  %v1489 = vpop.f32.mrb[0].mxu0
  %v1490 = vpop.f32.mrb[0].mxu0
  %v1491 = vadd.f32 %v1437, %v1490
  %v1492 = vpop.f32.mrb[0].mxu0
  %1493 = vdwg.mxu0
  %v1494 = vpack.c.bf16 %v1483, %v1480
  %v1495 = vpack.c.bf16 %v1491, %v1488
  %1498 = vrot.lane.b32.xlu0 %v1494, 96
  %v1499 = vpop.permute.xlu0 %1498
  %1500 = vrot.lane.b32.xlu0 %v1495, 96
  %v1501 = vpop.permute.xlu0 %1500
  %v1503 = vsel %vm222, %v1494, 0
  %v1506 = vsel %vm222, %v1495, 0
  %v1509 = vsel %vm222, %v1499, 0
  %v1512 = vsel %vm222, %v1501, 0
  %1514 = vmatprep.subr.bf16.mxu0 0
  %1515 = vmatpush1.bf16.xpose.msra.mxu0 %v1509
  %1516 = vmatprep.subr.bf16.mxu0 0
  %1517 = vmatpush1.bf16.xpose.msra.mxu0 %v1512
  %1518 = vmatprep.subr.bf16.mxu0 0
  %1519 = vmatpush1.bf16.xpose.msra.mxu0 0
  %1520 = vmatprep.subr.bf16.mxu0 0
  %1521 = vmatpush1.bf16.xpose.msra.mxu0 0
  %1522 = vmatprep.subr.bf16.mxu0 0
  %1523 = vmatpush1.bf16.xpose.msra.mxu0 0
  %1524 = vmatprep.subr.bf16.mxu0 0
  %1525 = vmatpush1.bf16.xpose.msra.mxu0 0
  %1526 = vmatprep.subr.bf16.mxu0 0
  %1527 = vmatpush1.bf16.xpose.msra.mxu0 0
  %1528 = vmatprep.subr.bf16.mxu0 0
  %1529 = vmatpush1.bf16.xpose.msra.mxu0 0
  %1530 = vmatprep.subr.bf16.mxu0 0
  %1531 = vmatpush1.bf16.xpose.msra.mxu0 0
  %1532 = vmatprep.subr.bf16.mxu0 0
  %1533 = vmatpush1.bf16.xpose.msra.mxu0 0
  %1534 = vmatprep.subr.bf16.mxu0 0
  %1535 = vmatpush1.bf16.xpose.msra.mxu0 0
  %1536 = vmatprep.subr.bf16.mxu0 0
  %1537 = vmatpush1.bf16.xpose.msra.mxu0 0
  %1538 = vmatprep.subr.bf16.mxu0 0
  %1539 = vmatpush1.bf16.xpose.msra.mxu0 0
  %1540 = vmatprep.subr.bf16.mxu0 0
  %1541 = vmatpush1.bf16.xpose.msra.mxu0 0
  %1542 = vmatprep.subr.bf16.mxu0 0
  %1543 = vmatpush1.bf16.xpose.msra.mxu0 0
  %1544 = vmatprep.subr.bf16.mxu0 0
  %1545 = vmatpush1.bf16.xpose.msra.mxu0 0
  %1546 = vmatprep.mubr.bf16.mxu0 0
  %1547 = vmatmul.mubr.bf16.gmra.mrb[0].mxu0 %v1503
  %v1548 = vpop.f32.mrb[0].mxu0
  %v1549 = vadd.f32 0.0, %v1548
  %v1550 = vpop.f32.mrb[0].mxu0
  %v1551 = vpop.f32.mrb[0].mxu0
  %v1552 = vadd.f32 0.0, %v1551
  %v1553 = vpop.f32.mrb[0].mxu0
  %1554 = vmatprep.mubr.bf16.mxu0 0
  %1555 = vmatmul.mubr.bf16.gmra.mrb[0].mxu0 %v1506
  %v1556 = vpop.f32.mrb[0].mxu0
  %v1557 = vadd.f32 0.0, %v1556
  %v1558 = vpop.f32.mrb[0].mxu0
  %v1559 = vpop.f32.mrb[0].mxu0
  %v1560 = vadd.f32 0.0, %v1559
  %v1561 = vpop.f32.mrb[0].mxu0
  %1562 = vdwg.mxu0
  %v1563 = vmul.f32 %v1549, 0.35355338
  %v1564 = vmul.f32 %v1552, 0.35355338
  %v1565 = vmul.f32 %v1557, 0.35355338
  %v1566 = vmul.f32 %v1560, 0.35355338
  %v1567 = vadd.f32 %v1563, %v140
  %v1568 = vadd.f32 %v1564, %v141
  %v1569 = vadd.f32 %v1565, %v142
  %v1570 = vadd.f32 %v1566, %v143
  %v1571 = vsel %vm66, %v1567, -inf
  %1572 = vmax.xlane.f32.xlu0 %v1571
  %v1573 = vpop.xlane.xlu0 %1572
  %v1574 = vsel %vm66, %v1568, -inf
  %1575 = vmax.xlane.f32.xlu0 %v1574
  %v1576 = vpop.xlane.xlu0 %1575
  %v1577 = vsel %vm66, %v1569, -inf
  %1578 = vmax.xlane.f32.xlu0 %v1577
  %v1579 = vpop.xlane.xlu0 %1578
  %v1580 = vsel %vm66, %v1570, -inf
  %1581 = vmax.xlane.f32.xlu0 %v1580
  %v1582 = vpop.xlane.xlu0 %1581
  %v1583 = vsub.f32 %v1567, %v1573
  %v1584 = vsub.f32 %v1568, %v1576
  %v1585 = vsub.f32 %v1569, %v1579
  %v1586 = vsub.f32 %v1570, %v1582
  %v1587 = vmul.f32 %v1583, 1.442695
  %v1588 = vpow.pop %v1587
  %v1589 = vmul.f32 %v1584, 1.442695
  %v1590 = vpow.pop %v1589
  %v1591 = vmul.f32 %v1585, 1.442695
  %v1592 = vpow.pop %v1591
  %v1593 = vmul.f32 %v1586, 1.442695
  %v1594 = vpow.pop %v1593
  %v1595 = vsel %vm66, %v1588, 0.0
  %1596 = vadd.xlane.f32.xlu0 %v1595
  %v1597 = vpop.xlane.xlu0 %1596
  %v1598 = vsel %vm66, %v1590, 0.0
  %1599 = vadd.xlane.f32.xlu0 %v1598
  %v1600 = vpop.xlane.xlu0 %1599
  %v1601 = vsel %vm66, %v1592, 0.0
  %1602 = vadd.xlane.f32.xlu0 %v1601
  %v1603 = vpop.xlane.xlu0 %1602
  %v1604 = vsel %vm66, %v1594, 0.0
  %1605 = vadd.xlane.f32.xlu0 %v1604
  %v1606 = vpop.xlane.xlu0 %1605
  %v1607 = vrcp.pop %v1597
  %v1608 = vrcp.pop %v1600
  %v1609 = vrcp.pop %v1603
  %v1610 = vrcp.pop %v1606
  %v1611 = vmul.f32 %v1588, %v1607
  %v1612 = vmul.f32 %v1590, %v1608
  %v1613 = vmul.f32 %v1592, %v1609
  %v1614 = vmul.f32 %v1594, %v1610
  %v1615 = vpack.c.bf16 %v1612, %v1611
  %v1616 = vpack.c.bf16 %v1614, %v1613
  %1617 = vrot.lane.b32.xlu0 %v1494, 64
  %v1618 = vpop.permute.xlu0 %1617
  %1619 = vrot.lane.b32.xlu0 %v1495, 64
  %v1620 = vpop.permute.xlu0 %1619
  %v1624 = vsel %vm66, %v1615, 0
  %v1627 = vsel %vm66, %v1616, 0
  %1629 = vmatprep.subr.bf16.mxu0 0
  %1630 = vmatpush1.bf16.msra.mxu0 %v1618
  %1631 = vmatprep.subr.bf16.mxu0 0
  %1632 = vmatpush1.bf16.msra.mxu0 %v1620
  %1633 = vmatprep.subr.bf16.mxu0 0
  %1634 = vmatpush1.bf16.msra.mxu0 0
  %1635 = vmatprep.subr.bf16.mxu0 0
  %1636 = vmatpush1.bf16.msra.mxu0 0
  %1637 = vmatprep.subr.bf16.mxu0 0
  %1638 = vmatpush1.bf16.msra.mxu0 0
  %1639 = vmatprep.subr.bf16.mxu0 0
  %1640 = vmatpush1.bf16.msra.mxu0 0
  %1641 = vmatprep.subr.bf16.mxu0 0
  %1642 = vmatpush1.bf16.msra.mxu0 0
  %1643 = vmatprep.subr.bf16.mxu0 0
  %1644 = vmatpush1.bf16.msra.mxu0 0
  %1645 = vmatprep.subr.bf16.mxu0 0
  %1646 = vmatpush1.bf16.msra.mxu0 0
  %1647 = vmatprep.subr.bf16.mxu0 0
  %1648 = vmatpush1.bf16.msra.mxu0 0
  %1649 = vmatprep.subr.bf16.mxu0 0
  %1650 = vmatpush1.bf16.msra.mxu0 0
  %1651 = vmatprep.subr.bf16.mxu0 0
  %1652 = vmatpush1.bf16.msra.mxu0 0
  %1653 = vmatprep.subr.bf16.mxu0 0
  %1654 = vmatpush1.bf16.msra.mxu0 0
  %1655 = vmatprep.subr.bf16.mxu0 0
  %1656 = vmatpush1.bf16.msra.mxu0 0
  %1657 = vmatprep.subr.bf16.mxu0 0
  %1658 = vmatpush1.bf16.msra.mxu0 0
  %1659 = vmatprep.subr.bf16.mxu0 0
  %1660 = vmatpush1.bf16.msra.mxu0 0
  %1661 = vmatprep.mubr.bf16.mxu0 0
  %1662 = vmatmul.mubr.bf16.gmra.mrb[0].mxu0 %v1624
  %v1663 = vpop.f32.mrb[0].mxu0
  %v1664 = vadd.f32 0.0, %v1663
  %v1665 = vpop.f32.mrb[0].mxu0
  %v1666 = vpop.f32.mrb[0].mxu0
  %v1667 = vadd.f32 0.0, %v1666
  %v1668 = vpop.f32.mrb[0].mxu0
  %1669 = vmatprep.mubr.bf16.mxu0 0
  %1670 = vmatmul.mubr.bf16.gmra.mrb[0].mxu0 %v1627
  %v1671 = vpop.f32.mrb[0].mxu0
  %v1672 = vadd.f32 0.0, %v1671
  %v1673 = vpop.f32.mrb[0].mxu0
  %v1674 = vpop.f32.mrb[0].mxu0
  %v1675 = vadd.f32 0.0, %v1674
  %v1676 = vpop.f32.mrb[0].mxu0
  %1677 = vdwg.mxu0
  %1678 = vrot.lane.b32.xlu0 %v1494, 120
  %v1679 = vpop.permute.xlu0 %1678
  %1680 = vrot.lane.b32.xlu0 %v1495, 120
  %v1681 = vpop.permute.xlu0 %1680
  %1682 = vrot.lane.b32.xlu0 %v1494, 88
  %v1683 = vpop.permute.xlu0 %1682
  %1684 = vrot.lane.b32.xlu0 %v1495, 88
  %v1685 = vpop.permute.xlu0 %1684
  %v1687 = vsel %vm222, %v1679, 0
  %v1690 = vsel %vm222, %v1681, 0
  %v1693 = vsel %vm222, %v1683, 0
  %v1696 = vsel %vm222, %v1685, 0
  %1698 = vmatprep.subr.bf16.mxu0 0
  %1699 = vmatpush1.bf16.xpose.msra.mxu0 %v1693
  %1700 = vmatprep.subr.bf16.mxu0 0
  %1701 = vmatpush1.bf16.xpose.msra.mxu0 %v1696
  %1702 = vmatprep.subr.bf16.mxu0 0
  %1703 = vmatpush1.bf16.xpose.msra.mxu0 0
  %1704 = vmatprep.subr.bf16.mxu0 0
  %1705 = vmatpush1.bf16.xpose.msra.mxu0 0
  %1706 = vmatprep.subr.bf16.mxu0 0
  %1707 = vmatpush1.bf16.xpose.msra.mxu0 0
  %1708 = vmatprep.subr.bf16.mxu0 0
  %1709 = vmatpush1.bf16.xpose.msra.mxu0 0
  %1710 = vmatprep.subr.bf16.mxu0 0
  %1711 = vmatpush1.bf16.xpose.msra.mxu0 0
  %1712 = vmatprep.subr.bf16.mxu0 0
  %1713 = vmatpush1.bf16.xpose.msra.mxu0 0
  %1714 = vmatprep.subr.bf16.mxu0 0
  %1715 = vmatpush1.bf16.xpose.msra.mxu0 0
  %1716 = vmatprep.subr.bf16.mxu0 0
  %1717 = vmatpush1.bf16.xpose.msra.mxu0 0
  %1718 = vmatprep.subr.bf16.mxu0 0
  %1719 = vmatpush1.bf16.xpose.msra.mxu0 0
  %1720 = vmatprep.subr.bf16.mxu0 0
  %1721 = vmatpush1.bf16.xpose.msra.mxu0 0
  %1722 = vmatprep.subr.bf16.mxu0 0
  %1723 = vmatpush1.bf16.xpose.msra.mxu0 0
  %1724 = vmatprep.subr.bf16.mxu0 0
  %1725 = vmatpush1.bf16.xpose.msra.mxu0 0
  %1726 = vmatprep.subr.bf16.mxu0 0
  %1727 = vmatpush1.bf16.xpose.msra.mxu0 0
  %1728 = vmatprep.subr.bf16.mxu0 0
  %1729 = vmatpush1.bf16.xpose.msra.mxu0 0
  %1730 = vmatprep.mubr.bf16.mxu0 0
  %1731 = vmatmul.mubr.bf16.gmra.mrb[0].mxu0 %v1687
  %v1732 = vpop.f32.mrb[0].mxu0
  %v1733 = vadd.f32 0.0, %v1732
  %v1734 = vpop.f32.mrb[0].mxu0
  %v1735 = vpop.f32.mrb[0].mxu0
  %v1736 = vadd.f32 0.0, %v1735
  %v1737 = vpop.f32.mrb[0].mxu0
  %1738 = vmatprep.mubr.bf16.mxu0 0
  %1739 = vmatmul.mubr.bf16.gmra.mrb[0].mxu0 %v1690
  %v1740 = vpop.f32.mrb[0].mxu0
  %v1741 = vadd.f32 0.0, %v1740
  %v1742 = vpop.f32.mrb[0].mxu0
  %v1743 = vpop.f32.mrb[0].mxu0
  %v1744 = vadd.f32 0.0, %v1743
  %v1745 = vpop.f32.mrb[0].mxu0
  %1746 = vdwg.mxu0
  %v1747 = vmul.f32 %v1733, 0.35355338
  %v1748 = vmul.f32 %v1736, 0.35355338
  %v1749 = vmul.f32 %v1741, 0.35355338
  %v1750 = vmul.f32 %v1744, 0.35355338
  %v1751 = vadd.f32 %v1747, %v140
  %v1752 = vadd.f32 %v1748, %v141
  %v1753 = vadd.f32 %v1749, %v142
  %v1754 = vadd.f32 %v1750, %v143
  %v1755 = vsel %vm66, %v1751, -inf
  %1756 = vmax.xlane.f32.xlu0 %v1755
  %v1757 = vpop.xlane.xlu0 %1756
  %v1758 = vsel %vm66, %v1752, -inf
  %1759 = vmax.xlane.f32.xlu0 %v1758
  %v1760 = vpop.xlane.xlu0 %1759
  %v1761 = vsel %vm66, %v1753, -inf
  %1762 = vmax.xlane.f32.xlu0 %v1761
  %v1763 = vpop.xlane.xlu0 %1762
  %v1764 = vsel %vm66, %v1754, -inf
  %1765 = vmax.xlane.f32.xlu0 %v1764
  %v1766 = vpop.xlane.xlu0 %1765
  %v1767 = vsub.f32 %v1751, %v1757
  %v1768 = vsub.f32 %v1752, %v1760
  %v1769 = vsub.f32 %v1753, %v1763
  %v1770 = vsub.f32 %v1754, %v1766
  %v1771 = vmul.f32 %v1767, 1.442695
  %v1772 = vpow.pop %v1771
  %v1773 = vmul.f32 %v1768, 1.442695
  %v1774 = vpow.pop %v1773
  %v1775 = vmul.f32 %v1769, 1.442695
  %v1776 = vpow.pop %v1775
  %v1777 = vmul.f32 %v1770, 1.442695
  %v1778 = vpow.pop %v1777
  %v1779 = vsel %vm66, %v1772, 0.0
  %1780 = vadd.xlane.f32.xlu0 %v1779
  %v1781 = vpop.xlane.xlu0 %1780
  %v1782 = vsel %vm66, %v1774, 0.0
  %1783 = vadd.xlane.f32.xlu0 %v1782
  %v1784 = vpop.xlane.xlu0 %1783
  %v1785 = vsel %vm66, %v1776, 0.0
  %1786 = vadd.xlane.f32.xlu0 %v1785
  %v1787 = vpop.xlane.xlu0 %1786
  %v1788 = vsel %vm66, %v1778, 0.0
  %1789 = vadd.xlane.f32.xlu0 %v1788
  %v1790 = vpop.xlane.xlu0 %1789
  %v1791 = vrcp.pop %v1781
  %v1792 = vrcp.pop %v1784
  %v1793 = vrcp.pop %v1787
  %v1794 = vrcp.pop %v1790
  %v1795 = vmul.f32 %v1772, %v1791
  %v1796 = vmul.f32 %v1774, %v1792
  %v1797 = vmul.f32 %v1776, %v1793
  %v1798 = vmul.f32 %v1778, %v1794
  %v1799 = vpack.c.bf16 %v1796, %v1795
  %v1800 = vpack.c.bf16 %v1798, %v1797
  %1801 = vrot.lane.b32.xlu0 %v1494, 56
  %v1802 = vpop.permute.xlu0 %1801
  %1803 = vrot.lane.b32.xlu0 %v1495, 56
  %v1804 = vpop.permute.xlu0 %1803
  %v1808 = vsel %vm66, %v1799, 0
  %v1811 = vsel %vm66, %v1800, 0
  %1813 = vmatprep.subr.bf16.mxu0 0
  %1814 = vmatpush1.bf16.msra.mxu0 %v1802
  %1815 = vmatprep.subr.bf16.mxu0 0
  %1816 = vmatpush1.bf16.msra.mxu0 %v1804
  %1817 = vmatprep.subr.bf16.mxu0 0
  %1818 = vmatpush1.bf16.msra.mxu0 0
  %1819 = vmatprep.subr.bf16.mxu0 0
  %1820 = vmatpush1.bf16.msra.mxu0 0
  %1821 = vmatprep.subr.bf16.mxu0 0
  %1822 = vmatpush1.bf16.msra.mxu0 0
  %1823 = vmatprep.subr.bf16.mxu0 0
  %1824 = vmatpush1.bf16.msra.mxu0 0
  %1825 = vmatprep.subr.bf16.mxu0 0
  %1826 = vmatpush1.bf16.msra.mxu0 0
  %1827 = vmatprep.subr.bf16.mxu0 0
  %1828 = vmatpush1.bf16.msra.mxu0 0
  %1829 = vmatprep.subr.bf16.mxu0 0
  %1830 = vmatpush1.bf16.msra.mxu0 0
  %1831 = vmatprep.subr.bf16.mxu0 0
  %1832 = vmatpush1.bf16.msra.mxu0 0
  %1833 = vmatprep.subr.bf16.mxu0 0
  %1834 = vmatpush1.bf16.msra.mxu0 0
  %1835 = vmatprep.subr.bf16.mxu0 0
  %1836 = vmatpush1.bf16.msra.mxu0 0
  %1837 = vmatprep.subr.bf16.mxu0 0
  %1838 = vmatpush1.bf16.msra.mxu0 0
  %1839 = vmatprep.subr.bf16.mxu0 0
  %1840 = vmatpush1.bf16.msra.mxu0 0
  %1841 = vmatprep.subr.bf16.mxu0 0
  %1842 = vmatpush1.bf16.msra.mxu0 0
  %1843 = vmatprep.subr.bf16.mxu0 0
  %1844 = vmatpush1.bf16.msra.mxu0 0
  %1845 = vmatprep.mubr.bf16.mxu0 0
  %1846 = vmatmul.mubr.bf16.gmra.mrb[0].mxu0 %v1808
  %v1847 = vpop.f32.mrb[0].mxu0
  %v1848 = vadd.f32 0.0, %v1847
  %v1849 = vpop.f32.mrb[0].mxu0
  %v1850 = vpop.f32.mrb[0].mxu0
  %v1851 = vadd.f32 0.0, %v1850
  %v1852 = vpop.f32.mrb[0].mxu0
  %1853 = vmatprep.mubr.bf16.mxu0 0
  %1854 = vmatmul.mubr.bf16.gmra.mrb[0].mxu0 %v1811
  %v1855 = vpop.f32.mrb[0].mxu0
  %v1856 = vadd.f32 0.0, %v1855
  %v1857 = vpop.f32.mrb[0].mxu0
  %v1858 = vpop.f32.mrb[0].mxu0
  %v1859 = vadd.f32 0.0, %v1858
  %v1860 = vpop.f32.mrb[0].mxu0
  %1861 = vdwg.mxu0
  %1862 = vrot.lane.b32.xlu0 %v1494, 112
  %v1863 = vpop.permute.xlu0 %1862
  %1864 = vrot.lane.b32.xlu0 %v1495, 112
  %v1865 = vpop.permute.xlu0 %1864
  %1866 = vrot.lane.b32.xlu0 %v1494, 80
  %v1867 = vpop.permute.xlu0 %1866
  %1868 = vrot.lane.b32.xlu0 %v1495, 80
  %v1869 = vpop.permute.xlu0 %1868
  %v1871 = vsel %vm222, %v1863, 0
  %v1874 = vsel %vm222, %v1865, 0
  %v1877 = vsel %vm222, %v1867, 0
  %v1880 = vsel %vm222, %v1869, 0
  %1882 = vmatprep.subr.bf16.mxu0 0
  %1883 = vmatpush1.bf16.xpose.msra.mxu0 %v1877
  %1884 = vmatprep.subr.bf16.mxu0 0
  %1885 = vmatpush1.bf16.xpose.msra.mxu0 %v1880
  %1886 = vmatprep.subr.bf16.mxu0 0
  %1887 = vmatpush1.bf16.xpose.msra.mxu0 0
  %1888 = vmatprep.subr.bf16.mxu0 0
  %1889 = vmatpush1.bf16.xpose.msra.mxu0 0
  %1890 = vmatprep.subr.bf16.mxu0 0
  %1891 = vmatpush1.bf16.xpose.msra.mxu0 0
  %1892 = vmatprep.subr.bf16.mxu0 0
  %1893 = vmatpush1.bf16.xpose.msra.mxu0 0
  %1894 = vmatprep.subr.bf16.mxu0 0
  %1895 = vmatpush1.bf16.xpose.msra.mxu0 0
  %1896 = vmatprep.subr.bf16.mxu0 0
  %1897 = vmatpush1.bf16.xpose.msra.mxu0 0
  %1898 = vmatprep.subr.bf16.mxu0 0
  %1899 = vmatpush1.bf16.xpose.msra.mxu0 0
  %1900 = vmatprep.subr.bf16.mxu0 0
  %1901 = vmatpush1.bf16.xpose.msra.mxu0 0
  %1902 = vmatprep.subr.bf16.mxu0 0
  %1903 = vmatpush1.bf16.xpose.msra.mxu0 0
  %1904 = vmatprep.subr.bf16.mxu0 0
  %1905 = vmatpush1.bf16.xpose.msra.mxu0 0
  %1906 = vmatprep.subr.bf16.mxu0 0
  %1907 = vmatpush1.bf16.xpose.msra.mxu0 0
  %1908 = vmatprep.subr.bf16.mxu0 0
  %1909 = vmatpush1.bf16.xpose.msra.mxu0 0
  %1910 = vmatprep.subr.bf16.mxu0 0
  %1911 = vmatpush1.bf16.xpose.msra.mxu0 0
  %1912 = vmatprep.subr.bf16.mxu0 0
  %1913 = vmatpush1.bf16.xpose.msra.mxu0 0
  %1914 = vmatprep.mubr.bf16.mxu0 0
  %1915 = vmatmul.mubr.bf16.gmra.mrb[0].mxu0 %v1871
  %v1916 = vpop.f32.mrb[0].mxu0
  %v1917 = vadd.f32 0.0, %v1916
  %v1918 = vpop.f32.mrb[0].mxu0
  %v1919 = vpop.f32.mrb[0].mxu0
  %v1920 = vadd.f32 0.0, %v1919
  %v1921 = vpop.f32.mrb[0].mxu0
  %1922 = vmatprep.mubr.bf16.mxu0 0
  %1923 = vmatmul.mubr.bf16.gmra.mrb[0].mxu0 %v1874
  %v1924 = vpop.f32.mrb[0].mxu0
  %v1925 = vadd.f32 0.0, %v1924
  %v1926 = vpop.f32.mrb[0].mxu0
  %v1927 = vpop.f32.mrb[0].mxu0
  %v1928 = vadd.f32 0.0, %v1927
  %v1929 = vpop.f32.mrb[0].mxu0
  %1930 = vdwg.mxu0
  %v1931 = vmul.f32 %v1917, 0.35355338
  %v1932 = vmul.f32 %v1920, 0.35355338
  %v1933 = vmul.f32 %v1925, 0.35355338
  %v1934 = vmul.f32 %v1928, 0.35355338
  %v1935 = vadd.f32 %v1931, %v140
  %v1936 = vadd.f32 %v1932, %v141
  %v1937 = vadd.f32 %v1933, %v142
  %v1938 = vadd.f32 %v1934, %v143
  %v1939 = vsel %vm66, %v1935, -inf
  %1940 = vmax.xlane.f32.xlu0 %v1939
  %v1941 = vpop.xlane.xlu0 %1940
  %v1942 = vsel %vm66, %v1936, -inf
  %1943 = vmax.xlane.f32.xlu0 %v1942
  %v1944 = vpop.xlane.xlu0 %1943
  %v1945 = vsel %vm66, %v1937, -inf
  %1946 = vmax.xlane.f32.xlu0 %v1945
  %v1947 = vpop.xlane.xlu0 %1946
  %v1948 = vsel %vm66, %v1938, -inf
  %1949 = vmax.xlane.f32.xlu0 %v1948
  %v1950 = vpop.xlane.xlu0 %1949
  %v1951 = vsub.f32 %v1935, %v1941
  %v1952 = vsub.f32 %v1936, %v1944
  %v1953 = vsub.f32 %v1937, %v1947
  %v1954 = vsub.f32 %v1938, %v1950
  %v1955 = vmul.f32 %v1951, 1.442695
  %v1956 = vpow.pop %v1955
  %v1957 = vmul.f32 %v1952, 1.442695
  %v1958 = vpow.pop %v1957
  %v1959 = vmul.f32 %v1953, 1.442695
  %v1960 = vpow.pop %v1959
  %v1961 = vmul.f32 %v1954, 1.442695
  %v1962 = vpow.pop %v1961
  %v1963 = vsel %vm66, %v1956, 0.0
  %1964 = vadd.xlane.f32.xlu0 %v1963
  %v1965 = vpop.xlane.xlu0 %1964
  %v1966 = vsel %vm66, %v1958, 0.0
  %1967 = vadd.xlane.f32.xlu0 %v1966
  %v1968 = vpop.xlane.xlu0 %1967
  %v1969 = vsel %vm66, %v1960, 0.0
  %1970 = vadd.xlane.f32.xlu0 %v1969
  %v1971 = vpop.xlane.xlu0 %1970
  %v1972 = vsel %vm66, %v1962, 0.0
  %1973 = vadd.xlane.f32.xlu0 %v1972
  %v1974 = vpop.xlane.xlu0 %1973
  %v1975 = vrcp.pop %v1965
  %v1976 = vrcp.pop %v1968
  %v1977 = vrcp.pop %v1971
  %v1978 = vrcp.pop %v1974
  %v1979 = vmul.f32 %v1956, %v1975
  %v1980 = vmul.f32 %v1958, %v1976
  %v1981 = vmul.f32 %v1960, %v1977
  %v1982 = vmul.f32 %v1962, %v1978
  %v1983 = vpack.c.bf16 %v1980, %v1979
  %v1984 = vpack.c.bf16 %v1982, %v1981
  %1985 = vrot.lane.b32.xlu0 %v1494, 48
  %v1986 = vpop.permute.xlu0 %1985
  %1987 = vrot.lane.b32.xlu0 %v1495, 48
  %v1988 = vpop.permute.xlu0 %1987
  %v1992 = vsel %vm66, %v1983, 0
  %v1995 = vsel %vm66, %v1984, 0
  %1997 = vmatprep.subr.bf16.mxu0 0
  %1998 = vmatpush1.bf16.msra.mxu0 %v1986
  %1999 = vmatprep.subr.bf16.mxu0 0
  %2000 = vmatpush1.bf16.msra.mxu0 %v1988
  %2001 = vmatprep.subr.bf16.mxu0 0
  %2002 = vmatpush1.bf16.msra.mxu0 0
  %2003 = vmatprep.subr.bf16.mxu0 0
  %2004 = vmatpush1.bf16.msra.mxu0 0
  %2005 = vmatprep.subr.bf16.mxu0 0
  %2006 = vmatpush1.bf16.msra.mxu0 0
  %2007 = vmatprep.subr.bf16.mxu0 0
  %2008 = vmatpush1.bf16.msra.mxu0 0
  %2009 = vmatprep.subr.bf16.mxu0 0
  %2010 = vmatpush1.bf16.msra.mxu0 0
  %2011 = vmatprep.subr.bf16.mxu0 0
  %2012 = vmatpush1.bf16.msra.mxu0 0
  %2013 = vmatprep.subr.bf16.mxu0 0
  %2014 = vmatpush1.bf16.msra.mxu0 0
  %2015 = vmatprep.subr.bf16.mxu0 0
  %2016 = vmatpush1.bf16.msra.mxu0 0
  %2017 = vmatprep.subr.bf16.mxu0 0
  %2018 = vmatpush1.bf16.msra.mxu0 0
  %2019 = vmatprep.subr.bf16.mxu0 0
  %2020 = vmatpush1.bf16.msra.mxu0 0
  %2021 = vmatprep.subr.bf16.mxu0 0
  %2022 = vmatpush1.bf16.msra.mxu0 0
  %2023 = vmatprep.subr.bf16.mxu0 0
  %2024 = vmatpush1.bf16.msra.mxu0 0
  %2025 = vmatprep.subr.bf16.mxu0 0
  %2026 = vmatpush1.bf16.msra.mxu0 0
  %2027 = vmatprep.subr.bf16.mxu0 0
  %2028 = vmatpush1.bf16.msra.mxu0 0
  %2029 = vmatprep.mubr.bf16.mxu0 0
  %2030 = vmatmul.mubr.bf16.gmra.mrb[0].mxu0 %v1992
  %v2031 = vpop.f32.mrb[0].mxu0
  %v2032 = vadd.f32 0.0, %v2031
  %v2033 = vpop.f32.mrb[0].mxu0
  %v2034 = vpop.f32.mrb[0].mxu0
  %v2035 = vadd.f32 0.0, %v2034
  %v2036 = vpop.f32.mrb[0].mxu0
  %2037 = vmatprep.mubr.bf16.mxu0 0
  %2038 = vmatmul.mubr.bf16.gmra.mrb[0].mxu0 %v1995
  %v2039 = vpop.f32.mrb[0].mxu0
  %v2040 = vadd.f32 0.0, %v2039
  %v2041 = vpop.f32.mrb[0].mxu0
  %v2042 = vpop.f32.mrb[0].mxu0
  %v2043 = vadd.f32 0.0, %v2042
  %v2044 = vpop.f32.mrb[0].mxu0
  %2045 = vdwg.mxu0
  %2046 = vrot.lane.b32.xlu0 %v1494, 104
  %v2047 = vpop.permute.xlu0 %2046
  %2048 = vrot.lane.b32.xlu0 %v1495, 104
  %v2049 = vpop.permute.xlu0 %2048
  %2050 = vrot.lane.b32.xlu0 %v1494, 72
  %v2051 = vpop.permute.xlu0 %2050
  %2052 = vrot.lane.b32.xlu0 %v1495, 72
  %v2053 = vpop.permute.xlu0 %2052
  %v2055 = vsel %vm222, %v2047, 0
  %v2058 = vsel %vm222, %v2049, 0
  %v2061 = vsel %vm222, %v2051, 0
  %v2064 = vsel %vm222, %v2053, 0
  %2066 = vmatprep.subr.bf16.mxu0 0
  %2067 = vmatpush1.bf16.xpose.msra.mxu0 %v2061
  %2068 = vmatprep.subr.bf16.mxu0 0
  %2069 = vmatpush1.bf16.xpose.msra.mxu0 %v2064
  %2070 = vmatprep.subr.bf16.mxu0 0
  %2071 = vmatpush1.bf16.xpose.msra.mxu0 0
  %2072 = vmatprep.subr.bf16.mxu0 0
  %2073 = vmatpush1.bf16.xpose.msra.mxu0 0
  %2074 = vmatprep.subr.bf16.mxu0 0
  %2075 = vmatpush1.bf16.xpose.msra.mxu0 0
  %2076 = vmatprep.subr.bf16.mxu0 0
  %2077 = vmatpush1.bf16.xpose.msra.mxu0 0
  %2078 = vmatprep.subr.bf16.mxu0 0
  %2079 = vmatpush1.bf16.xpose.msra.mxu0 0
  %2080 = vmatprep.subr.bf16.mxu0 0
  %2081 = vmatpush1.bf16.xpose.msra.mxu0 0
  %2082 = vmatprep.subr.bf16.mxu0 0
  %2083 = vmatpush1.bf16.xpose.msra.mxu0 0
  %2084 = vmatprep.subr.bf16.mxu0 0
  %2085 = vmatpush1.bf16.xpose.msra.mxu0 0
  %2086 = vmatprep.subr.bf16.mxu0 0
  %2087 = vmatpush1.bf16.xpose.msra.mxu0 0
  %2088 = vmatprep.subr.bf16.mxu0 0
  %2089 = vmatpush1.bf16.xpose.msra.mxu0 0
  %2090 = vmatprep.subr.bf16.mxu0 0
  %2091 = vmatpush1.bf16.xpose.msra.mxu0 0
  %2092 = vmatprep.subr.bf16.mxu0 0
  %2093 = vmatpush1.bf16.xpose.msra.mxu0 0
  %2094 = vmatprep.subr.bf16.mxu0 0
  %2095 = vmatpush1.bf16.xpose.msra.mxu0 0
  %2096 = vmatprep.subr.bf16.mxu0 0
  %2097 = vmatpush1.bf16.xpose.msra.mxu0 0
  %2098 = vmatprep.mubr.bf16.mxu0 0
  %2099 = vmatmul.mubr.bf16.gmra.mrb[0].mxu0 %v2055
  %v2100 = vpop.f32.mrb[0].mxu0
  %v2101 = vadd.f32 0.0, %v2100
  %v2102 = vpop.f32.mrb[0].mxu0
  %v2103 = vpop.f32.mrb[0].mxu0
  %v2104 = vadd.f32 0.0, %v2103
  %v2105 = vpop.f32.mrb[0].mxu0
  %2106 = vmatprep.mubr.bf16.mxu0 0
  %2107 = vmatmul.mubr.bf16.gmra.mrb[0].mxu0 %v2058
  %v2108 = vpop.f32.mrb[0].mxu0
  %v2109 = vadd.f32 0.0, %v2108
  %v2110 = vpop.f32.mrb[0].mxu0
  %v2111 = vpop.f32.mrb[0].mxu0
  %v2112 = vadd.f32 0.0, %v2111
  %v2113 = vpop.f32.mrb[0].mxu0
  %2114 = vdwg.mxu0
  %v2115 = vmul.f32 %v2101, 0.35355338
  %v2116 = vmul.f32 %v2104, 0.35355338
  %v2117 = vmul.f32 %v2109, 0.35355338
  %v2118 = vmul.f32 %v2112, 0.35355338
  %v2119 = vadd.f32 %v2115, %v140
  %v2120 = vadd.f32 %v2116, %v141
  %v2121 = vadd.f32 %v2117, %v142
  %v2122 = vadd.f32 %v2118, %v143
  %v2123 = vsel %vm66, %v2119, -inf
  %2124 = vmax.xlane.f32.xlu0 %v2123
  %v2125 = vpop.xlane.xlu0 %2124
  %v2126 = vsel %vm66, %v2120, -inf
  %2127 = vmax.xlane.f32.xlu0 %v2126
  %v2128 = vpop.xlane.xlu0 %2127
  %v2129 = vsel %vm66, %v2121, -inf
  %2130 = vmax.xlane.f32.xlu0 %v2129
  %v2131 = vpop.xlane.xlu0 %2130
  %v2132 = vsel %vm66, %v2122, -inf
  %2133 = vmax.xlane.f32.xlu0 %v2132
  %v2134 = vpop.xlane.xlu0 %2133
  %v2135 = vsub.f32 %v2119, %v2125
  %v2136 = vsub.f32 %v2120, %v2128
  %v2137 = vsub.f32 %v2121, %v2131
  %v2138 = vsub.f32 %v2122, %v2134
  %v2139 = vmul.f32 %v2135, 1.442695
  %v2140 = vpow.pop %v2139
  %v2141 = vmul.f32 %v2136, 1.442695
  %v2142 = vpow.pop %v2141
  %v2143 = vmul.f32 %v2137, 1.442695
  %v2144 = vpow.pop %v2143
  %v2145 = vmul.f32 %v2138, 1.442695
  %v2146 = vpow.pop %v2145
  %v2147 = vsel %vm66, %v2140, 0.0
  %2148 = vadd.xlane.f32.xlu0 %v2147
  %v2149 = vpop.xlane.xlu0 %2148
  %v2150 = vsel %vm66, %v2142, 0.0
  %2151 = vadd.xlane.f32.xlu0 %v2150
  %v2152 = vpop.xlane.xlu0 %2151
  %v2153 = vsel %vm66, %v2144, 0.0
  %2154 = vadd.xlane.f32.xlu0 %v2153
  %v2155 = vpop.xlane.xlu0 %2154
  %v2156 = vsel %vm66, %v2146, 0.0
  %2157 = vadd.xlane.f32.xlu0 %v2156
  %v2158 = vpop.xlane.xlu0 %2157
  %v2159 = vrcp.pop %v2149
  %v2160 = vrcp.pop %v2152
  %v2161 = vrcp.pop %v2155
  %v2162 = vrcp.pop %v2158
  %v2163 = vmul.f32 %v2140, %v2159
  %v2164 = vmul.f32 %v2142, %v2160
  %v2165 = vmul.f32 %v2144, %v2161
  %v2166 = vmul.f32 %v2146, %v2162
  %v2167 = vpack.c.bf16 %v2164, %v2163
  %v2168 = vpack.c.bf16 %v2166, %v2165
  %2169 = vrot.lane.b32.xlu0 %v1494, 40
  %v2170 = vpop.permute.xlu0 %2169
  %2171 = vrot.lane.b32.xlu0 %v1495, 40
  %v2172 = vpop.permute.xlu0 %2171
  %v2176 = vsel %vm66, %v2167, 0
  %v2179 = vsel %vm66, %v2168, 0
  %2181 = vmatprep.subr.bf16.mxu0 0
  %2182 = vmatpush1.bf16.msra.mxu0 %v2170
  %2183 = vmatprep.subr.bf16.mxu0 0
  %2184 = vmatpush1.bf16.msra.mxu0 %v2172
  %2185 = vmatprep.subr.bf16.mxu0 0
  %2186 = vmatpush1.bf16.msra.mxu0 0
  %2187 = vmatprep.subr.bf16.mxu0 0
  %2188 = vmatpush1.bf16.msra.mxu0 0
  %2189 = vmatprep.subr.bf16.mxu0 0
  %2190 = vmatpush1.bf16.msra.mxu0 0
  %2191 = vmatprep.subr.bf16.mxu0 0
  %2192 = vmatpush1.bf16.msra.mxu0 0
  %2193 = vmatprep.subr.bf16.mxu0 0
  %2194 = vmatpush1.bf16.msra.mxu0 0
  %2195 = vmatprep.subr.bf16.mxu0 0
  %2196 = vmatpush1.bf16.msra.mxu0 0
  %2197 = vmatprep.subr.bf16.mxu0 0
  %2198 = vmatpush1.bf16.msra.mxu0 0
  %2199 = vmatprep.subr.bf16.mxu0 0
  %2200 = vmatpush1.bf16.msra.mxu0 0
  %2201 = vmatprep.subr.bf16.mxu0 0
  %2202 = vmatpush1.bf16.msra.mxu0 0
  %2203 = vmatprep.subr.bf16.mxu0 0
  %2204 = vmatpush1.bf16.msra.mxu0 0
  %2205 = vmatprep.subr.bf16.mxu0 0
  %2206 = vmatpush1.bf16.msra.mxu0 0
  %2207 = vmatprep.subr.bf16.mxu0 0
  %2208 = vmatpush1.bf16.msra.mxu0 0
  %2209 = vmatprep.subr.bf16.mxu0 0
  %2210 = vmatpush1.bf16.msra.mxu0 0
  %2211 = vmatprep.subr.bf16.mxu0 0
  %2212 = vmatpush1.bf16.msra.mxu0 0
  %2213 = vmatprep.mubr.bf16.mxu0 0
  %2214 = vmatmul.mubr.bf16.gmra.mrb[0].mxu0 %v2176
  %v2215 = vpop.f32.mrb[0].mxu0
  %v2216 = vadd.f32 0.0, %v2215
  %v2217 = vpop.f32.mrb[0].mxu0
  %v2218 = vpop.f32.mrb[0].mxu0
  %v2219 = vadd.f32 0.0, %v2218
  %v2220 = vpop.f32.mrb[0].mxu0
  %2221 = vmatprep.mubr.bf16.mxu0 0
  %2222 = vmatmul.mubr.bf16.gmra.mrb[0].mxu0 %v2179
  %v2223 = vpop.f32.mrb[0].mxu0
  %v2224 = vadd.f32 0.0, %v2223
  %v2225 = vpop.f32.mrb[0].mxu0
  %v2226 = vpop.f32.mrb[0].mxu0
  %v2227 = vadd.f32 0.0, %v2226
  %v2228 = vpop.f32.mrb[0].mxu0
  %2229 = vdwg.mxu0
  %2234 = vrot.lane.b32.xlu0 %v1848, 8
  %v2235 = vpop.permute.xlu0 %2234
  %2236 = vrot.lane.b32.xlu0 %v1851, 8
  %v2237 = vpop.permute.xlu0 %2236
  %2238 = vrot.lane.b32.xlu0 %v1856, 8
  %v2239 = vpop.permute.xlu0 %2238
  %2240 = vrot.lane.b32.xlu0 %v1859, 8
  %v2241 = vpop.permute.xlu0 %2240
  %2250 = vrot.lane.b32.xlu0 %v2032, 16
  %v2251 = vpop.permute.xlu0 %2250
  %2252 = vrot.lane.b32.xlu0 %v2035, 16
  %v2253 = vpop.permute.xlu0 %2252
  %2254 = vrot.lane.b32.xlu0 %v2040, 16
  %v2255 = vpop.permute.xlu0 %2254
  %2256 = vrot.lane.b32.xlu0 %v2043, 16
  %v2257 = vpop.permute.xlu0 %2256
  %2266 = vrot.lane.b32.xlu0 %v2216, 24
  %v2267 = vpop.permute.xlu0 %2266
  %2268 = vrot.lane.b32.xlu0 %v2219, 24
  %v2269 = vpop.permute.xlu0 %2268
  %2270 = vrot.lane.b32.xlu0 %v2224, 24
  %v2271 = vpop.permute.xlu0 %2270
  %2272 = vrot.lane.b32.xlu0 %v2227, 24
  %v2273 = vpop.permute.xlu0 %2272
  %v2278 = vsel %vm222, %v1664, %v2235
  %v2279 = vsel %vm222, %v1667, %v2237
  %v2280 = vsel %vm222, %v1672, %v2239
  %v2281 = vsel %vm222, %v1675, %v2241
  %v2282 = vsel %vm1003, %v2278, %v2251
  %v2283 = vsel %vm1003, %v2279, %v2253
  %v2284 = vsel %vm1003, %v2280, %v2255
  %v2285 = vsel %vm1003, %v2281, %v2257
  %v2286 = vsel %vm1008, %v2282, %v2267
  %v2287 = vsel %vm1008, %v2283, %v2269
  %v2288 = vsel %vm1008, %v2284, %v2271
  %v2289 = vsel %vm1008, %v2285, %v2273
  %s2290 = scalar_lea.vmem %s6, 32
  %v2291 = vld [vmem:[%s2290] sm:$0xff]
  %v2292 = vld [vmem:[%s2290 + $0x8] sm:$0xff]
  %v2293 = vld [vmem:[%s2290 + $0x10] sm:$0xff]
  %v2294 = vld [vmem:[%s2290 + $0x18] sm:$0xff]
  %v2295 = vpack.c.bf16 %v2287, %v2286
  %v2296 = vpack.c.bf16 %v2289, %v2288
  %v2297 = vpack.c.bf16 %v2292, %v2291
  %v2298 = vpack.c.bf16 %v2294, %v2293
  %s2299 = scalar_lea.vmem %s7, 1
  %v2300 = vld [vmem:[%s2299] sm:$0x1]
  %v2302 = vlaneseq
  %v2303 = vshrl.u32 %v2302, 7
  %v2304 = vsub.s32 0, %v2303
  %v2305 = vrot.slane %v2300, %v2304
  %v2308 = vsel %vm66, %v2295, 0
  %v2311 = vsel %vm66, %v2296, 0
  %2313 = vmatprep.subr.bf16.mxu0 0
  %2314 = vmatpush1.bf16.msra.mxu0 %v2297
  %2315 = vmatprep.subr.bf16.mxu0 0
  %2316 = vmatpush1.bf16.msra.mxu0 %v2298
  %2317 = vmatprep.subr.bf16.mxu0 0
  %2318 = vmatpush1.bf16.msra.mxu0 0
  %2319 = vmatprep.subr.bf16.mxu0 0
  %2320 = vmatpush1.bf16.msra.mxu0 0
  %2321 = vmatprep.subr.bf16.mxu0 0
  %2322 = vmatpush1.bf16.msra.mxu0 0
  %2323 = vmatprep.subr.bf16.mxu0 0
  %2324 = vmatpush1.bf16.msra.mxu0 0
  %2325 = vmatprep.subr.bf16.mxu0 0
  %2326 = vmatpush1.bf16.msra.mxu0 0
  %2327 = vmatprep.subr.bf16.mxu0 0
  %2328 = vmatpush1.bf16.msra.mxu0 0
  %2329 = vmatprep.subr.bf16.mxu0 0
  %2330 = vmatpush1.bf16.msra.mxu0 0
  %2331 = vmatprep.subr.bf16.mxu0 0
  %2332 = vmatpush1.bf16.msra.mxu0 0
  %2333 = vmatprep.subr.bf16.mxu0 0
  %2334 = vmatpush1.bf16.msra.mxu0 0
  %2335 = vmatprep.subr.bf16.mxu0 0
  %2336 = vmatpush1.bf16.msra.mxu0 0
  %2337 = vmatprep.subr.bf16.mxu0 0
  %2338 = vmatpush1.bf16.msra.mxu0 0
  %2339 = vmatprep.subr.bf16.mxu0 0
  %2340 = vmatpush1.bf16.msra.mxu0 0
  %2341 = vmatprep.subr.bf16.mxu0 0
  %2342 = vmatpush1.bf16.msra.mxu0 0
  %2343 = vmatprep.subr.bf16.mxu0 0
  %2344 = vmatpush1.bf16.msra.mxu0 0
  %2345 = vmatprep.mubr.bf16.mxu0 0
  %2346 = vmatmul.mubr.bf16.gmra.mrb[0].mxu0 %v2308
  %v2347 = vpop.f32.mrb[0].mxu0
  %v2348 = vadd.f32 %v2305, %v2347
  %v2349 = vpop.f32.mrb[0].mxu0
  %v2350 = vpop.f32.mrb[0].mxu0
  %v2351 = vadd.f32 %v2305, %v2350
  %v2352 = vpop.f32.mrb[0].mxu0
  %2353 = vmatprep.mubr.bf16.mxu0 0
  %2354 = vmatmul.mubr.bf16.gmra.mrb[0].mxu0 %v2311
  %v2355 = vpop.f32.mrb[0].mxu0
  %v2356 = vadd.f32 %v2305, %v2355
  %v2357 = vpop.f32.mrb[0].mxu0
  %v2358 = vpop.f32.mrb[0].mxu0
  %v2359 = vadd.f32 %v2305, %v2358
  %v2360 = vpop.f32.mrb[0].mxu0
  %2361 = vdwg.mxu0
  %v2362 = vadd.f32 %v2348, %v1418
  %v2363 = vadd.f32 %v2351, %v1419
  %v2364 = vadd.f32 %v2356, %v1420
  %v2365 = vadd.f32 %v2359, %v1421
  %s2366 = scalar_lea.vmem %s8, 1
  %v2367 = vld [vmem:[%s2366] sm:$0x1]
  %s2368 = scalar_lea.vmem %s9, 1
  %v2369 = vld [vmem:[%s2368] sm:$0x1]
  %v2370 = vsel %vm66, %v2362, 0.0
  %2371 = vadd.xlane.f32.xlu0 %v2370
  %v2372 = vpop.xlane.xlu0 %2371
  %v2373 = vsel %vm66, %v2363, 0.0
  %2374 = vadd.xlane.f32.xlu0 %v2373
  %v2375 = vpop.xlane.xlu0 %2374
  %v2376 = vsel %vm66, %v2364, 0.0
  %2377 = vadd.xlane.f32.xlu0 %v2376
  %v2378 = vpop.xlane.xlu0 %2377
  %v2379 = vsel %vm66, %v2365, 0.0
  %2380 = vadd.xlane.f32.xlu0 %v2379
  %v2381 = vpop.xlane.xlu0 %2380
  %v2382 = vmul.f32 %v2372, %v79
  %v2383 = vmul.f32 %v2375, %v79
  %v2384 = vmul.f32 %v2378, %v79
  %v2385 = vmul.f32 %v2381, %v79
  %v2386 = vsub.f32 %v2362, %v2382
  %v2387 = vsub.f32 %v2363, %v2383
  %v2388 = vsub.f32 %v2364, %v2384
  %v2389 = vsub.f32 %v2365, %v2385
  %v2390 = vmul.f32 %v2386, %v2386
  %v2391 = vmul.f32 %v2387, %v2387
  %v2392 = vmul.f32 %v2388, %v2388
  %v2393 = vmul.f32 %v2389, %v2389
  %v2394 = vsel %vm66, %v2390, 0.0
  %2395 = vadd.xlane.f32.xlu0 %v2394
  %v2396 = vpop.xlane.xlu0 %2395
  %v2397 = vsel %vm66, %v2391, 0.0
  %2398 = vadd.xlane.f32.xlu0 %v2397
  %v2399 = vpop.xlane.xlu0 %2398
  %v2400 = vsel %vm66, %v2392, 0.0
  %2401 = vadd.xlane.f32.xlu0 %v2400
  %v2402 = vpop.xlane.xlu0 %2401
  %v2403 = vsel %vm66, %v2393, 0.0
  %2404 = vadd.xlane.f32.xlu0 %v2403
  %v2405 = vpop.xlane.xlu0 %2404
  %v2406 = vmul.f32 %v2396, %v79
  %v2407 = vmul.f32 %v2399, %v79
  %v2408 = vmul.f32 %v2402, %v79
  %v2409 = vmul.f32 %v2405, %v79
  %v2410 = vadd.f32 %v2406, 1e-12
  %v2411 = vadd.f32 %v2407, 1e-12
  %v2412 = vadd.f32 %v2408, 1e-12
  %v2413 = vadd.f32 %v2409, 1e-12
  %v2414 = vrsqrt.pop %v2410
  %v2415 = vrsqrt.pop %v2411
  %v2416 = vrsqrt.pop %v2412
  %v2417 = vrsqrt.pop %v2413
  %v2418 = vmul.f32 %v2386, %v2414
  %v2419 = vmul.f32 %v2387, %v2415
  %v2420 = vmul.f32 %v2388, %v2416
  %v2421 = vmul.f32 %v2389, %v2417
  %v2423 = vlaneseq
  %v2424 = vshrl.u32 %v2423, 7
  %v2425 = vsub.s32 0, %v2424
  %v2426 = vrot.slane %v2367, %v2425
  %v2428 = vmul.f32 %v2418, %v2426
  %v2429 = vmul.f32 %v2419, %v2426
  %v2430 = vmul.f32 %v2420, %v2426
  %v2431 = vmul.f32 %v2421, %v2426
  %v2433 = vlaneseq
  %v2434 = vshrl.u32 %v2433, 7
  %v2435 = vsub.s32 0, %v2434
  %v2436 = vrot.slane %v2369, %v2435
  %v2438 = vadd.f32 %v2428, %v2436
  %v2439 = vadd.f32 %v2429, %v2436
  %v2440 = vadd.f32 %v2430, %v2436
  %v2441 = vadd.f32 %v2431, %v2436
  %s2442 = scalar_lea.vmem %s10, 32
  %v2443 = vld [vmem:[%s2442] sm:$0xff]
  %v2444 = vld [vmem:[%s2442 + $0x8] sm:$0xff]
  %v2445 = vld [vmem:[%s2442 + $0x10] sm:$0xff]
  %v2446 = vld [vmem:[%s2442 + $0x18] sm:$0xff]
  %v2447 = vpack.c.bf16 %v2439, %v2438
  %v2448 = vpack.c.bf16 %v2441, %v2440
  %v2449 = vpack.c.bf16 %v2444, %v2443
  %v2450 = vpack.c.bf16 %v2446, %v2445
  %s2451 = scalar_lea.vmem %s11, 1
  %v2452 = vld [vmem:[%s2451] sm:$0x1]
  %v2454 = vlaneseq
  %v2455 = vshrl.u32 %v2454, 7
  %v2456 = vsub.s32 0, %v2455
  %v2457 = vrot.slane %v2452, %v2456
  %v2460 = vsel %vm66, %v2447, 0
  %v2463 = vsel %vm66, %v2448, 0
  %2465 = vmatprep.subr.bf16.mxu0 0
  %2466 = vmatpush1.bf16.msra.mxu0 %v2449
  %2467 = vmatprep.subr.bf16.mxu0 0
  %2468 = vmatpush1.bf16.msra.mxu0 %v2450
  %2469 = vmatprep.subr.bf16.mxu0 0
  %2470 = vmatpush1.bf16.msra.mxu0 0
  %2471 = vmatprep.subr.bf16.mxu0 0
  %2472 = vmatpush1.bf16.msra.mxu0 0
  %2473 = vmatprep.subr.bf16.mxu0 0
  %2474 = vmatpush1.bf16.msra.mxu0 0
  %2475 = vmatprep.subr.bf16.mxu0 0
  %2476 = vmatpush1.bf16.msra.mxu0 0
  %2477 = vmatprep.subr.bf16.mxu0 0
  %2478 = vmatpush1.bf16.msra.mxu0 0
  %2479 = vmatprep.subr.bf16.mxu0 0
  %2480 = vmatpush1.bf16.msra.mxu0 0
  %2481 = vmatprep.subr.bf16.mxu0 0
  %2482 = vmatpush1.bf16.msra.mxu0 0
  %2483 = vmatprep.subr.bf16.mxu0 0
  %2484 = vmatpush1.bf16.msra.mxu0 0
  %2485 = vmatprep.subr.bf16.mxu0 0
  %2486 = vmatpush1.bf16.msra.mxu0 0
  %2487 = vmatprep.subr.bf16.mxu0 0
  %2488 = vmatpush1.bf16.msra.mxu0 0
  %2489 = vmatprep.subr.bf16.mxu0 0
  %2490 = vmatpush1.bf16.msra.mxu0 0
  %2491 = vmatprep.subr.bf16.mxu0 0
  %2492 = vmatpush1.bf16.msra.mxu0 0
  %2493 = vmatprep.subr.bf16.mxu0 0
  %2494 = vmatpush1.bf16.msra.mxu0 0
  %2495 = vmatprep.subr.bf16.mxu0 0
  %2496 = vmatpush1.bf16.msra.mxu0 0
  %2497 = vmatprep.mubr.bf16.mxu0 0
  %2498 = vmatmul.mubr.bf16.gmra.mrb[0].mxu0 %v2460
  %v2499 = vpop.f32.mrb[0].mxu0
  %v2500 = vadd.f32 %v2457, %v2499
  %v2501 = vpop.f32.mrb[0].mxu0
  %v2502 = vpop.f32.mrb[0].mxu0
  %v2503 = vadd.f32 %v2457, %v2502
  %v2504 = vpop.f32.mrb[0].mxu0
  %2505 = vmatprep.mubr.bf16.mxu0 0
  %2506 = vmatmul.mubr.bf16.gmra.mrb[0].mxu0 %v2463
  %v2507 = vpop.f32.mrb[0].mxu0
  %v2508 = vadd.f32 %v2457, %v2507
  %v2509 = vpop.f32.mrb[0].mxu0
  %v2510 = vpop.f32.mrb[0].mxu0
  %v2511 = vadd.f32 %v2457, %v2510
  %v2512 = vpop.f32.mrb[0].mxu0
  %2513 = vdwg.mxu0
  %v2514 = vmul.f32 %v2500, 0.5
  %v2515 = vmul.f32 %v2503, 0.5
  %v2516 = vmul.f32 %v2508, 0.5
  %v2517 = vmul.f32 %v2511, 0.5
  %v2518 = vmul.f32 %v2500, %v2500
  %v2519 = vmul.f32 %v2503, %v2503
  %v2520 = vmul.f32 %v2508, %v2508
  %v2521 = vmul.f32 %v2511, %v2511
  %v2522 = vmul.f32 %v2518, %v2500
  %v2523 = vmul.f32 %v2519, %v2503
  %v2524 = vmul.f32 %v2520, %v2508
  %v2525 = vmul.f32 %v2521, %v2511
  %v2526 = vmul.f32 %v2522, 0.044715
  %v2527 = vmul.f32 %v2523, 0.044715
  %v2528 = vmul.f32 %v2524, 0.044715
  %v2529 = vmul.f32 %v2525, 0.044715
  %v2530 = vadd.f32 %v2500, %v2526
  %v2531 = vadd.f32 %v2503, %v2527
  %v2532 = vadd.f32 %v2508, %v2528
  %v2533 = vadd.f32 %v2511, %v2529
  %v2534 = vmul.f32 %v2530, 0.7978846
  %v2535 = vmul.f32 %v2531, 0.7978846
  %v2536 = vmul.f32 %v2532, 0.7978846
  %v2537 = vmul.f32 %v2533, 0.7978846
  %v2538 = vtanh.pop %v2534
  %v2539 = vtanh.pop %v2535
  %v2540 = vtanh.pop %v2536
  %v2541 = vtanh.pop %v2537
  %v2542 = vadd.f32 %v2538, 1.0
  %v2543 = vadd.f32 %v2539, 1.0
  %v2544 = vadd.f32 %v2540, 1.0
  %v2545 = vadd.f32 %v2541, 1.0
  %v2546 = vmul.f32 %v2514, %v2542
  %v2547 = vmul.f32 %v2515, %v2543
  %v2548 = vmul.f32 %v2516, %v2544
  %v2549 = vmul.f32 %v2517, %v2545
  %s2550 = scalar_lea.vmem %s12, 64
  %v2551 = vld [vmem:[%s2550] sm:$0xff]
  %v2552 = vld [vmem:[%s2550 + $0x8] sm:$0xff]
  %v2553 = vld [vmem:[%s2550 + $0x10] sm:$0xff]
  %v2554 = vld [vmem:[%s2550 + $0x18] sm:$0xff]
  %v2555 = vld [vmem:[%s2550 + $0x20] sm:$0xff]
  %v2556 = vld [vmem:[%s2550 + $0x28] sm:$0xff]
  %v2557 = vld [vmem:[%s2550 + $0x30] sm:$0xff]
  %v2558 = vld [vmem:[%s2550 + $0x38] sm:$0xff]
  %v2559 = vpack.c.bf16 %v2547, %v2546
  %v2560 = vpack.c.bf16 %v2549, %v2548
  %v2561 = vpack.c.bf16 %v2552, %v2551
  %v2562 = vpack.c.bf16 %v2554, %v2553
  %v2563 = vpack.c.bf16 %v2556, %v2555
  %v2564 = vpack.c.bf16 %v2558, %v2557
  %s2565 = scalar_lea.vmem %s13, 1
  %v2566 = vld [vmem:[%s2565] sm:$0x1]
  %v2568 = vlaneseq
  %v2569 = vshrl.u32 %v2568, 7
  %v2570 = vsub.s32 0, %v2569
  %v2571 = vrot.slane %v2566, %v2570
  %v2574 = vsel %vm1288, %v2559, 0
  %v2577 = vsel %vm1288, %v2560, 0
  %2579 = vmatprep.subr.bf16.mxu0 0
  %2580 = vmatpush1.bf16.msra.mxu0 %v2561
  %2581 = vmatprep.subr.bf16.mxu0 0
  %2582 = vmatpush1.bf16.msra.mxu0 %v2562
  %2583 = vmatprep.subr.bf16.mxu0 0
  %2584 = vmatpush1.bf16.msra.mxu0 %v2563
  %2585 = vmatprep.subr.bf16.mxu0 0
  %2586 = vmatpush1.bf16.msra.mxu0 %v2564
  %2587 = vmatprep.subr.bf16.mxu0 0
  %2588 = vmatpush1.bf16.msra.mxu0 0
  %2589 = vmatprep.subr.bf16.mxu0 0
  %2590 = vmatpush1.bf16.msra.mxu0 0
  %2591 = vmatprep.subr.bf16.mxu0 0
  %2592 = vmatpush1.bf16.msra.mxu0 0
  %2593 = vmatprep.subr.bf16.mxu0 0
  %2594 = vmatpush1.bf16.msra.mxu0 0
  %2595 = vmatprep.subr.bf16.mxu0 0
  %2596 = vmatpush1.bf16.msra.mxu0 0
  %2597 = vmatprep.subr.bf16.mxu0 0
  %2598 = vmatpush1.bf16.msra.mxu0 0
  %2599 = vmatprep.subr.bf16.mxu0 0
  %2600 = vmatpush1.bf16.msra.mxu0 0
  %2601 = vmatprep.subr.bf16.mxu0 0
  %2602 = vmatpush1.bf16.msra.mxu0 0
  %2603 = vmatprep.subr.bf16.mxu0 0
  %2604 = vmatpush1.bf16.msra.mxu0 0
  %2605 = vmatprep.subr.bf16.mxu0 0
  %2606 = vmatpush1.bf16.msra.mxu0 0
  %2607 = vmatprep.subr.bf16.mxu0 0
  %2608 = vmatpush1.bf16.msra.mxu0 0
  %2609 = vmatprep.subr.bf16.mxu0 0
  %2610 = vmatpush1.bf16.msra.mxu0 0
  %2611 = vmatprep.mubr.bf16.mxu0 0
  %2612 = vmatmul.mubr.bf16.gmra.mrb[0].mxu0 %v2574
  %v2613 = vpop.f32.mrb[0].mxu0
  %v2614 = vadd.f32 %v2571, %v2613
  %v2615 = vpop.f32.mrb[0].mxu0
  %v2616 = vpop.f32.mrb[0].mxu0
  %v2617 = vadd.f32 %v2571, %v2616
  %v2618 = vpop.f32.mrb[0].mxu0
  %2619 = vmatprep.mubr.bf16.mxu0 0
  %2620 = vmatmul.mubr.bf16.gmra.mrb[0].mxu0 %v2577
  %v2621 = vpop.f32.mrb[0].mxu0
  %v2622 = vadd.f32 %v2571, %v2621
  %v2623 = vpop.f32.mrb[0].mxu0
  %v2624 = vpop.f32.mrb[0].mxu0
  %v2625 = vadd.f32 %v2571, %v2624
  %v2626 = vpop.f32.mrb[0].mxu0
  %2627 = vdwg.mxu0
  %v2628 = vadd.f32 %v2614, %v2438
  %v2629 = vadd.f32 %v2617, %v2439
  %v2630 = vadd.f32 %v2622, %v2440
  %v2631 = vadd.f32 %v2625, %v2441
  %s2632 = scalar_lea.vmem %s14, 1
  %v2633 = vld [vmem:[%s2632] sm:$0x1]
  %s2634 = scalar_lea.vmem %s15, 1
  %v2635 = vld [vmem:[%s2634] sm:$0x1]
  %v2636 = vsel %vm66, %v2628, 0.0
  %2637 = vadd.xlane.f32.xlu0 %v2636
  %v2638 = vpop.xlane.xlu0 %2637
  %v2639 = vsel %vm66, %v2629, 0.0
  %2640 = vadd.xlane.f32.xlu0 %v2639
  %v2641 = vpop.xlane.xlu0 %2640
  %v2642 = vsel %vm66, %v2630, 0.0
  %2643 = vadd.xlane.f32.xlu0 %v2642
  %v2644 = vpop.xlane.xlu0 %2643
  %v2645 = vsel %vm66, %v2631, 0.0
  %2646 = vadd.xlane.f32.xlu0 %v2645
  %v2647 = vpop.xlane.xlu0 %2646
  %v2648 = vmul.f32 %v2638, %v79
  %v2649 = vmul.f32 %v2641, %v79
  %v2650 = vmul.f32 %v2644, %v79
  %v2651 = vmul.f32 %v2647, %v79
  %v2652 = vsub.f32 %v2628, %v2648
  %v2653 = vsub.f32 %v2629, %v2649
  %v2654 = vsub.f32 %v2630, %v2650
  %v2655 = vsub.f32 %v2631, %v2651
  %v2656 = vmul.f32 %v2652, %v2652
  %v2657 = vmul.f32 %v2653, %v2653
  %v2658 = vmul.f32 %v2654, %v2654
  %v2659 = vmul.f32 %v2655, %v2655
  %v2660 = vsel %vm66, %v2656, 0.0
  %2661 = vadd.xlane.f32.xlu0 %v2660
  %v2662 = vpop.xlane.xlu0 %2661
  %v2663 = vsel %vm66, %v2657, 0.0
  %2664 = vadd.xlane.f32.xlu0 %v2663
  %v2665 = vpop.xlane.xlu0 %2664
  %v2666 = vsel %vm66, %v2658, 0.0
  %2667 = vadd.xlane.f32.xlu0 %v2666
  %v2668 = vpop.xlane.xlu0 %2667
  %v2669 = vsel %vm66, %v2659, 0.0
  %2670 = vadd.xlane.f32.xlu0 %v2669
  %v2671 = vpop.xlane.xlu0 %2670
  %v2672 = vmul.f32 %v2662, %v79
  %v2673 = vmul.f32 %v2665, %v79
  %v2674 = vmul.f32 %v2668, %v79
  %v2675 = vmul.f32 %v2671, %v79
  %v2676 = vadd.f32 %v2672, 1e-12
  %v2677 = vadd.f32 %v2673, 1e-12
  %v2678 = vadd.f32 %v2674, 1e-12
  %v2679 = vadd.f32 %v2675, 1e-12
  %v2680 = vrsqrt.pop %v2676
  %v2681 = vrsqrt.pop %v2677
  %v2682 = vrsqrt.pop %v2678
  %v2683 = vrsqrt.pop %v2679
  %v2684 = vmul.f32 %v2652, %v2680
  %v2685 = vmul.f32 %v2653, %v2681
  %v2686 = vmul.f32 %v2654, %v2682
  %v2687 = vmul.f32 %v2655, %v2683
  %v2689 = vlaneseq
  %v2690 = vshrl.u32 %v2689, 7
  %v2691 = vsub.s32 0, %v2690
  %v2692 = vrot.slane %v2633, %v2691
  %v2694 = vmul.f32 %v2684, %v2692
  %v2695 = vmul.f32 %v2685, %v2692
  %v2696 = vmul.f32 %v2686, %v2692
  %v2697 = vmul.f32 %v2687, %v2692
  %v2699 = vlaneseq
  %v2700 = vshrl.u32 %v2699, 7
  %v2701 = vsub.s32 0, %v2700
  %v2702 = vrot.slane %v2635, %v2701
  %v2704 = vadd.f32 %v2694, %v2702
  %v2705 = vadd.f32 %v2695, %v2702
  %v2706 = vadd.f32 %v2696, %v2702
  %v2707 = vadd.f32 %v2697, %v2702
  %v2709 = vrot.slane %v2705, 7
  %v2712 = vrot.slane %v2706, 6
  %v2715 = vrot.slane %v2707, 5
  %vm2717 = vcmask 1040384
  %v2718 = vsel %vm2717, %v2704, %v2709
  %vm2719 = vcmask 1041408
  %v2720 = vsel %vm2719, %v2718, %v2712
  %vm2721 = vcmask 1042432
  %v2722 = vsel %vm2721, %v2720, %v2715
  %v2723 = vld [vmem:[%s16] sm:$0xff]
  %v2724 = vld [vmem:[%s16 + $0x8] sm:$0xff]
  %v2725 = vld [vmem:[%s16 + $0x10] sm:$0xff]
  %v2726 = vld [vmem:[%s16 + $0x18] sm:$0xff]
  %v2727 = vpack.c.bf16 %v2722, %v2722
  %v2728 = vpack.c.bf16 %v2724, %v2723
  %v2729 = vpack.c.bf16 %v2726, %v2725
  %v2730 = vld [vmem:[%s17] sm:$0x1]
  %v2732 = vlaneseq
  %v2733 = vshrl.u32 %v2732, 7
  %v2734 = vsub.s32 0, %v2733
  %v2735 = vrot.slane %v2730, %v2734
  %v2738 = vsel %vm66, %v2727, 0
  %2740 = vmatprep.subr.bf16.mxu0 0
  %2741 = vmatpush1.bf16.msra.mxu0 %v2728
  %2742 = vmatprep.subr.bf16.mxu0 0
  %2743 = vmatpush1.bf16.msra.mxu0 %v2729
  %2744 = vmatprep.subr.bf16.mxu0 0
  %2745 = vmatpush1.bf16.msra.mxu0 0
  %2746 = vmatprep.subr.bf16.mxu0 0
  %2747 = vmatpush1.bf16.msra.mxu0 0
  %2748 = vmatprep.subr.bf16.mxu0 0
  %2749 = vmatpush1.bf16.msra.mxu0 0
  %2750 = vmatprep.subr.bf16.mxu0 0
  %2751 = vmatpush1.bf16.msra.mxu0 0
  %2752 = vmatprep.subr.bf16.mxu0 0
  %2753 = vmatpush1.bf16.msra.mxu0 0
  %2754 = vmatprep.subr.bf16.mxu0 0
  %2755 = vmatpush1.bf16.msra.mxu0 0
  %2756 = vmatprep.subr.bf16.mxu0 0
  %2757 = vmatpush1.bf16.msra.mxu0 0
  %2758 = vmatprep.subr.bf16.mxu0 0
  %2759 = vmatpush1.bf16.msra.mxu0 0
  %2760 = vmatprep.subr.bf16.mxu0 0
  %2761 = vmatpush1.bf16.msra.mxu0 0
  %2762 = vmatprep.subr.bf16.mxu0 0
  %2763 = vmatpush1.bf16.msra.mxu0 0
  %2764 = vmatprep.subr.bf16.mxu0 0
  %2765 = vmatpush1.bf16.msra.mxu0 0
  %2766 = vmatprep.subr.bf16.mxu0 0
  %2767 = vmatpush1.bf16.msra.mxu0 0
  %2768 = vmatprep.subr.bf16.mxu0 0
  %2769 = vmatpush1.bf16.msra.mxu0 0
  %2770 = vmatprep.subr.bf16.mxu0 0
  %2771 = vmatpush1.bf16.msra.mxu0 0
  %2772 = vmatprep.mubr.bf16.mxu0 0
  %2773 = vmatmul.mubr.bf16.gmra.mrb[0].mxu0 %v2738
  %v2774 = vpop.f32.mrb[0].mxu0
  %v2775 = vadd.f32 %v2735, %v2774
  %v2776 = vpop.f32.mrb[0].mxu0
  %v2777 = vpop.f32.mrb[0].mxu0
  %v2778 = vpop.f32.mrb[0].mxu0
  %2779 = vdwg.mxu0
  %v2780 = vtanh.pop %v2775
  %v2782 = vrot.slane %v2780, 2
  %v2784 = vmul.f32 %v2780, %v2782
  %vm2785 = vcmask 254976
  %v2786 = vsel %vm2785, %v2784, 0.0
  %2787 = vadd.xlane.f32.xlu0 %v2786
  %v2788 = vpop.xlane.xlu0 %2787
  %v2789 = vxor.u32 %v2788, 2147483648
  %v2790 = vmul.f32 %v2789, 1.442695
  %v2791 = vpow.pop %v2790
  %v2792 = vadd.f32 %v2791, 1.0
  %v2793 = vrcp.pop %v2792
  %v2794 = vmul.f32 1.0, %v2793
  %vm2795 = vcmask 7168
  %v2796 = vsel %vm2795, %v2788, %v2794
  %vm2797 = vcmask 9216
  %2798 = vst.msk [vmem:[%s18] sm:$0x3] %vm2797, %v2796
  // Predicated region
  $region74: #{bert_edge_scorer.1} parent=0 // pred_check
    _
  $region75: #{bert_edge_scorer.1} parent=0 // pred_check_branch
    %2800 = sbr.rel (0) target = $region77
  $region76: #{bert_edge_scorer.1} parent=0 // pred_region
    _
  $region77: #{bert_edge_scorer.1} parent=0 // pred_fallthru
    _
  // Predicated region
  $region78: #{bert_edge_scorer.1} parent=0 // pred_check
    _
  $region79: #{bert_edge_scorer.1} parent=0 // pred_check_branch
    %2802 = sbr.rel (0) target = $region81
  $region80: #{bert_edge_scorer.1} parent=0 // pred_region
    _
  $region81: #{bert_edge_scorer.1} parent=0 // pred_fallthru
    _

</llo_original>
